<compile_context>
chip_gen: v7x
topology: tpu7x:2x2x1
jax: 0.10.0
libtpu: 0.0.40
codegen_flags: <defaults>
</compile_context>

<pallas_src>
import jax
import jax.numpy as jnp
from jax.experimental import pallas as pl
from jax.experimental.pallas import tpu as pltpu

# ----------------------------- synthetic ViT config -------------------------
PATCH = 16          # self.model.visual.patch_size (ViT-B/16)
WIDTH = 32          # transformer width D (small synthetic)
HEADS = 4
HEAD_DIM = WIDTH // HEADS
LAYERS = 2          # transformer depth (small synthetic)
MLP_DIM = 4 * WIDTH
OUT_DIM = 16        # visual.proj output dim
EPS = 1e-5


def _round_up(x, m):
    return ((x + m - 1) // m) * m


def _layernorm(x, w, b):
    mu = jnp.mean(x, axis=-1, keepdims=True)
    var = jnp.mean((x - mu) ** 2, axis=-1, keepdims=True)
    return (x - mu) * jax.lax.rsqrt(var + EPS) * w + b


# ----------------------------- fused forward kernel -------------------------
def _fused_forward(patches, inj, pos, params, *, n_real):
    """patches: (B, n_pad, C*P*P) bf16 im2col'd image, inj: optional (B, n_pad, D)
    'before_backbone' features, pos: (t_pad, D) padded positional embedding.
    Returns (B, OUT_DIM, n_patch) float32 (channel-major)."""
    B, n_pad, CPP = patches.shape
    t_pad, D = pos.shape
    L = params['wqkv'].shape[0]
    Dm = params['w1'].shape[2]
    P_out = params['proj'].shape[1]
    n_patch = n_real - 1
    with_inject = inj is not None

    def kernel(*refs):
        refs = list(refs)
        patches_ref = refs.pop(0)
        inj_ref = refs.pop(0) if with_inject else None
        (conv_w, cls_e, pos_e, ln_pre_w, ln_pre_b,
         ln1_w, ln1_b, wqkv, bqkv, wo, bo,
         ln2_w, ln2_b, w1, b1, w2, b2,
         ln_post_w, ln_post_b, proj, o_ref) = refs

        # --- patch embed (CLIP conv1, no bias) + CLS + pos-emb + ln_pre ------
        tok = jnp.dot(patches_ref[0], conv_w[...],
                      preferred_element_type=jnp.float32)          # (n_pad, D)
        if with_inject:
            tok = tok + inj_ref[0]                                 # x += additional_features
        x = jnp.concatenate([cls_e[...], tok], axis=0) + pos_e[...]  # (t_pad, D)
        x = _layernorm(x, ln_pre_w[...], ln_pre_b[...])

        scale = HEAD_DIM ** -0.5
        kidx = jax.lax.broadcasted_iota(jnp.int32, (1, 1, t_pad), 2)
        key_bias = jnp.where(kidx < n_real, 0.0, -1e30).astype(jnp.float32)

        # --- transformer blocks (sequence stays resident, weights stacked) ---
        for li in range(L):
            xn = _layernorm(x, ln1_w[li], ln1_b[li])
            qkv = jnp.dot(xn.astype(jnp.bfloat16), wqkv[li],
                          preferred_element_type=jnp.float32) + bqkv[li]
            if li == L - 1:
                # MaskCLIP trick on the last block: value path only, no mixing.
                attn = qkv[:, 2 * D:]
            else:
                q = qkv[:, :D].reshape(t_pad, HEADS, HEAD_DIM)
                k = qkv[:, D:2 * D].reshape(t_pad, HEADS, HEAD_DIM)
                v = qkv[:, 2 * D:].reshape(t_pad, HEADS, HEAD_DIM)
                s = jnp.einsum('thd,shd->hts',
                               q.astype(jnp.bfloat16), k.astype(jnp.bfloat16),
                               preferred_element_type=jnp.float32)
                s = s * scale + key_bias                     # mask padded keys
                s = s - jnp.max(s, axis=-1, keepdims=True)
                p = jnp.exp(s)
                p = p * pl.reciprocal(jnp.sum(p, axis=-1, keepdims=True),
                                      approx=True)
                attn = jnp.einsum('hts,shd->thd',
                                  p.astype(jnp.bfloat16), v.astype(jnp.bfloat16),
                                  preferred_element_type=jnp.float32)
                attn = attn.reshape(t_pad, D)
            x = x + jnp.dot(attn.astype(jnp.bfloat16), wo[li],
                            preferred_element_type=jnp.float32) + bo[li]
            xn2 = _layernorm(x, ln2_w[li], ln2_b[li])
            h1 = jnp.dot(xn2.astype(jnp.bfloat16), w1[li],
                         preferred_element_type=jnp.float32) + b1[li]
            h1 = h1 * jax.nn.sigmoid(1.702 * h1)                   # QuickGELU
            x = x + jnp.dot(h1.astype(jnp.bfloat16), w2[li],
                            preferred_element_type=jnp.float32) + b2[li]

        # --- ln_post + visual projection on patch tokens (drop CLS) ----------
        xp = _layernorm(x[1:1 + n_patch], ln_post_w[...], ln_post_b[...])
        # Emit (OUT_DIM, N) channel-major directly (lane-dense N on lanes).
        o_ref[0] = jax.lax.dot_general(
            proj[...], xp.astype(jnp.bfloat16),
            dimension_numbers=(((0,), (1,)), ((), ())),
            preferred_element_type=jnp.float32)

    def _const(shape):
        return pl.BlockSpec(shape, lambda b: (0,) * len(shape))

    in_specs = [pl.BlockSpec((1, n_pad, CPP), lambda b: (b, 0, 0))]
    inputs = [patches]
    if with_inject:
        in_specs.append(pl.BlockSpec((1, n_pad, D), lambda b: (b, 0, 0)))
        inputs.append(inj)
    in_specs += [
        _const((CPP, D)), _const((1, D)), _const((t_pad, D)),
        _const((1, D)), _const((1, D)),
        _const((L, 1, D)), _const((L, 1, D)),
        _const((L, D, 3 * D)), _const((L, 1, 3 * D)),
        _const((L, D, D)), _const((L, 1, D)),
        _const((L, 1, D)), _const((L, 1, D)),
        _const((L, D, Dm)), _const((L, 1, Dm)),
        _const((L, Dm, D)), _const((L, 1, D)),
        _const((1, D)), _const((1, D)), _const((D, P_out)),
    ]
    inputs += [params['conv_w_flat'], params['cls_emb'], pos,
               params['ln_pre_w'], params['ln_pre_b'],
               params['ln1_w'], params['ln1_b'], params['wqkv'], params['bqkv'],
               params['wo'], params['bo'], params['ln2_w'], params['ln2_b'],
               params['w1'], params['b1'], params['w2'], params['b2'],
               params['ln_post_w'], params['ln_post_b'], params['proj']]

    return pl.pallas_call(
        kernel,
        out_shape=jax.ShapeDtypeStruct((B, P_out, n_patch), jnp.float32),
        grid=(B,),
        in_specs=in_specs,
        out_specs=pl.BlockSpec((1, P_out, n_patch), lambda b: (b, 0, 0)),
        compiler_params=pltpu.CompilerParams(
            dimension_semantics=("parallel",)),
    )(*inputs)


# ----------------------------- full featurizer -------------------------------
def maskclip_featurizer(x, params, additional_features=None,
                        feats_injection_mode='no_injection'):
    """x: (B, 3, H, W) float32 (NCHW, like PyTorch). Returns (B, OUT_DIM, H//P, W//P)."""
    B, C, H, W = x.shape
    ph, pw = H // PATCH, W // PATCH
    N = ph * pw
    n_real = N + 1                       # CLS + patch tokens
    t_pad = _round_up(n_real, 8)         # sublane-aligned token count
    n_pad = t_pad - 1

    # conv1 with kernel=stride=PATCH, no bias == im2col + matmul (matmul in kernel).
    # TODO(synk): the im2col reshape/transpose still runs in XLA before the kernel;
    # an in-kernel strided patch gather would need Element/strided BlockSpecs on NCHW.
    patches = x.reshape(B, C, ph, PATCH, pw, PATCH)
    patches = patches.transpose(0, 2, 4, 1, 3, 5).reshape(B, N, C * PATCH * PATCH)
    patches = jnp.pad(patches, ((0, 0), (0, n_pad - N), (0, 0))).astype(jnp.bfloat16)

    # TODO(synk): positional-embedding interpolation for non-native input sizes is
    # not implemented; the synthetic pos-emb is built at exactly (N+1, WIDTH).
    pos = jnp.pad(params['pos_emb'], ((0, t_pad - n_real), (0, 0)))

    inj = None
    if additional_features is not None and feats_injection_mode == 'before_backbone':
        inj = jnp.pad(additional_features.astype(jnp.float32),
                      ((0, 0), (0, n_pad - N), (0, 0)))

    feats_cn = _fused_forward(patches, inj, pos, params, n_real=n_real)  # (B, OUT_DIM, N)

    if additional_features is not None and feats_injection_mode == 'after_backbone':
        feats_cn = feats_cn + additional_features.astype(jnp.float32).transpose(0, 2, 1)

    # == features.reshape(b, ph, pw, -1).permute(0, 3, 1, 2)
    return feats_cn.reshape(B, OUT_DIM, ph, pw)


# ----------------------------- deterministic params --------------------------
def init_params(key, in_ch=3, seq_len=5):
    ks = iter(jax.random.split(key, 32))
    f32, bf16 = jnp.float32, jnp.bfloat16

    def rnd(shape, dtype=f32, scale=0.02):
        return (scale * jax.random.normal(next(ks), shape)).astype(dtype)

    L, D, Dm = LAYERS, WIDTH, MLP_DIM
    return {
        'conv_w_flat': rnd((in_ch * PATCH * PATCH, D), bf16),
        'cls_emb': rnd((1, D)),
        'pos_emb': rnd((seq_len, D)),
        'ln_pre_w': jnp.ones((1, D), f32), 'ln_pre_b': jnp.zeros((1, D), f32),
        'ln_post_w': jnp.ones((1, D), f32), 'ln_post_b': jnp.zeros((1, D), f32),
        'proj': rnd((D, OUT_DIM), bf16),
        # per-layer weights stacked on a leading layer axis (one fused kernel)
        'ln1_w': jnp.ones((L, 1, D), f32), 'ln1_b': jnp.zeros((L, 1, D), f32),
        'wqkv': rnd((L, D, 3 * D), bf16), 'bqkv': jnp.zeros((L, 1, 3 * D), f32),
        'wo': rnd((L, D, D), bf16), 'bo': jnp.zeros((L, 1, D), f32),
        'ln2_w': jnp.ones((L, 1, D), f32), 'ln2_b': jnp.zeros((L, 1, D), f32),
        'w1': rnd((L, D, Dm), bf16), 'b1': jnp.zeros((L, 1, Dm), f32),
        'w2': rnd((L, Dm, D), bf16), 'b2': jnp.zeros((L, 1, D), f32),
    }


# ----------------------------- main ------------------------------------------
if __name__ == "__main__":
    key = jax.random.PRNGKey(0)
    k_img, k_par = jax.random.split(key)

    B, C, H, W = 2, 3, 32, 32               # 2x2 grid of 16x16 patches
    ph, pw = H // PATCH, W // PATCH
    T = ph * pw + 1                         # tokens incl. CLS

    params = init_params(k_par, in_ch=C, seq_len=T)
    x = jax.random.normal(k_img, (B, C, H, W), dtype=jnp.float32)

    out = maskclip_featurizer(x, params)    # no_injection mode (default)
    out = jax.block_until_ready(out)

    assert out.shape == (B, OUT_DIM, ph, pw), out.shape
    assert out.dtype == jnp.float32
    print("KERNEL_OK")
</pallas_src>

<mosaic_0001>
module attributes {stable_mosaic.version = 11 : i64} {
  func.func @kernel(%arg0: i32, %arg1: memref<1x7x768xbf16, #tpu.memory_space<vmem>>, %arg2: memref<768x32xbf16, #tpu.memory_space<vmem>>, %arg3: memref<1x32xf32, #tpu.memory_space<vmem>>, %arg4: memref<8x32xf32, #tpu.memory_space<vmem>>, %arg5: memref<1x32xf32, #tpu.memory_space<vmem>>, %arg6: memref<1x32xf32, #tpu.memory_space<vmem>>, %arg7: memref<2x1x32xf32, #tpu.memory_space<vmem>>, %arg8: memref<2x1x32xf32, #tpu.memory_space<vmem>>, %arg9: memref<2x32x96xbf16, #tpu.memory_space<vmem>>, %arg10: memref<2x1x96xf32, #tpu.memory_space<vmem>>, %arg11: memref<2x32x32xbf16, #tpu.memory_space<vmem>>, %arg12: memref<2x1x32xf32, #tpu.memory_space<vmem>>, %arg13: memref<2x1x32xf32, #tpu.memory_space<vmem>>, %arg14: memref<2x1x32xf32, #tpu.memory_space<vmem>>, %arg15: memref<2x32x128xbf16, #tpu.memory_space<vmem>>, %arg16: memref<2x1x128xf32, #tpu.memory_space<vmem>>, %arg17: memref<2x128x32xbf16, #tpu.memory_space<vmem>>, %arg18: memref<2x1x32xf32, #tpu.memory_space<vmem>>, %arg19: memref<1x32xf32, #tpu.memory_space<vmem>>, %arg20: memref<1x32xf32, #tpu.memory_space<vmem>>, %arg21: memref<32x16xbf16, #tpu.memory_space<vmem>>, %arg22: memref<1x16x4xf32, #tpu.memory_space<vmem>>) attributes {dimension_semantics = [#tpu.dimension_semantics<parallel>], iteration_bounds = array<i64: 2>, scalar_prefetch = 0 : i64, scratch_operands = 0 : i64, tpu.core_type = #tpu.core_type<tc>, window_params = [{transform_indices = @transform_0, window_bounds = array<i64: 1, 7, 768>}, {pipeline_mode = #tpu.pipeline_mode<synchronous>, transform_indices = @transform_1, window_bounds = array<i64: 768, 32>}, {pipeline_mode = #tpu.pipeline_mode<synchronous>, transform_indices = @transform_2, window_bounds = array<i64: 1, 32>}, {pipeline_mode = #tpu.pipeline_mode<synchronous>, transform_indices = @transform_3, window_bounds = array<i64: 8, 32>}, {pipeline_mode = #tpu.pipeline_mode<synchronous>, transform_indices = @transform_4, window_bounds = array<i64: 1, 32>}, {pipeline_mode = #tpu.pipeline_mode<synchronous>, transform_indices = @transform_5, window_bounds = array<i64: 1, 32>}, {pipeline_mode = #tpu.pipeline_mode<synchronous>, transform_indices = @transform_6, window_bounds = array<i64: 2, 1, 32>}, {pipeline_mode = #tpu.pipeline_mode<synchronous>, transform_indices = @transform_7, window_bounds = array<i64: 2, 1, 32>}, {pipeline_mode = #tpu.pipeline_mode<synchronous>, transform_indices = @transform_8, window_bounds = array<i64: 2, 32, 96>}, {pipeline_mode = #tpu.pipeline_mode<synchronous>, transform_indices = @transform_9, window_bounds = array<i64: 2, 1, 96>}, {pipeline_mode = #tpu.pipeline_mode<synchronous>, transform_indices = @transform_10, window_bounds = array<i64: 2, 32, 32>}, {pipeline_mode = #tpu.pipeline_mode<synchronous>, transform_indices = @transform_11, window_bounds = array<i64: 2, 1, 32>}, {pipeline_mode = #tpu.pipeline_mode<synchronous>, transform_indices = @transform_12, window_bounds = array<i64: 2, 1, 32>}, {pipeline_mode = #tpu.pipeline_mode<synchronous>, transform_indices = @transform_13, window_bounds = array<i64: 2, 1, 32>}, {pipeline_mode = #tpu.pipeline_mode<synchronous>, transform_indices = @transform_14, window_bounds = array<i64: 2, 32, 128>}, {pipeline_mode = #tpu.pipeline_mode<synchronous>, transform_indices = @transform_15, window_bounds = array<i64: 2, 1, 128>}, {pipeline_mode = #tpu.pipeline_mode<synchronous>, transform_indices = @transform_16, window_bounds = array<i64: 2, 128, 32>}, {pipeline_mode = #tpu.pipeline_mode<synchronous>, transform_indices = @transform_17, window_bounds = array<i64: 2, 1, 32>}, {pipeline_mode = #tpu.pipeline_mode<synchronous>, transform_indices = @transform_18, window_bounds = array<i64: 1, 32>}, {pipeline_mode = #tpu.pipeline_mode<synchronous>, transform_indices = @transform_19, window_bounds = array<i64: 1, 32>}, {pipeline_mode = #tpu.pipeline_mode<synchronous>, transform_indices = @transform_20, window_bounds = array<i64: 32, 16>}, {transform_indices = @transform_21, window_bounds = array<i64: 1, 16, 4>}]} {
    %c0 = arith.constant 0 : index
    %c0_0 = arith.constant 0 : index
    %c0_1 = arith.constant 0 : index
    %0 = vector.load %arg1[%c0, %c0_0, %c0_1] : memref<1x7x768xbf16, #tpu.memory_space<vmem>>, vector<1x7x768xbf16>
    %1 = vector.shape_cast %0 : vector<1x7x768xbf16> to vector<7x768xbf16>
    %c0_2 = arith.constant 0 : index
    %c0_3 = arith.constant 0 : index
    %2 = vector.load %arg2[%c0_2, %c0_3] : memref<768x32xbf16, #tpu.memory_space<vmem>>, vector<768x32xbf16>
    %cst = arith.constant dense<0.000000e+00> : vector<7x32xf32>
    %3 = tpu.matmul %1, %2, %cst {dimension_numbers = #tpu.dot_dimension_numbers<[1], [0], [0], [1], [0, 0, 1, 1], [], []>} : vector<7x768xbf16>, vector<768x32xbf16>, vector<7x32xf32> -> vector<7x32xf32>
    %c0_4 = arith.constant 0 : index
    %c0_5 = arith.constant 0 : index
    %4 = vector.load %arg3[%c0_4, %c0_5] : memref<1x32xf32, #tpu.memory_space<vmem>>, vector<1x32xf32>
    %5 = tpu.concatenate %4, %3 in 0 : vector<1x32xf32>, vector<7x32xf32> -> vector<8x32xf32>
    %c0_6 = arith.constant 0 : index
    %c0_7 = arith.constant 0 : index
    %6 = vector.load %arg4[%c0_6, %c0_7] : memref<8x32xf32, #tpu.memory_space<vmem>>, vector<8x32xf32>
    %7 = arith.addf %5, %6 : vector<8x32xf32>
    %c0_8 = arith.constant 0 : index
    %c0_9 = arith.constant 0 : index
    %8 = vector.load %arg5[%c0_8, %c0_9] : memref<1x32xf32, #tpu.memory_space<vmem>>, vector<1x32xf32>
    %c0_10 = arith.constant 0 : index
    %c0_11 = arith.constant 0 : index
    %9 = vector.load %arg6[%c0_10, %c0_11] : memref<1x32xf32, #tpu.memory_space<vmem>>, vector<1x32xf32>
    %cst_12 = arith.constant dense<0.000000e+00> : vector<8xf32>
    %10 = vector.multi_reduction <add>, %7, %cst_12 [1] : vector<8x32xf32> to vector<8xf32>
    %11 = vector.shape_cast %10 : vector<8xf32> to vector<8x1xf32>
    %cst_13 = arith.constant 3.200000e+01 : f32
    %12 = vector.broadcast %cst_13 : f32 to vector<8x1xf32>
    %13 = arith.divf %11, %12 : vector<8x1xf32>
    %14 = vector.broadcast %13 : vector<8x1xf32> to vector<8x32xf32>
    %15 = arith.subf %7, %14 : vector<8x32xf32>
    %16 = arith.mulf %15, %15 : vector<8x32xf32>
    %cst_14 = arith.constant dense<0.000000e+00> : vector<8xf32>
    %17 = vector.multi_reduction <add>, %16, %cst_14 [1] : vector<8x32xf32> to vector<8xf32>
    %18 = vector.shape_cast %17 : vector<8xf32> to vector<8x1xf32>
    %cst_15 = arith.constant 3.200000e+01 : f32
    %19 = vector.broadcast %cst_15 : f32 to vector<8x1xf32>
    %20 = arith.divf %18, %19 : vector<8x1xf32>
    %21 = vector.broadcast %13 : vector<8x1xf32> to vector<8x32xf32>
    %22 = arith.subf %7, %21 : vector<8x32xf32>
    %cst_16 = arith.constant 9.99999974E-6 : f32
    %23 = vector.broadcast %cst_16 : f32 to vector<8x1xf32>
    %24 = arith.addf %20, %23 : vector<8x1xf32>
    %25 = math.rsqrt %24 : vector<8x1xf32>
    %26 = vector.broadcast %25 : vector<8x1xf32> to vector<8x32xf32>
    %27 = arith.mulf %22, %26 : vector<8x32xf32>
    %28 = vector.broadcast %8 : vector<1x32xf32> to vector<8x32xf32>
    %29 = arith.mulf %27, %28 : vector<8x32xf32>
    %30 = vector.broadcast %9 : vector<1x32xf32> to vector<8x32xf32>
    %31 = arith.addf %29, %30 : vector<8x32xf32>
    %32 = tpu.iota {dimensions = array<i32: 2>} : vector<1x1x8xi32>
    %c5_i32 = arith.constant 5 : i32
    %33 = vector.broadcast %c5_i32 : i32 to vector<1x1x8xi32>
    %34 = arith.cmpi slt, %32, %33 : vector<1x1x8xi32>
    %cst_17 = arith.constant 0.000000e+00 : f32
    %cst_18 = arith.constant -1.000000e+30 : f32
    %35 = vector.broadcast %cst_17 : f32 to vector<1x1x8xf32>
    %36 = vector.broadcast %cst_18 : f32 to vector<1x1x8xf32>
    %37 = arith.select %34, %35, %36 : vector<1x1x8xi1>, vector<1x1x8xf32>
    %c0_19 = arith.constant 0 : index
    %c0_20 = arith.constant 0 : index
    %c0_21 = arith.constant 0 : index
    %38 = vector.load %arg7[%c0_19, %c0_20, %c0_21] : memref<2x1x32xf32, #tpu.memory_space<vmem>>, vector<1x1x32xf32>
    %39 = vector.shape_cast %38 : vector<1x1x32xf32> to vector<1x32xf32>
    %c0_22 = arith.constant 0 : index
    %c0_23 = arith.constant 0 : index
    %c0_24 = arith.constant 0 : index
    %40 = vector.load %arg8[%c0_22, %c0_23, %c0_24] : memref<2x1x32xf32, #tpu.memory_space<vmem>>, vector<1x1x32xf32>
    %41 = vector.shape_cast %40 : vector<1x1x32xf32> to vector<1x32xf32>
    %cst_25 = arith.constant dense<0.000000e+00> : vector<8xf32>
    %42 = vector.multi_reduction <add>, %31, %cst_25 [1] : vector<8x32xf32> to vector<8xf32>
    %43 = vector.shape_cast %42 : vector<8xf32> to vector<8x1xf32>
    %cst_26 = arith.constant 3.200000e+01 : f32
    %44 = vector.broadcast %cst_26 : f32 to vector<8x1xf32>
    %45 = arith.divf %43, %44 : vector<8x1xf32>
    %46 = vector.broadcast %45 : vector<8x1xf32> to vector<8x32xf32>
    %47 = arith.subf %31, %46 : vector<8x32xf32>
    %48 = arith.mulf %47, %47 : vector<8x32xf32>
    %cst_27 = arith.constant dense<0.000000e+00> : vector<8xf32>
    %49 = vector.multi_reduction <add>, %48, %cst_27 [1] : vector<8x32xf32> to vector<8xf32>
    %50 = vector.shape_cast %49 : vector<8xf32> to vector<8x1xf32>
    %cst_28 = arith.constant 3.200000e+01 : f32
    %51 = vector.broadcast %cst_28 : f32 to vector<8x1xf32>
    %52 = arith.divf %50, %51 : vector<8x1xf32>
    %53 = vector.broadcast %45 : vector<8x1xf32> to vector<8x32xf32>
    %54 = arith.subf %31, %53 : vector<8x32xf32>
    %cst_29 = arith.constant 9.99999974E-6 : f32
    %55 = vector.broadcast %cst_29 : f32 to vector<8x1xf32>
    %56 = arith.addf %52, %55 : vector<8x1xf32>
    %57 = math.rsqrt %56 : vector<8x1xf32>
    %58 = vector.broadcast %57 : vector<8x1xf32> to vector<8x32xf32>
    %59 = arith.mulf %54, %58 : vector<8x32xf32>
    %60 = vector.broadcast %39 : vector<1x32xf32> to vector<8x32xf32>
    %61 = arith.mulf %59, %60 : vector<8x32xf32>
    %62 = vector.broadcast %41 : vector<1x32xf32> to vector<8x32xf32>
    %63 = arith.addf %61, %62 : vector<8x32xf32>
    %64 = arith.truncf %63 : vector<8x32xf32> to vector<8x32xbf16>
    %c0_30 = arith.constant 0 : index
    %c0_31 = arith.constant 0 : index
    %c0_32 = arith.constant 0 : index
    %65 = vector.load %arg9[%c0_30, %c0_31, %c0_32] : memref<2x32x96xbf16, #tpu.memory_space<vmem>>, vector<1x32x96xbf16>
    %66 = vector.shape_cast %65 : vector<1x32x96xbf16> to vector<32x96xbf16>
    %cst_33 = arith.constant dense<0.000000e+00> : vector<8x96xf32>
    %67 = tpu.matmul %64, %66, %cst_33 {dimension_numbers = #tpu.dot_dimension_numbers<[1], [0], [0], [1], [0, 0, 1, 1], [], []>} : vector<8x32xbf16>, vector<32x96xbf16>, vector<8x96xf32> -> vector<8x96xf32>
    %c0_34 = arith.constant 0 : index
    %c0_35 = arith.constant 0 : index
    %c0_36 = arith.constant 0 : index
    %68 = vector.load %arg10[%c0_34, %c0_35, %c0_36] : memref<2x1x96xf32, #tpu.memory_space<vmem>>, vector<1x1x96xf32>
    %69 = vector.shape_cast %68 : vector<1x1x96xf32> to vector<1x96xf32>
    %70 = vector.broadcast %69 : vector<1x96xf32> to vector<8x96xf32>
    %71 = arith.addf %67, %70 : vector<8x96xf32>
    %72 = vector.extract_strided_slice %71 {offsets = [0, 0], sizes = [8, 32], strides = [1, 1]} : vector<8x96xf32> to vector<8x32xf32>
    %73 = vector.shape_cast %72 : vector<8x32xf32> to vector<8x4x8xf32>
    %74 = vector.extract_strided_slice %71 {offsets = [0, 32], sizes = [8, 32], strides = [1, 1]} : vector<8x96xf32> to vector<8x32xf32>
    %75 = vector.shape_cast %74 : vector<8x32xf32> to vector<8x4x8xf32>
    %76 = vector.extract_strided_slice %71 {offsets = [0, 64], sizes = [8, 32], strides = [1, 1]} : vector<8x96xf32> to vector<8x32xf32>
    %77 = vector.shape_cast %76 : vector<8x32xf32> to vector<8x4x8xf32>
    %78 = arith.truncf %73 : vector<8x4x8xf32> to vector<8x4x8xbf16>
    %79 = arith.truncf %75 : vector<8x4x8xf32> to vector<8x4x8xbf16>
    "tpu.trace_start"() <{level = 10 : i32, message = "thd,shd->hts"}> : () -> ()
    %cst_37 = arith.constant dense<0.000000e+00> : vector<4x8x8xf32>
    %80 = tpu.matmul %78, %79, %cst_37 {dimension_numbers = #tpu.dot_dimension_numbers<[2], [2], [0], [0], [0, 1, 0, 0, 1, 0], [1], [1]>} : vector<8x4x8xbf16>, vector<8x4x8xbf16>, vector<4x8x8xf32> -> vector<4x8x8xf32>
    "tpu.trace_stop"() : () -> ()
    %cst_38 = arith.constant 0.353553385 : f32
    %81 = vector.broadcast %cst_38 : f32 to vector<4x8x8xf32>
    %82 = arith.mulf %80, %81 : vector<4x8x8xf32>
    %83 = vector.broadcast %37 : vector<1x1x8xf32> to vector<4x8x8xf32>
    %84 = arith.addf %82, %83 : vector<4x8x8xf32>
    %cst_39 = arith.constant dense<0xFF800000> : vector<4x8xf32>
    %85 = vector.multi_reduction <maximumf>, %84, %cst_39 [2] : vector<4x8x8xf32> to vector<4x8xf32>
    %86 = vector.shape_cast %85 : vector<4x8xf32> to vector<4x8x1xf32>
    %87 = vector.broadcast %86 : vector<4x8x1xf32> to vector<4x8x8xf32>
    %88 = arith.subf %84, %87 : vector<4x8x8xf32>
    %89 = math.exp %88 : vector<4x8x8xf32>
    %cst_40 = arith.constant dense<0.000000e+00> : vector<4x8xf32>
    %90 = vector.multi_reduction <add>, %89, %cst_40 [2] : vector<4x8x8xf32> to vector<4x8xf32>
    %91 = vector.shape_cast %90 : vector<4x8xf32> to vector<4x8x1xf32>
    %92 = tpu.reciprocal %91 {approx = true} : vector<4x8x1xf32> -> vector<4x8x1xf32>
    %93 = vector.broadcast %92 : vector<4x8x1xf32> to vector<4x8x8xf32>
    %94 = arith.mulf %89, %93 : vector<4x8x8xf32>
    %95 = arith.truncf %94 : vector<4x8x8xf32> to vector<4x8x8xbf16>
    %96 = arith.truncf %77 : vector<8x4x8xf32> to vector<8x4x8xbf16>
    "tpu.trace_start"() <{level = 10 : i32, message = "hts,shd->thd"}> : () -> ()
    %cst_41 = arith.constant dense<0.000000e+00> : vector<4x8x8xf32>
    %97 = tpu.matmul %96, %95, %cst_41 {dimension_numbers = #tpu.dot_dimension_numbers<[0], [2], [2], [1], [0, 1, 0, 2, 1, 1], [1], [0]>} : vector<8x4x8xbf16>, vector<4x8x8xbf16>, vector<4x8x8xf32> -> vector<4x8x8xf32>
    %98 = tpu.transpose %97, [2, 0, 1] : vector<4x8x8xf32> -> vector<8x4x8xf32>
    "tpu.trace_stop"() : () -> ()
    %99 = vector.shape_cast %98 : vector<8x4x8xf32> to vector<8x32xf32>
    %100 = arith.truncf %99 : vector<8x32xf32> to vector<8x32xbf16>
    %c0_42 = arith.constant 0 : index
    %c0_43 = arith.constant 0 : index
    %c0_44 = arith.constant 0 : index
    %101 = vector.load %arg11[%c0_42, %c0_43, %c0_44] : memref<2x32x32xbf16, #tpu.memory_space<vmem>>, vector<1x32x32xbf16>
    %102 = vector.shape_cast %101 : vector<1x32x32xbf16> to vector<32x32xbf16>
    %cst_45 = arith.constant dense<0.000000e+00> : vector<8x32xf32>
    %103 = tpu.matmul %100, %102, %cst_45 {dimension_numbers = #tpu.dot_dimension_numbers<[1], [0], [0], [1], [0, 0, 1, 1], [], []>} : vector<8x32xbf16>, vector<32x32xbf16>, vector<8x32xf32> -> vector<8x32xf32>
    %104 = arith.addf %31, %103 : vector<8x32xf32>
    %c0_46 = arith.constant 0 : index
    %c0_47 = arith.constant 0 : index
    %c0_48 = arith.constant 0 : index
    %105 = vector.load %arg12[%c0_46, %c0_47, %c0_48] : memref<2x1x32xf32, #tpu.memory_space<vmem>>, vector<1x1x32xf32>
    %106 = vector.shape_cast %105 : vector<1x1x32xf32> to vector<1x32xf32>
    %107 = vector.broadcast %106 : vector<1x32xf32> to vector<8x32xf32>
    %108 = arith.addf %104, %107 : vector<8x32xf32>
    %c0_49 = arith.constant 0 : index
    %c0_50 = arith.constant 0 : index
    %c0_51 = arith.constant 0 : index
    %109 = vector.load %arg13[%c0_49, %c0_50, %c0_51] : memref<2x1x32xf32, #tpu.memory_space<vmem>>, vector<1x1x32xf32>
    %110 = vector.shape_cast %109 : vector<1x1x32xf32> to vector<1x32xf32>
    %c0_52 = arith.constant 0 : index
    %c0_53 = arith.constant 0 : index
    %c0_54 = arith.constant 0 : index
    %111 = vector.load %arg14[%c0_52, %c0_53, %c0_54] : memref<2x1x32xf32, #tpu.memory_space<vmem>>, vector<1x1x32xf32>
    %112 = vector.shape_cast %111 : vector<1x1x32xf32> to vector<1x32xf32>
    %cst_55 = arith.constant dense<0.000000e+00> : vector<8xf32>
    %113 = vector.multi_reduction <add>, %108, %cst_55 [1] : vector<8x32xf32> to vector<8xf32>
    %114 = vector.shape_cast %113 : vector<8xf32> to vector<8x1xf32>
    %cst_56 = arith.constant 3.200000e+01 : f32
    %115 = vector.broadcast %cst_56 : f32 to vector<8x1xf32>
    %116 = arith.divf %114, %115 : vector<8x1xf32>
    %117 = vector.broadcast %116 : vector<8x1xf32> to vector<8x32xf32>
    %118 = arith.subf %108, %117 : vector<8x32xf32>
    %119 = arith.mulf %118, %118 : vector<8x32xf32>
    %cst_57 = arith.constant dense<0.000000e+00> : vector<8xf32>
    %120 = vector.multi_reduction <add>, %119, %cst_57 [1] : vector<8x32xf32> to vector<8xf32>
    %121 = vector.shape_cast %120 : vector<8xf32> to vector<8x1xf32>
    %cst_58 = arith.constant 3.200000e+01 : f32
    %122 = vector.broadcast %cst_58 : f32 to vector<8x1xf32>
    %123 = arith.divf %121, %122 : vector<8x1xf32>
    %124 = vector.broadcast %116 : vector<8x1xf32> to vector<8x32xf32>
    %125 = arith.subf %108, %124 : vector<8x32xf32>
    %cst_59 = arith.constant 9.99999974E-6 : f32
    %126 = vector.broadcast %cst_59 : f32 to vector<8x1xf32>
    %127 = arith.addf %123, %126 : vector<8x1xf32>
    %128 = math.rsqrt %127 : vector<8x1xf32>
    %129 = vector.broadcast %128 : vector<8x1xf32> to vector<8x32xf32>
    %130 = arith.mulf %125, %129 : vector<8x32xf32>
    %131 = vector.broadcast %110 : vector<1x32xf32> to vector<8x32xf32>
    %132 = arith.mulf %130, %131 : vector<8x32xf32>
    %133 = vector.broadcast %112 : vector<1x32xf32> to vector<8x32xf32>
    %134 = arith.addf %132, %133 : vector<8x32xf32>
    %135 = arith.truncf %134 : vector<8x32xf32> to vector<8x32xbf16>
    %c0_60 = arith.constant 0 : index
    %c0_61 = arith.constant 0 : index
    %c0_62 = arith.constant 0 : index
    %136 = vector.load %arg15[%c0_60, %c0_61, %c0_62] : memref<2x32x128xbf16, #tpu.memory_space<vmem>>, vector<1x32x128xbf16>
    %137 = vector.shape_cast %136 : vector<1x32x128xbf16> to vector<32x128xbf16>
    %cst_63 = arith.constant dense<0.000000e+00> : vector<8x128xf32>
    %138 = tpu.matmul %135, %137, %cst_63 {dimension_numbers = #tpu.dot_dimension_numbers<[1], [0], [0], [1], [0, 0, 1, 1], [], []>} : vector<8x32xbf16>, vector<32x128xbf16>, vector<8x128xf32> -> vector<8x128xf32>
    %c0_64 = arith.constant 0 : index
    %c0_65 = arith.constant 0 : index
    %c0_66 = arith.constant 0 : index
    %139 = vector.load %arg16[%c0_64, %c0_65, %c0_66] : memref<2x1x128xf32, #tpu.memory_space<vmem>>, vector<1x1x128xf32>
    %140 = vector.shape_cast %139 : vector<1x1x128xf32> to vector<1x128xf32>
    %141 = vector.broadcast %140 : vector<1x128xf32> to vector<8x128xf32>
    %142 = arith.addf %138, %141 : vector<8x128xf32>
    %cst_67 = arith.constant 1.702000e+00 : f32
    %143 = vector.broadcast %cst_67 : f32 to vector<8x128xf32>
    %144 = arith.mulf %143, %142 : vector<8x128xf32>
    %145 = arith.negf %144 : vector<8x128xf32>
    %146 = math.exp %145 : vector<8x128xf32>
    %cst_68 = arith.constant 1.000000e+00 : f32
    %147 = vector.broadcast %cst_68 : f32 to vector<8x128xf32>
    %148 = arith.addf %147, %146 : vector<8x128xf32>
    %149 = arith.divf %147, %148 : vector<8x128xf32>
    %150 = arith.mulf %142, %149 : vector<8x128xf32>
    %151 = arith.truncf %150 : vector<8x128xf32> to vector<8x128xbf16>
    %c0_69 = arith.constant 0 : index
    %c0_70 = arith.constant 0 : index
    %c0_71 = arith.constant 0 : index
    %152 = vector.load %arg17[%c0_69, %c0_70, %c0_71] : memref<2x128x32xbf16, #tpu.memory_space<vmem>>, vector<1x128x32xbf16>
    %153 = vector.shape_cast %152 : vector<1x128x32xbf16> to vector<128x32xbf16>
    %cst_72 = arith.constant dense<0.000000e+00> : vector<8x32xf32>
    %154 = tpu.matmul %151, %153, %cst_72 {dimension_numbers = #tpu.dot_dimension_numbers<[1], [0], [0], [1], [0, 0, 1, 1], [], []>} : vector<8x128xbf16>, vector<128x32xbf16>, vector<8x32xf32> -> vector<8x32xf32>
    %155 = arith.addf %108, %154 : vector<8x32xf32>
    %c0_73 = arith.constant 0 : index
    %c0_74 = arith.constant 0 : index
    %c0_75 = arith.constant 0 : index
    %156 = vector.load %arg18[%c0_73, %c0_74, %c0_75] : memref<2x1x32xf32, #tpu.memory_space<vmem>>, vector<1x1x32xf32>
    %157 = vector.shape_cast %156 : vector<1x1x32xf32> to vector<1x32xf32>
    %158 = vector.broadcast %157 : vector<1x32xf32> to vector<8x32xf32>
    %159 = arith.addf %155, %158 : vector<8x32xf32>
    %c1 = arith.constant 1 : index
    %c0_76 = arith.constant 0 : index
    %c0_77 = arith.constant 0 : index
    %160 = vector.load %arg7[%c1, %c0_76, %c0_77] : memref<2x1x32xf32, #tpu.memory_space<vmem>>, vector<1x1x32xf32>
    %161 = vector.shape_cast %160 : vector<1x1x32xf32> to vector<1x32xf32>
    %c1_78 = arith.constant 1 : index
    %c0_79 = arith.constant 0 : index
    %c0_80 = arith.constant 0 : index
    %162 = vector.load %arg8[%c1_78, %c0_79, %c0_80] : memref<2x1x32xf32, #tpu.memory_space<vmem>>, vector<1x1x32xf32>
    %163 = vector.shape_cast %162 : vector<1x1x32xf32> to vector<1x32xf32>
    %cst_81 = arith.constant dense<0.000000e+00> : vector<8xf32>
    %164 = vector.multi_reduction <add>, %159, %cst_81 [1] : vector<8x32xf32> to vector<8xf32>
    %165 = vector.shape_cast %164 : vector<8xf32> to vector<8x1xf32>
    %cst_82 = arith.constant 3.200000e+01 : f32
    %166 = vector.broadcast %cst_82 : f32 to vector<8x1xf32>
    %167 = arith.divf %165, %166 : vector<8x1xf32>
    %168 = vector.broadcast %167 : vector<8x1xf32> to vector<8x32xf32>
    %169 = arith.subf %159, %168 : vector<8x32xf32>
    %170 = arith.mulf %169, %169 : vector<8x32xf32>
    %cst_83 = arith.constant dense<0.000000e+00> : vector<8xf32>
    %171 = vector.multi_reduction <add>, %170, %cst_83 [1] : vector<8x32xf32> to vector<8xf32>
    %172 = vector.shape_cast %171 : vector<8xf32> to vector<8x1xf32>
    %cst_84 = arith.constant 3.200000e+01 : f32
    %173 = vector.broadcast %cst_84 : f32 to vector<8x1xf32>
    %174 = arith.divf %172, %173 : vector<8x1xf32>
    %175 = vector.broadcast %167 : vector<8x1xf32> to vector<8x32xf32>
    %176 = arith.subf %159, %175 : vector<8x32xf32>
    %cst_85 = arith.constant 9.99999974E-6 : f32
    %177 = vector.broadcast %cst_85 : f32 to vector<8x1xf32>
    %178 = arith.addf %174, %177 : vector<8x1xf32>
    %179 = math.rsqrt %178 : vector<8x1xf32>
    %180 = vector.broadcast %179 : vector<8x1xf32> to vector<8x32xf32>
    %181 = arith.mulf %176, %180 : vector<8x32xf32>
    %182 = vector.broadcast %161 : vector<1x32xf32> to vector<8x32xf32>
    %183 = arith.mulf %181, %182 : vector<8x32xf32>
    %184 = vector.broadcast %163 : vector<1x32xf32> to vector<8x32xf32>
    %185 = arith.addf %183, %184 : vector<8x32xf32>
    %186 = arith.truncf %185 : vector<8x32xf32> to vector<8x32xbf16>
    %c1_86 = arith.constant 1 : index
    %c0_87 = arith.constant 0 : index
    %c0_88 = arith.constant 0 : index
    %187 = vector.load %arg9[%c1_86, %c0_87, %c0_88] : memref<2x32x96xbf16, #tpu.memory_space<vmem>>, vector<1x32x96xbf16>
    %188 = vector.shape_cast %187 : vector<1x32x96xbf16> to vector<32x96xbf16>
    %cst_89 = arith.constant dense<0.000000e+00> : vector<8x96xf32>
    %189 = tpu.matmul %186, %188, %cst_89 {dimension_numbers = #tpu.dot_dimension_numbers<[1], [0], [0], [1], [0, 0, 1, 1], [], []>} : vector<8x32xbf16>, vector<32x96xbf16>, vector<8x96xf32> -> vector<8x96xf32>
    %c1_90 = arith.constant 1 : index
    %c0_91 = arith.constant 0 : index
    %c0_92 = arith.constant 0 : index
    %190 = vector.load %arg10[%c1_90, %c0_91, %c0_92] : memref<2x1x96xf32, #tpu.memory_space<vmem>>, vector<1x1x96xf32>
    %191 = vector.shape_cast %190 : vector<1x1x96xf32> to vector<1x96xf32>
    %192 = vector.broadcast %191 : vector<1x96xf32> to vector<8x96xf32>
    %193 = arith.addf %189, %192 : vector<8x96xf32>
    %194 = vector.extract_strided_slice %193 {offsets = [0, 64], sizes = [8, 32], strides = [1, 1]} : vector<8x96xf32> to vector<8x32xf32>
    %195 = arith.truncf %194 : vector<8x32xf32> to vector<8x32xbf16>
    %c1_93 = arith.constant 1 : index
    %c0_94 = arith.constant 0 : index
    %c0_95 = arith.constant 0 : index
    %196 = vector.load %arg11[%c1_93, %c0_94, %c0_95] : memref<2x32x32xbf16, #tpu.memory_space<vmem>>, vector<1x32x32xbf16>
    %197 = vector.shape_cast %196 : vector<1x32x32xbf16> to vector<32x32xbf16>
    %cst_96 = arith.constant dense<0.000000e+00> : vector<8x32xf32>
    %198 = tpu.matmul %195, %197, %cst_96 {dimension_numbers = #tpu.dot_dimension_numbers<[1], [0], [0], [1], [0, 0, 1, 1], [], []>} : vector<8x32xbf16>, vector<32x32xbf16>, vector<8x32xf32> -> vector<8x32xf32>
    %199 = arith.addf %159, %198 : vector<8x32xf32>
    %c1_97 = arith.constant 1 : index
    %c0_98 = arith.constant 0 : index
    %c0_99 = arith.constant 0 : index
    %200 = vector.load %arg12[%c1_97, %c0_98, %c0_99] : memref<2x1x32xf32, #tpu.memory_space<vmem>>, vector<1x1x32xf32>
    %201 = vector.shape_cast %200 : vector<1x1x32xf32> to vector<1x32xf32>
    %202 = vector.broadcast %201 : vector<1x32xf32> to vector<8x32xf32>
    %203 = arith.addf %199, %202 : vector<8x32xf32>
    %c1_100 = arith.constant 1 : index
    %c0_101 = arith.constant 0 : index
    %c0_102 = arith.constant 0 : index
    %204 = vector.load %arg13[%c1_100, %c0_101, %c0_102] : memref<2x1x32xf32, #tpu.memory_space<vmem>>, vector<1x1x32xf32>
    %205 = vector.shape_cast %204 : vector<1x1x32xf32> to vector<1x32xf32>
    %c1_103 = arith.constant 1 : index
    %c0_104 = arith.constant 0 : index
    %c0_105 = arith.constant 0 : index
    %206 = vector.load %arg14[%c1_103, %c0_104, %c0_105] : memref<2x1x32xf32, #tpu.memory_space<vmem>>, vector<1x1x32xf32>
    %207 = vector.shape_cast %206 : vector<1x1x32xf32> to vector<1x32xf32>
    %cst_106 = arith.constant dense<0.000000e+00> : vector<8xf32>
    %208 = vector.multi_reduction <add>, %203, %cst_106 [1] : vector<8x32xf32> to vector<8xf32>
    %209 = vector.shape_cast %208 : vector<8xf32> to vector<8x1xf32>
    %cst_107 = arith.constant 3.200000e+01 : f32
    %210 = vector.broadcast %cst_107 : f32 to vector<8x1xf32>
    %211 = arith.divf %209, %210 : vector<8x1xf32>
    %212 = vector.broadcast %211 : vector<8x1xf32> to vector<8x32xf32>
    %213 = arith.subf %203, %212 : vector<8x32xf32>
    %214 = arith.mulf %213, %213 : vector<8x32xf32>
    %cst_108 = arith.constant dense<0.000000e+00> : vector<8xf32>
    %215 = vector.multi_reduction <add>, %214, %cst_108 [1] : vector<8x32xf32> to vector<8xf32>
    %216 = vector.shape_cast %215 : vector<8xf32> to vector<8x1xf32>
    %cst_109 = arith.constant 3.200000e+01 : f32
    %217 = vector.broadcast %cst_109 : f32 to vector<8x1xf32>
    %218 = arith.divf %216, %217 : vector<8x1xf32>
    %219 = vector.broadcast %211 : vector<8x1xf32> to vector<8x32xf32>
    %220 = arith.subf %203, %219 : vector<8x32xf32>
    %cst_110 = arith.constant 9.99999974E-6 : f32
    %221 = vector.broadcast %cst_110 : f32 to vector<8x1xf32>
    %222 = arith.addf %218, %221 : vector<8x1xf32>
    %223 = math.rsqrt %222 : vector<8x1xf32>
    %224 = vector.broadcast %223 : vector<8x1xf32> to vector<8x32xf32>
    %225 = arith.mulf %220, %224 : vector<8x32xf32>
    %226 = vector.broadcast %205 : vector<1x32xf32> to vector<8x32xf32>
    %227 = arith.mulf %225, %226 : vector<8x32xf32>
    %228 = vector.broadcast %207 : vector<1x32xf32> to vector<8x32xf32>
    %229 = arith.addf %227, %228 : vector<8x32xf32>
    %230 = arith.truncf %229 : vector<8x32xf32> to vector<8x32xbf16>
    %c1_111 = arith.constant 1 : index
    %c0_112 = arith.constant 0 : index
    %c0_113 = arith.constant 0 : index
    %231 = vector.load %arg15[%c1_111, %c0_112, %c0_113] : memref<2x32x128xbf16, #tpu.memory_space<vmem>>, vector<1x32x128xbf16>
    %232 = vector.shape_cast %231 : vector<1x32x128xbf16> to vector<32x128xbf16>
    %cst_114 = arith.constant dense<0.000000e+00> : vector<8x128xf32>
    %233 = tpu.matmul %230, %232, %cst_114 {dimension_numbers = #tpu.dot_dimension_numbers<[1], [0], [0], [1], [0, 0, 1, 1], [], []>} : vector<8x32xbf16>, vector<32x128xbf16>, vector<8x128xf32> -> vector<8x128xf32>
    %c1_115 = arith.constant 1 : index
    %c0_116 = arith.constant 0 : index
    %c0_117 = arith.constant 0 : index
    %234 = vector.load %arg16[%c1_115, %c0_116, %c0_117] : memref<2x1x128xf32, #tpu.memory_space<vmem>>, vector<1x1x128xf32>
    %235 = vector.shape_cast %234 : vector<1x1x128xf32> to vector<1x128xf32>
    %236 = vector.broadcast %235 : vector<1x128xf32> to vector<8x128xf32>
    %237 = arith.addf %233, %236 : vector<8x128xf32>
    %cst_118 = arith.constant 1.702000e+00 : f32
    %238 = vector.broadcast %cst_118 : f32 to vector<8x128xf32>
    %239 = arith.mulf %238, %237 : vector<8x128xf32>
    %240 = arith.negf %239 : vector<8x128xf32>
    %241 = math.exp %240 : vector<8x128xf32>
    %cst_119 = arith.constant 1.000000e+00 : f32
    %242 = vector.broadcast %cst_119 : f32 to vector<8x128xf32>
    %243 = arith.addf %242, %241 : vector<8x128xf32>
    %244 = arith.divf %242, %243 : vector<8x128xf32>
    %245 = arith.mulf %237, %244 : vector<8x128xf32>
    %246 = arith.truncf %245 : vector<8x128xf32> to vector<8x128xbf16>
    %c1_120 = arith.constant 1 : index
    %c0_121 = arith.constant 0 : index
    %c0_122 = arith.constant 0 : index
    %247 = vector.load %arg17[%c1_120, %c0_121, %c0_122] : memref<2x128x32xbf16, #tpu.memory_space<vmem>>, vector<1x128x32xbf16>
    %248 = vector.shape_cast %247 : vector<1x128x32xbf16> to vector<128x32xbf16>
    %cst_123 = arith.constant dense<0.000000e+00> : vector<8x32xf32>
    %249 = tpu.matmul %246, %248, %cst_123 {dimension_numbers = #tpu.dot_dimension_numbers<[1], [0], [0], [1], [0, 0, 1, 1], [], []>} : vector<8x128xbf16>, vector<128x32xbf16>, vector<8x32xf32> -> vector<8x32xf32>
    %250 = arith.addf %203, %249 : vector<8x32xf32>
    %c1_124 = arith.constant 1 : index
    %c0_125 = arith.constant 0 : index
    %c0_126 = arith.constant 0 : index
    %251 = vector.load %arg18[%c1_124, %c0_125, %c0_126] : memref<2x1x32xf32, #tpu.memory_space<vmem>>, vector<1x1x32xf32>
    %252 = vector.shape_cast %251 : vector<1x1x32xf32> to vector<1x32xf32>
    %253 = vector.broadcast %252 : vector<1x32xf32> to vector<8x32xf32>
    %254 = arith.addf %250, %253 : vector<8x32xf32>
    %255 = vector.extract_strided_slice %254 {offsets = [1, 0], sizes = [4, 32], strides = [1, 1]} : vector<8x32xf32> to vector<4x32xf32>
    %c0_127 = arith.constant 0 : index
    %c0_128 = arith.constant 0 : index
    %256 = vector.load %arg19[%c0_127, %c0_128] : memref<1x32xf32, #tpu.memory_space<vmem>>, vector<1x32xf32>
    %c0_129 = arith.constant 0 : index
    %c0_130 = arith.constant 0 : index
    %257 = vector.load %arg20[%c0_129, %c0_130] : memref<1x32xf32, #tpu.memory_space<vmem>>, vector<1x32xf32>
    %cst_131 = arith.constant dense<0.000000e+00> : vector<4xf32>
    %258 = vector.multi_reduction <add>, %255, %cst_131 [1] : vector<4x32xf32> to vector<4xf32>
    %259 = vector.shape_cast %258 : vector<4xf32> to vector<4x1xf32>
    %cst_132 = arith.constant 3.200000e+01 : f32
    %260 = vector.broadcast %cst_132 : f32 to vector<4x1xf32>
    %261 = arith.divf %259, %260 : vector<4x1xf32>
    %262 = vector.broadcast %261 : vector<4x1xf32> to vector<4x32xf32>
    %263 = arith.subf %255, %262 : vector<4x32xf32>
    %264 = arith.mulf %263, %263 : vector<4x32xf32>
    %cst_133 = arith.constant dense<0.000000e+00> : vector<4xf32>
    %265 = vector.multi_reduction <add>, %264, %cst_133 [1] : vector<4x32xf32> to vector<4xf32>
    %266 = vector.shape_cast %265 : vector<4xf32> to vector<4x1xf32>
    %cst_134 = arith.constant 3.200000e+01 : f32
    %267 = vector.broadcast %cst_134 : f32 to vector<4x1xf32>
    %268 = arith.divf %266, %267 : vector<4x1xf32>
    %269 = vector.broadcast %261 : vector<4x1xf32> to vector<4x32xf32>
    %270 = arith.subf %255, %269 : vector<4x32xf32>
    %cst_135 = arith.constant 9.99999974E-6 : f32
    %271 = vector.broadcast %cst_135 : f32 to vector<4x1xf32>
    %272 = arith.addf %268, %271 : vector<4x1xf32>
    %273 = math.rsqrt %272 : vector<4x1xf32>
    %274 = vector.broadcast %273 : vector<4x1xf32> to vector<4x32xf32>
    %275 = arith.mulf %270, %274 : vector<4x32xf32>
    %276 = vector.broadcast %256 : vector<1x32xf32> to vector<4x32xf32>
    %277 = arith.mulf %275, %276 : vector<4x32xf32>
    %278 = vector.broadcast %257 : vector<1x32xf32> to vector<4x32xf32>
    %279 = arith.addf %277, %278 : vector<4x32xf32>
    %c0_136 = arith.constant 0 : index
    %c0_137 = arith.constant 0 : index
    %280 = vector.load %arg21[%c0_136, %c0_137] : memref<32x16xbf16, #tpu.memory_space<vmem>>, vector<32x16xbf16>
    %281 = arith.truncf %279 : vector<4x32xf32> to vector<4x32xbf16>
    %cst_138 = arith.constant dense<0.000000e+00> : vector<16x4xf32>
    %282 = tpu.matmul %280, %281, %cst_138 {dimension_numbers = #tpu.dot_dimension_numbers<[0], [1], [1], [0], [0, 1, 1, 0], [], []>} : vector<32x16xbf16>, vector<4x32xbf16>, vector<16x4xf32> -> vector<16x4xf32>
    %c0_139 = arith.constant 0 : index
    %c0_140 = arith.constant 0 : index
    %c0_141 = arith.constant 0 : index
    %283 = vector.load %arg22[%c0_139, %c0_140, %c0_141] : memref<1x16x4xf32, #tpu.memory_space<vmem>>, vector<1x16x4xf32>
    %284 = vector.shape_cast %283 : vector<1x16x4xf32> to vector<16x4xf32>
    %285 = vector.shape_cast %282 : vector<16x4xf32> to vector<1x16x4xf32>
    tpu.vector_store %arg22[%c0_139, %c0_140, %c0_141], %285 {strides = array<i32>} : memref<1x16x4xf32, #tpu.memory_space<vmem>>, vector<1x16x4xf32>,
    return
  }
  func.func @transform_0(%arg0: i32) -> (i32, i32, i32) {
    %c0_i32 = arith.constant 0 : i32
    %c0_i32_0 = arith.constant 0 : i32
    %c0_i32_1 = arith.constant 0 : i32
    return %arg0, %c0_i32, %c0_i32_0 : i32, i32, i32
  }
  func.func @transform_1(%arg0: i32) -> (i32, i32) {
    %c0_i32 = arith.constant 0 : i32
    %c0_i32_0 = arith.constant 0 : i32
    %c0_i32_1 = arith.constant 0 : i32
    return %c0_i32, %c0_i32_0 : i32, i32
  }
  func.func @transform_2(%arg0: i32) -> (i32, i32) {
    %c0_i32 = arith.constant 0 : i32
    %c0_i32_0 = arith.constant 0 : i32
    %c0_i32_1 = arith.constant 0 : i32
    return %c0_i32, %c0_i32_0 : i32, i32
  }
  func.func @transform_3(%arg0: i32) -> (i32, i32) {
    %c0_i32 = arith.constant 0 : i32
    %c0_i32_0 = arith.constant 0 : i32
    %c0_i32_1 = arith.constant 0 : i32
    return %c0_i32, %c0_i32_0 : i32, i32
  }
  func.func @transform_4(%arg0: i32) -> (i32, i32) {
    %c0_i32 = arith.constant 0 : i32
    %c0_i32_0 = arith.constant 0 : i32
    %c0_i32_1 = arith.constant 0 : i32
    return %c0_i32, %c0_i32_0 : i32, i32
  }
  func.func @transform_5(%arg0: i32) -> (i32, i32) {
    %c0_i32 = arith.constant 0 : i32
    %c0_i32_0 = arith.constant 0 : i32
    %c0_i32_1 = arith.constant 0 : i32
    return %c0_i32, %c0_i32_0 : i32, i32
  }
  func.func @transform_6(%arg0: i32) -> (i32, i32, i32) {
    %c0_i32 = arith.constant 0 : i32
    %c0_i32_0 = arith.constant 0 : i32
    %c0_i32_1 = arith.constant 0 : i32
    %c0_i32_2 = arith.constant 0 : i32
    return %c0_i32, %c0_i32_0, %c0_i32_1 : i32, i32, i32
  }
  func.func @transform_7(%arg0: i32) -> (i32, i32, i32) {
    %c0_i32 = arith.constant 0 : i32
    %c0_i32_0 = arith.constant 0 : i32
    %c0_i32_1 = arith.constant 0 : i32
    %c0_i32_2 = arith.constant 0 : i32
    return %c0_i32, %c0_i32_0, %c0_i32_1 : i32, i32, i32
  }
  func.func @transform_8(%arg0: i32) -> (i32, i32, i32) {
    %c0_i32 = arith.constant 0 : i32
    %c0_i32_0 = arith.constant 0 : i32
    %c0_i32_1 = arith.constant 0 : i32
    %c0_i32_2 = arith.constant 0 : i32
    return %c0_i32, %c0_i32_0, %c0_i32_1 : i32, i32, i32
  }
  func.func @transform_9(%arg0: i32) -> (i32, i32, i32) {
    %c0_i32 = arith.constant 0 : i32
    %c0_i32_0 = arith.constant 0 : i32
    %c0_i32_1 = arith.constant 0 : i32
    %c0_i32_2 = arith.constant 0 : i32
    return %c0_i32, %c0_i32_0, %c0_i32_1 : i32, i32, i32
  }
  func.func @transform_10(%arg0: i32) -> (i32, i32, i32) {
    %c0_i32 = arith.constant 0 : i32
    %c0_i32_0 = arith.constant 0 : i32
    %c0_i32_1 = arith.constant 0 : i32
    %c0_i32_2 = arith.constant 0 : i32
    return %c0_i32, %c0_i32_0, %c0_i32_1 : i32, i32, i32
  }
  func.func @transform_11(%arg0: i32) -> (i32, i32, i32) {
    %c0_i32 = arith.constant 0 : i32
    %c0_i32_0 = arith.constant 0 : i32
    %c0_i32_1 = arith.constant 0 : i32
    %c0_i32_2 = arith.constant 0 : i32
    return %c0_i32, %c0_i32_0, %c0_i32_1 : i32, i32, i32
  }
  func.func @transform_12(%arg0: i32) -> (i32, i32, i32) {
    %c0_i32 = arith.constant 0 : i32
    %c0_i32_0 = arith.constant 0 : i32
    %c0_i32_1 = arith.constant 0 : i32
    %c0_i32_2 = arith.constant 0 : i32
    return %c0_i32, %c0_i32_0, %c0_i32_1 : i32, i32, i32
  }
  func.func @transform_13(%arg0: i32) -> (i32, i32, i32) {
    %c0_i32 = arith.constant 0 : i32
    %c0_i32_0 = arith.constant 0 : i32
    %c0_i32_1 = arith.constant 0 : i32
    %c0_i32_2 = arith.constant 0 : i32
    return %c0_i32, %c0_i32_0, %c0_i32_1 : i32, i32, i32
  }
  func.func @transform_14(%arg0: i32) -> (i32, i32, i32) {
    %c0_i32 = arith.constant 0 : i32
    %c0_i32_0 = arith.constant 0 : i32
    %c0_i32_1 = arith.constant 0 : i32
    %c0_i32_2 = arith.constant 0 : i32
    return %c0_i32, %c0_i32_0, %c0_i32_1 : i32, i32, i32
  }
  func.func @transform_15(%arg0: i32) -> (i32, i32, i32) {
    %c0_i32 = arith.constant 0 : i32
    %c0_i32_0 = arith.constant 0 : i32
    %c0_i32_1 = arith.constant 0 : i32
    %c0_i32_2 = arith.constant 0 : i32
    return %c0_i32, %c0_i32_0, %c0_i32_1 : i32, i32, i32
  }
  func.func @transform_16(%arg0: i32) -> (i32, i32, i32) {
    %c0_i32 = arith.constant 0 : i32
    %c0_i32_0 = arith.constant 0 : i32
    %c0_i32_1 = arith.constant 0 : i32
    %c0_i32_2 = arith.constant 0 : i32
    return %c0_i32, %c0_i32_0, %c0_i32_1 : i32, i32, i32
  }
  func.func @transform_17(%arg0: i32) -> (i32, i32, i32) {
    %c0_i32 = arith.constant 0 : i32
    %c0_i32_0 = arith.constant 0 : i32
    %c0_i32_1 = arith.constant 0 : i32
    %c0_i32_2 = arith.constant 0 : i32
    return %c0_i32, %c0_i32_0, %c0_i32_1 : i32, i32, i32
  }
  func.func @transform_18(%arg0: i32) -> (i32, i32) {
    %c0_i32 = arith.constant 0 : i32
    %c0_i32_0 = arith.constant 0 : i32
    %c0_i32_1 = arith.constant 0 : i32
    return %c0_i32, %c0_i32_0 : i32, i32
  }
  func.func @transform_19(%arg0: i32) -> (i32, i32) {
    %c0_i32 = arith.constant 0 : i32
    %c0_i32_0 = arith.constant 0 : i32
    %c0_i32_1 = arith.constant 0 : i32
    return %c0_i32, %c0_i32_0 : i32, i32
  }
  func.func @transform_20(%arg0: i32) -> (i32, i32) {
    %c0_i32 = arith.constant 0 : i32
    %c0_i32_0 = arith.constant 0 : i32
    %c0_i32_1 = arith.constant 0 : i32
    return %c0_i32, %c0_i32_0 : i32, i32
  }
  func.func @transform_21(%arg0: i32) -> (i32, i32, i32) {
    %c0_i32 = arith.constant 0 : i32
    %c0_i32_0 = arith.constant 0 : i32
    %c0_i32_1 = arith.constant 0 : i32
    return %arg0, %c0_i32, %c0_i32_0 : i32, i32, i32
  }
}

</mosaic_0001>

<llo_original>
// kernel: tpu_custom_call.1
$region0: #{tpu_custom_call.1}
  #allocation0 [shape = 'u32[]', space=smem, size = 0x4, offset = 0x4, fixed_abs, tag = 'smem constant byte address 0x4 - core index']
  #allocation1 [shape = 'u32[144,128]{1,0:T(1,128)}', space=vmem, size = 0x12000, scoped, tag = 'internal scratch']
  %s0 = inlined_call_operand.vmem [shape: bf16[2,7,768], index: 0, kind: input, shape index: {}]
  %s1 = inlined_call_operand.vmem [shape: bf16[768,32], index: 1, kind: input, shape index: {}]
  %s2 = inlined_call_operand.vmem [shape: f32[1,32], index: 2, kind: input, shape index: {}]
  %s3 = inlined_call_operand.vmem [shape: f32[8,32], index: 3, kind: input, shape index: {}]
  %s4 = inlined_call_operand.vmem [shape: f32[1,32], index: 4, kind: input, shape index: {}]
  %s5 = inlined_call_operand.vmem [shape: f32[1,32], index: 5, kind: input, shape index: {}]
  %s6 = inlined_call_operand.vmem [shape: f32[2,1,32], index: 6, kind: input, shape index: {}]
  %s7 = inlined_call_operand.vmem [shape: f32[2,1,32], index: 7, kind: input, shape index: {}]
  %s8 = inlined_call_operand.vmem [shape: bf16[2,32,96], index: 8, kind: input, shape index: {}]
  %s9 = inlined_call_operand.vmem [shape: f32[2,1,96], index: 9, kind: input, shape index: {}]
  %s10 = inlined_call_operand.vmem [shape: bf16[2,32,32], index: 10, kind: input, shape index: {}]
  %s11 = inlined_call_operand.vmem [shape: f32[2,1,32], index: 11, kind: input, shape index: {}]
  %s12 = inlined_call_operand.vmem [shape: f32[2,1,32], index: 12, kind: input, shape index: {}]
  %s13 = inlined_call_operand.vmem [shape: f32[2,1,32], index: 13, kind: input, shape index: {}]
  %s14 = inlined_call_operand.vmem [shape: bf16[2,32,128], index: 14, kind: input, shape index: {}]
  %s15 = inlined_call_operand.vmem [shape: f32[2,1,128], index: 15, kind: input, shape index: {}]
  %s16 = inlined_call_operand.vmem [shape: bf16[2,128,32], index: 16, kind: input, shape index: {}]
  %s17 = inlined_call_operand.vmem [shape: f32[2,1,32], index: 17, kind: input, shape index: {}]
  %s18 = inlined_call_operand.vmem [shape: f32[1,32], index: 18, kind: input, shape index: {}]
  %s19 = inlined_call_operand.vmem [shape: f32[1,32], index: 19, kind: input, shape index: {}]
  %s20 = inlined_call_operand.vmem [shape: bf16[32,16], index: 20, kind: input, shape index: {}]
  %s21 = inlined_call_operand.vmem [shape: f32[2,16,4], index: 21, kind: output, shape index: {}]
  %s22 = sld [smem:[#allocation0]]
  $region117: #{tpu_custom_call.1} parent=0
    _
  %s24 = ssub.s32 1, %s22
  %s25 = scalar_select 0, %s24, %s22
  loop: start=0, step=1, limit=4
  $region2: #{tpu_custom_call.1} parent=0 // loop_pre_header
    _
  $region3: #{tpu_custom_call.1} parent=0 // loop_header
    %s27 = sphi 0, %s31
    %p28 = scmp.ge.s32.totalorder %s27, 4
    %s37 = sphi 0, %s39
    %s40 = sphi 0, %s37
    %s41 = sphi 0, %s40
    %s57 = sphi 0, %s41
    %s61 = sphi 0, %s61
    %s63 = sphi 0, %s61
    %s64 = sphi 0, %s63
    %s78 = sphi 0, %s64
    %s82 = sphi 0, %s82
    %s84 = sphi 0, %s82
    %s85 = sphi 0, %s84
    %s99 = sphi 0, %s85
    %s103 = sphi 0, %s103
    %s105 = sphi 0, %s103
    %s106 = sphi 0, %s105
    %s120 = sphi 0, %s106
    %s124 = sphi 0, %s124
    %s126 = sphi 0, %s124
    %s127 = sphi 0, %s126
    %s141 = sphi 0, %s127
    %s145 = sphi 0, %s145
    %s147 = sphi 0, %s145
    %s148 = sphi 0, %s147
    %s162 = sphi 0, %s148
    %s166 = sphi 0, %s166
    %s168 = sphi 0, %s166
    %s169 = sphi 0, %s168
    %s183 = sphi 0, %s169
    %s187 = sphi 0, %s187
    %s189 = sphi 0, %s187
    %s190 = sphi 0, %s189
    %s204 = sphi 0, %s190
    %s208 = sphi 0, %s208
    %s210 = sphi 0, %s208
    %s211 = sphi 0, %s210
    %s225 = sphi 0, %s211
    %s229 = sphi 0, %s229
    %s231 = sphi 0, %s229
    %s232 = sphi 0, %s231
    %s246 = sphi 0, %s232
    %s250 = sphi 0, %s250
    %s252 = sphi 0, %s250
    %s253 = sphi 0, %s252
    %s267 = sphi 0, %s253
    %s271 = sphi 0, %s271
    %s273 = sphi 0, %s271
    %s274 = sphi 0, %s273
    %s288 = sphi 0, %s274
    %s292 = sphi 0, %s292
    %s294 = sphi 0, %s292
    %s295 = sphi 0, %s294
    %s309 = sphi 0, %s295
    %s313 = sphi 0, %s313
    %s315 = sphi 0, %s313
    %s316 = sphi 0, %s315
    %s330 = sphi 0, %s316
    %s334 = sphi 0, %s334
    %s336 = sphi 0, %s334
    %s337 = sphi 0, %s336
    %s351 = sphi 0, %s337
    %s355 = sphi 0, %s355
    %s357 = sphi 0, %s355
    %s358 = sphi 0, %s357
    %s372 = sphi 0, %s358
    %s376 = sphi 0, %s376
    %s378 = sphi 0, %s376
    %s379 = sphi 0, %s378
    %s393 = sphi 0, %s379
    %s397 = sphi 0, %s397
    %s399 = sphi 0, %s397
    %s400 = sphi 0, %s399
    %s414 = sphi 0, %s400
    %s418 = sphi 0, %s418
    %s420 = sphi 0, %s418
    %s421 = sphi 0, %s420
    %s435 = sphi 0, %s421
    %s439 = sphi 0, %s439
    %s441 = sphi 0, %s439
    %s442 = sphi 0, %s441
    %s456 = sphi 0, %s442
    %s460 = sphi 0, %s460
    %s462 = sphi 0, %s460
    %s463 = sphi 0, %s462
    %s477 = sphi 0, %s463
    %s483 = sphi 0, %s485
    %s486 = sphi 0, %s483
    %s487 = sphi 0, %s486
    %s503 = sphi 0, %s487
  $region4: #{tpu_custom_call.1} parent=0 // loop_header_branch
    %30 = sbr.rel (%p28) target = $region8
  $region5: #{tpu_custom_call.1} parent=0 // loop_body
    %s32 = ssub.s32 %s27, 1
    %s33 = ssub.s32 %s27, 2
    %s34 = sadd.s32 %s27, 1
    %s35 = ssub.s32 %s27, %s34
    %p36 = scmp.eq.s32.totalorder %s35, 0
    %s38 = sadd.s32 %s37, 1
    %s39 = scalar_select %p36, %s37, %s38
    %p42 = pneg %p36
    %p43 = scmp.eq.s32.totalorder %s27, 1
    %p44 = por %p42, %p43
    %p45 = scmp.ne.s32.totalorder %s37, %s40
    %p46 = scmp.eq.s32.totalorder %s27, 0
    %p47 = por %p45, %p46
    %p48 = scmp.ne.s32.totalorder %s37, %s40
    %p49 = scmp.eq.s32.totalorder %s32, 1
    %p50 = por %p48, %p49
    %p51 = scmp.ne.s32.totalorder %s40, %s41
    %p52 = scmp.eq.s32.totalorder %s32, 0
    %p53 = por %p51, %p52
    %p54 = scmp.ne.s32.totalorder %s40, %s41
    %p55 = scmp.eq.s32.totalorder %s33, 1
    %p56 = por %p54, %p55
    %p58 = scmp.ne.s32.totalorder %s41, %s57
    %p59 = scmp.eq.s32.totalorder %s33, 0
    %p60 = por %p58, %p59
    %s62 = sadd.s32 %s61, 1
    %p65 = scmp.eq.s32.totalorder %s27, 1
    %p66 = scmp.ne.s32.totalorder %s61, %s63
    %p67 = scmp.eq.s32.totalorder %s27, 0
    %p68 = por %p66, %p67
    %p69 = scmp.ne.s32.totalorder %s61, %s63
    %p70 = scmp.eq.s32.totalorder %s32, 1
    %p71 = por %p69, %p70
    %p72 = scmp.ne.s32.totalorder %s63, %s64
    %p73 = scmp.eq.s32.totalorder %s32, 0
    %p74 = por %p72, %p73
    %p75 = scmp.ne.s32.totalorder %s63, %s64
    %p76 = scmp.eq.s32.totalorder %s33, 1
    %p77 = por %p75, %p76
    %p79 = scmp.ne.s32.totalorder %s64, %s78
    %p80 = scmp.eq.s32.totalorder %s33, 0
    %p81 = por %p79, %p80
    %s83 = sadd.s32 %s82, 1
    %p86 = scmp.eq.s32.totalorder %s27, 1
    %p87 = scmp.ne.s32.totalorder %s82, %s84
    %p88 = scmp.eq.s32.totalorder %s27, 0
    %p89 = por %p87, %p88
    %p90 = scmp.ne.s32.totalorder %s82, %s84
    %p91 = scmp.eq.s32.totalorder %s32, 1
    %p92 = por %p90, %p91
    %p93 = scmp.ne.s32.totalorder %s84, %s85
    %p94 = scmp.eq.s32.totalorder %s32, 0
    %p95 = por %p93, %p94
    %p96 = scmp.ne.s32.totalorder %s84, %s85
    %p97 = scmp.eq.s32.totalorder %s33, 1
    %p98 = por %p96, %p97
    %p100 = scmp.ne.s32.totalorder %s85, %s99
    %p101 = scmp.eq.s32.totalorder %s33, 0
    %p102 = por %p100, %p101
    %s104 = sadd.s32 %s103, 1
    %p107 = scmp.eq.s32.totalorder %s27, 1
    %p108 = scmp.ne.s32.totalorder %s103, %s105
    %p109 = scmp.eq.s32.totalorder %s27, 0
    %p110 = por %p108, %p109
    %p111 = scmp.ne.s32.totalorder %s103, %s105
    %p112 = scmp.eq.s32.totalorder %s32, 1
    %p113 = por %p111, %p112
    %p114 = scmp.ne.s32.totalorder %s105, %s106
    %p115 = scmp.eq.s32.totalorder %s32, 0
    %p116 = por %p114, %p115
    %p117 = scmp.ne.s32.totalorder %s105, %s106
    %p118 = scmp.eq.s32.totalorder %s33, 1
    %p119 = por %p117, %p118
    %p121 = scmp.ne.s32.totalorder %s106, %s120
    %p122 = scmp.eq.s32.totalorder %s33, 0
    %p123 = por %p121, %p122
    %s125 = sadd.s32 %s124, 1
    %p128 = scmp.eq.s32.totalorder %s27, 1
    %p129 = scmp.ne.s32.totalorder %s124, %s126
    %p130 = scmp.eq.s32.totalorder %s27, 0
    %p131 = por %p129, %p130
    %p132 = scmp.ne.s32.totalorder %s124, %s126
    %p133 = scmp.eq.s32.totalorder %s32, 1
    %p134 = por %p132, %p133
    %p135 = scmp.ne.s32.totalorder %s126, %s127
    %p136 = scmp.eq.s32.totalorder %s32, 0
    %p137 = por %p135, %p136
    %p138 = scmp.ne.s32.totalorder %s126, %s127
    %p139 = scmp.eq.s32.totalorder %s33, 1
    %p140 = por %p138, %p139
    %p142 = scmp.ne.s32.totalorder %s127, %s141
    %p143 = scmp.eq.s32.totalorder %s33, 0
    %p144 = por %p142, %p143
    %s146 = sadd.s32 %s145, 1
    %p149 = scmp.eq.s32.totalorder %s27, 1
    %p150 = scmp.ne.s32.totalorder %s145, %s147
    %p151 = scmp.eq.s32.totalorder %s27, 0
    %p152 = por %p150, %p151
    %p153 = scmp.ne.s32.totalorder %s145, %s147
    %p154 = scmp.eq.s32.totalorder %s32, 1
    %p155 = por %p153, %p154
    %p156 = scmp.ne.s32.totalorder %s147, %s148
    %p157 = scmp.eq.s32.totalorder %s32, 0
    %p158 = por %p156, %p157
    %p159 = scmp.ne.s32.totalorder %s147, %s148
    %p160 = scmp.eq.s32.totalorder %s33, 1
    %p161 = por %p159, %p160
    %p163 = scmp.ne.s32.totalorder %s148, %s162
    %p164 = scmp.eq.s32.totalorder %s33, 0
    %p165 = por %p163, %p164
    %s167 = sadd.s32 %s166, 1
    %p170 = scmp.eq.s32.totalorder %s27, 1
    %p171 = scmp.ne.s32.totalorder %s166, %s168
    %p172 = scmp.eq.s32.totalorder %s27, 0
    %p173 = por %p171, %p172
    %p174 = scmp.ne.s32.totalorder %s166, %s168
    %p175 = scmp.eq.s32.totalorder %s32, 1
    %p176 = por %p174, %p175
    %p177 = scmp.ne.s32.totalorder %s168, %s169
    %p178 = scmp.eq.s32.totalorder %s32, 0
    %p179 = por %p177, %p178
    %p180 = scmp.ne.s32.totalorder %s168, %s169
    %p181 = scmp.eq.s32.totalorder %s33, 1
    %p182 = por %p180, %p181
    %p184 = scmp.ne.s32.totalorder %s169, %s183
    %p185 = scmp.eq.s32.totalorder %s33, 0
    %p186 = por %p184, %p185
    %s188 = sadd.s32 %s187, 1
    %p191 = scmp.eq.s32.totalorder %s27, 1
    %p192 = scmp.ne.s32.totalorder %s187, %s189
    %p193 = scmp.eq.s32.totalorder %s27, 0
    %p194 = por %p192, %p193
    %p195 = scmp.ne.s32.totalorder %s187, %s189
    %p196 = scmp.eq.s32.totalorder %s32, 1
    %p197 = por %p195, %p196
    %p198 = scmp.ne.s32.totalorder %s189, %s190
    %p199 = scmp.eq.s32.totalorder %s32, 0
    %p200 = por %p198, %p199
    %p201 = scmp.ne.s32.totalorder %s189, %s190
    %p202 = scmp.eq.s32.totalorder %s33, 1
    %p203 = por %p201, %p202
    %p205 = scmp.ne.s32.totalorder %s190, %s204
    %p206 = scmp.eq.s32.totalorder %s33, 0
    %p207 = por %p205, %p206
    %s209 = sadd.s32 %s208, 1
    %p212 = scmp.eq.s32.totalorder %s27, 1
    %p213 = scmp.ne.s32.totalorder %s208, %s210
    %p214 = scmp.eq.s32.totalorder %s27, 0
    %p215 = por %p213, %p214
    %p216 = scmp.ne.s32.totalorder %s208, %s210
    %p217 = scmp.eq.s32.totalorder %s32, 1
    %p218 = por %p216, %p217
    %p219 = scmp.ne.s32.totalorder %s210, %s211
    %p220 = scmp.eq.s32.totalorder %s32, 0
    %p221 = por %p219, %p220
    %p222 = scmp.ne.s32.totalorder %s210, %s211
    %p223 = scmp.eq.s32.totalorder %s33, 1
    %p224 = por %p222, %p223
    %p226 = scmp.ne.s32.totalorder %s211, %s225
    %p227 = scmp.eq.s32.totalorder %s33, 0
    %p228 = por %p226, %p227
    %s230 = sadd.s32 %s229, 1
    %p233 = scmp.eq.s32.totalorder %s27, 1
    %p234 = scmp.ne.s32.totalorder %s229, %s231
    %p235 = scmp.eq.s32.totalorder %s27, 0
    %p236 = por %p234, %p235
    %p237 = scmp.ne.s32.totalorder %s229, %s231
    %p238 = scmp.eq.s32.totalorder %s32, 1
    %p239 = por %p237, %p238
    %p240 = scmp.ne.s32.totalorder %s231, %s232
    %p241 = scmp.eq.s32.totalorder %s32, 0
    %p242 = por %p240, %p241
    %p243 = scmp.ne.s32.totalorder %s231, %s232
    %p244 = scmp.eq.s32.totalorder %s33, 1
    %p245 = por %p243, %p244
    %p247 = scmp.ne.s32.totalorder %s232, %s246
    %p248 = scmp.eq.s32.totalorder %s33, 0
    %p249 = por %p247, %p248
    %s251 = sadd.s32 %s250, 1
    %p254 = scmp.eq.s32.totalorder %s27, 1
    %p255 = scmp.ne.s32.totalorder %s250, %s252
    %p256 = scmp.eq.s32.totalorder %s27, 0
    %p257 = por %p255, %p256
    %p258 = scmp.ne.s32.totalorder %s250, %s252
    %p259 = scmp.eq.s32.totalorder %s32, 1
    %p260 = por %p258, %p259
    %p261 = scmp.ne.s32.totalorder %s252, %s253
    %p262 = scmp.eq.s32.totalorder %s32, 0
    %p263 = por %p261, %p262
    %p264 = scmp.ne.s32.totalorder %s252, %s253
    %p265 = scmp.eq.s32.totalorder %s33, 1
    %p266 = por %p264, %p265
    %p268 = scmp.ne.s32.totalorder %s253, %s267
    %p269 = scmp.eq.s32.totalorder %s33, 0
    %p270 = por %p268, %p269
    %s272 = sadd.s32 %s271, 1
    %p275 = scmp.eq.s32.totalorder %s27, 1
    %p276 = scmp.ne.s32.totalorder %s271, %s273
    %p277 = scmp.eq.s32.totalorder %s27, 0
    %p278 = por %p276, %p277
    %p279 = scmp.ne.s32.totalorder %s271, %s273
    %p280 = scmp.eq.s32.totalorder %s32, 1
    %p281 = por %p279, %p280
    %p282 = scmp.ne.s32.totalorder %s273, %s274
    %p283 = scmp.eq.s32.totalorder %s32, 0
    %p284 = por %p282, %p283
    %p285 = scmp.ne.s32.totalorder %s273, %s274
    %p286 = scmp.eq.s32.totalorder %s33, 1
    %p287 = por %p285, %p286
    %p289 = scmp.ne.s32.totalorder %s274, %s288
    %p290 = scmp.eq.s32.totalorder %s33, 0
    %p291 = por %p289, %p290
    %s293 = sadd.s32 %s292, 1
    %p296 = scmp.eq.s32.totalorder %s27, 1
    %p297 = scmp.ne.s32.totalorder %s292, %s294
    %p298 = scmp.eq.s32.totalorder %s27, 0
    %p299 = por %p297, %p298
    %p300 = scmp.ne.s32.totalorder %s292, %s294
    %p301 = scmp.eq.s32.totalorder %s32, 1
    %p302 = por %p300, %p301
    %p303 = scmp.ne.s32.totalorder %s294, %s295
    %p304 = scmp.eq.s32.totalorder %s32, 0
    %p305 = por %p303, %p304
    %p306 = scmp.ne.s32.totalorder %s294, %s295
    %p307 = scmp.eq.s32.totalorder %s33, 1
    %p308 = por %p306, %p307
    %p310 = scmp.ne.s32.totalorder %s295, %s309
    %p311 = scmp.eq.s32.totalorder %s33, 0
    %p312 = por %p310, %p311
    %s314 = sadd.s32 %s313, 1
    %p317 = scmp.eq.s32.totalorder %s27, 1
    %p318 = scmp.ne.s32.totalorder %s313, %s315
    %p319 = scmp.eq.s32.totalorder %s27, 0
    %p320 = por %p318, %p319
    %p321 = scmp.ne.s32.totalorder %s313, %s315
    %p322 = scmp.eq.s32.totalorder %s32, 1
    %p323 = por %p321, %p322
    %p324 = scmp.ne.s32.totalorder %s315, %s316
    %p325 = scmp.eq.s32.totalorder %s32, 0
    %p326 = por %p324, %p325
    %p327 = scmp.ne.s32.totalorder %s315, %s316
    %p328 = scmp.eq.s32.totalorder %s33, 1
    %p329 = por %p327, %p328
    %p331 = scmp.ne.s32.totalorder %s316, %s330
    %p332 = scmp.eq.s32.totalorder %s33, 0
    %p333 = por %p331, %p332
    %s335 = sadd.s32 %s334, 1
    %p338 = scmp.eq.s32.totalorder %s27, 1
    %p339 = scmp.ne.s32.totalorder %s334, %s336
    %p340 = scmp.eq.s32.totalorder %s27, 0
    %p341 = por %p339, %p340
    %p342 = scmp.ne.s32.totalorder %s334, %s336
    %p343 = scmp.eq.s32.totalorder %s32, 1
    %p344 = por %p342, %p343
    %p345 = scmp.ne.s32.totalorder %s336, %s337
    %p346 = scmp.eq.s32.totalorder %s32, 0
    %p347 = por %p345, %p346
    %p348 = scmp.ne.s32.totalorder %s336, %s337
    %p349 = scmp.eq.s32.totalorder %s33, 1
    %p350 = por %p348, %p349
    %p352 = scmp.ne.s32.totalorder %s337, %s351
    %p353 = scmp.eq.s32.totalorder %s33, 0
    %p354 = por %p352, %p353
    %s356 = sadd.s32 %s355, 1
    %p359 = scmp.eq.s32.totalorder %s27, 1
    %p360 = scmp.ne.s32.totalorder %s355, %s357
    %p361 = scmp.eq.s32.totalorder %s27, 0
    %p362 = por %p360, %p361
    %p363 = scmp.ne.s32.totalorder %s355, %s357
    %p364 = scmp.eq.s32.totalorder %s32, 1
    %p365 = por %p363, %p364
    %p366 = scmp.ne.s32.totalorder %s357, %s358
    %p367 = scmp.eq.s32.totalorder %s32, 0
    %p368 = por %p366, %p367
    %p369 = scmp.ne.s32.totalorder %s357, %s358
    %p370 = scmp.eq.s32.totalorder %s33, 1
    %p371 = por %p369, %p370
    %p373 = scmp.ne.s32.totalorder %s358, %s372
    %p374 = scmp.eq.s32.totalorder %s33, 0
    %p375 = por %p373, %p374
    %s377 = sadd.s32 %s376, 1
    %p380 = scmp.eq.s32.totalorder %s27, 1
    %p381 = scmp.ne.s32.totalorder %s376, %s378
    %p382 = scmp.eq.s32.totalorder %s27, 0
    %p383 = por %p381, %p382
    %p384 = scmp.ne.s32.totalorder %s376, %s378
    %p385 = scmp.eq.s32.totalorder %s32, 1
    %p386 = por %p384, %p385
    %p387 = scmp.ne.s32.totalorder %s378, %s379
    %p388 = scmp.eq.s32.totalorder %s32, 0
    %p389 = por %p387, %p388
    %p390 = scmp.ne.s32.totalorder %s378, %s379
    %p391 = scmp.eq.s32.totalorder %s33, 1
    %p392 = por %p390, %p391
    %p394 = scmp.ne.s32.totalorder %s379, %s393
    %p395 = scmp.eq.s32.totalorder %s33, 0
    %p396 = por %p394, %p395
    %s398 = sadd.s32 %s397, 1
    %p401 = scmp.eq.s32.totalorder %s27, 1
    %p402 = scmp.ne.s32.totalorder %s397, %s399
    %p403 = scmp.eq.s32.totalorder %s27, 0
    %p404 = por %p402, %p403
    %p405 = scmp.ne.s32.totalorder %s397, %s399
    %p406 = scmp.eq.s32.totalorder %s32, 1
    %p407 = por %p405, %p406
    %p408 = scmp.ne.s32.totalorder %s399, %s400
    %p409 = scmp.eq.s32.totalorder %s32, 0
    %p410 = por %p408, %p409
    %p411 = scmp.ne.s32.totalorder %s399, %s400
    %p412 = scmp.eq.s32.totalorder %s33, 1
    %p413 = por %p411, %p412
    %p415 = scmp.ne.s32.totalorder %s400, %s414
    %p416 = scmp.eq.s32.totalorder %s33, 0
    %p417 = por %p415, %p416
    %s419 = sadd.s32 %s418, 1
    %p422 = scmp.eq.s32.totalorder %s27, 1
    %p423 = scmp.ne.s32.totalorder %s418, %s420
    %p424 = scmp.eq.s32.totalorder %s27, 0
    %p425 = por %p423, %p424
    %p426 = scmp.ne.s32.totalorder %s418, %s420
    %p427 = scmp.eq.s32.totalorder %s32, 1
    %p428 = por %p426, %p427
    %p429 = scmp.ne.s32.totalorder %s420, %s421
    %p430 = scmp.eq.s32.totalorder %s32, 0
    %p431 = por %p429, %p430
    %p432 = scmp.ne.s32.totalorder %s420, %s421
    %p433 = scmp.eq.s32.totalorder %s33, 1
    %p434 = por %p432, %p433
    %p436 = scmp.ne.s32.totalorder %s421, %s435
    %p437 = scmp.eq.s32.totalorder %s33, 0
    %p438 = por %p436, %p437
    %s440 = sadd.s32 %s439, 1
    %p443 = scmp.eq.s32.totalorder %s27, 1
    %p444 = scmp.ne.s32.totalorder %s439, %s441
    %p445 = scmp.eq.s32.totalorder %s27, 0
    %p446 = por %p444, %p445
    %p447 = scmp.ne.s32.totalorder %s439, %s441
    %p448 = scmp.eq.s32.totalorder %s32, 1
    %p449 = por %p447, %p448
    %p450 = scmp.ne.s32.totalorder %s441, %s442
    %p451 = scmp.eq.s32.totalorder %s32, 0
    %p452 = por %p450, %p451
    %p453 = scmp.ne.s32.totalorder %s441, %s442
    %p454 = scmp.eq.s32.totalorder %s33, 1
    %p455 = por %p453, %p454
    %p457 = scmp.ne.s32.totalorder %s442, %s456
    %p458 = scmp.eq.s32.totalorder %s33, 0
    %p459 = por %p457, %p458
    %s461 = sadd.s32 %s460, 1
    %p464 = scmp.eq.s32.totalorder %s27, 1
    %p465 = scmp.ne.s32.totalorder %s460, %s462
    %p466 = scmp.eq.s32.totalorder %s27, 0
    %p467 = por %p465, %p466
    %p468 = scmp.ne.s32.totalorder %s460, %s462
    %p469 = scmp.eq.s32.totalorder %s32, 1
    %p470 = por %p468, %p469
    %p471 = scmp.ne.s32.totalorder %s462, %s463
    %p472 = scmp.eq.s32.totalorder %s32, 0
    %p473 = por %p471, %p472
    %p474 = scmp.ne.s32.totalorder %s462, %s463
    %p475 = scmp.eq.s32.totalorder %s33, 1
    %p476 = por %p474, %p475
    %p478 = scmp.ne.s32.totalorder %s463, %s477
    %p479 = scmp.eq.s32.totalorder %s33, 0
    %p480 = por %p478, %p479
    %s481 = ssub.s32 %s27, %s34
    %p482 = scmp.eq.s32.totalorder %s481, 0
    %s484 = sadd.s32 %s483, 1
    %s485 = scalar_select %p482, %s483, %s484
    %p488 = pneg %p482
    %p489 = scmp.eq.s32.totalorder %s27, 1
    %p490 = por %p488, %p489
    %p491 = scmp.ne.s32.totalorder %s483, %s486
    %p492 = scmp.eq.s32.totalorder %s27, 0
    %p493 = por %p491, %p492
    %p494 = scmp.ne.s32.totalorder %s483, %s486
    %p495 = scmp.eq.s32.totalorder %s32, 1
    %p496 = por %p494, %p495
    %p497 = scmp.ne.s32.totalorder %s486, %s487
    %p498 = scmp.eq.s32.totalorder %s32, 0
    %p499 = por %p497, %p498
    %p500 = scmp.ne.s32.totalorder %s486, %s487
    %p501 = scmp.eq.s32.totalorder %s33, 1
    %p502 = por %p500, %p501
    %p504 = scmp.ne.s32.totalorder %s487, %s503
    %p505 = scmp.eq.s32.totalorder %s33, 0
    %p506 = por %p504, %p505
    %p507 = scmp.le.s32.totalorder 1, %s27
    %p508 = scmp.lt.s32.totalorder %s27, 3
    %p509 = pnand %p507, %p508
    %p510 = pneg %p509
    // Predicated region
    $region9: #{tpu_custom_call.1} parent=5 // pred_check
      _
    $region10: #{tpu_custom_call.1} parent=5 // pred_check_branch
      %512 = sbr.rel (%p509) target = $region12
    $region11: #{tpu_custom_call.1} parent=5 // pred_region
      %s513 = ssub.s32 %s27, 1
      // Predicated region
      $region13: #{tpu_custom_call.1} parent=11 // pred_check
        %p514 = pneg %p74
      $region14: #{tpu_custom_call.1} parent=11 // pred_check_branch
        %516 = sbr.rel (%p514) target = $region16
      $region15: #{tpu_custom_call.1} parent=11 // pred_region
        _
      $region16: #{tpu_custom_call.1} parent=11 // pred_fallthru
        _
      // Predicated region
      $region17: #{tpu_custom_call.1} parent=11 // pred_check
        %p517 = pneg %p95
      $region18: #{tpu_custom_call.1} parent=11 // pred_check_branch
        %519 = sbr.rel (%p517) target = $region20
      $region19: #{tpu_custom_call.1} parent=11 // pred_region
        _
      $region20: #{tpu_custom_call.1} parent=11 // pred_fallthru
        _
      // Predicated region
      $region21: #{tpu_custom_call.1} parent=11 // pred_check
        %p520 = pneg %p116
      $region22: #{tpu_custom_call.1} parent=11 // pred_check_branch
        %522 = sbr.rel (%p520) target = $region24
      $region23: #{tpu_custom_call.1} parent=11 // pred_region
        _
      $region24: #{tpu_custom_call.1} parent=11 // pred_fallthru
        _
      // Predicated region
      $region25: #{tpu_custom_call.1} parent=11 // pred_check
        %p523 = pneg %p137
      $region26: #{tpu_custom_call.1} parent=11 // pred_check_branch
        %525 = sbr.rel (%p523) target = $region28
      $region27: #{tpu_custom_call.1} parent=11 // pred_region
        _
      $region28: #{tpu_custom_call.1} parent=11 // pred_fallthru
        _
      // Predicated region
      $region29: #{tpu_custom_call.1} parent=11 // pred_check
        %p526 = pneg %p158
      $region30: #{tpu_custom_call.1} parent=11 // pred_check_branch
        %528 = sbr.rel (%p526) target = $region32
      $region31: #{tpu_custom_call.1} parent=11 // pred_region
        _
      $region32: #{tpu_custom_call.1} parent=11 // pred_fallthru
        _
      // Predicated region
      $region33: #{tpu_custom_call.1} parent=11 // pred_check
        %p529 = pneg %p179
      $region34: #{tpu_custom_call.1} parent=11 // pred_check_branch
        %531 = sbr.rel (%p529) target = $region36
      $region35: #{tpu_custom_call.1} parent=11 // pred_region
        _
      $region36: #{tpu_custom_call.1} parent=11 // pred_fallthru
        _
      // Predicated region
      $region37: #{tpu_custom_call.1} parent=11 // pred_check
        %p532 = pneg %p200
      $region38: #{tpu_custom_call.1} parent=11 // pred_check_branch
        %534 = sbr.rel (%p532) target = $region40
      $region39: #{tpu_custom_call.1} parent=11 // pred_region
        _
      $region40: #{tpu_custom_call.1} parent=11 // pred_fallthru
        _
      // Predicated region
      $region41: #{tpu_custom_call.1} parent=11 // pred_check
        %p535 = pneg %p221
      $region42: #{tpu_custom_call.1} parent=11 // pred_check_branch
        %537 = sbr.rel (%p535) target = $region44
      $region43: #{tpu_custom_call.1} parent=11 // pred_region
        _
      $region44: #{tpu_custom_call.1} parent=11 // pred_fallthru
        _
      // Predicated region
      $region45: #{tpu_custom_call.1} parent=11 // pred_check
        %p538 = pneg %p242
      $region46: #{tpu_custom_call.1} parent=11 // pred_check_branch
        %540 = sbr.rel (%p538) target = $region48
      $region47: #{tpu_custom_call.1} parent=11 // pred_region
        _
      $region48: #{tpu_custom_call.1} parent=11 // pred_fallthru
        _
      // Predicated region
      $region49: #{tpu_custom_call.1} parent=11 // pred_check
        %p541 = pneg %p263
      $region50: #{tpu_custom_call.1} parent=11 // pred_check_branch
        %543 = sbr.rel (%p541) target = $region52
      $region51: #{tpu_custom_call.1} parent=11 // pred_region
        _
      $region52: #{tpu_custom_call.1} parent=11 // pred_fallthru
        _
      // Predicated region
      $region53: #{tpu_custom_call.1} parent=11 // pred_check
        %p544 = pneg %p284
      $region54: #{tpu_custom_call.1} parent=11 // pred_check_branch
        %546 = sbr.rel (%p544) target = $region56
      $region55: #{tpu_custom_call.1} parent=11 // pred_region
        _
      $region56: #{tpu_custom_call.1} parent=11 // pred_fallthru
        _
      // Predicated region
      $region57: #{tpu_custom_call.1} parent=11 // pred_check
        %p547 = pneg %p305
      $region58: #{tpu_custom_call.1} parent=11 // pred_check_branch
        %549 = sbr.rel (%p547) target = $region60
      $region59: #{tpu_custom_call.1} parent=11 // pred_region
        _
      $region60: #{tpu_custom_call.1} parent=11 // pred_fallthru
        _
      // Predicated region
      $region61: #{tpu_custom_call.1} parent=11 // pred_check
        %p550 = pneg %p326
      $region62: #{tpu_custom_call.1} parent=11 // pred_check_branch
        %552 = sbr.rel (%p550) target = $region64
      $region63: #{tpu_custom_call.1} parent=11 // pred_region
        _
      $region64: #{tpu_custom_call.1} parent=11 // pred_fallthru
        _
      // Predicated region
      $region65: #{tpu_custom_call.1} parent=11 // pred_check
        %p553 = pneg %p347
      $region66: #{tpu_custom_call.1} parent=11 // pred_check_branch
        %555 = sbr.rel (%p553) target = $region68
      $region67: #{tpu_custom_call.1} parent=11 // pred_region
        _
      $region68: #{tpu_custom_call.1} parent=11 // pred_fallthru
        _
      // Predicated region
      $region69: #{tpu_custom_call.1} parent=11 // pred_check
        %p556 = pneg %p368
      $region70: #{tpu_custom_call.1} parent=11 // pred_check_branch
        %558 = sbr.rel (%p556) target = $region72
      $region71: #{tpu_custom_call.1} parent=11 // pred_region
        _
      $region72: #{tpu_custom_call.1} parent=11 // pred_fallthru
        _
      // Predicated region
      $region73: #{tpu_custom_call.1} parent=11 // pred_check
        %p559 = pneg %p389
      $region74: #{tpu_custom_call.1} parent=11 // pred_check_branch
        %561 = sbr.rel (%p559) target = $region76
      $region75: #{tpu_custom_call.1} parent=11 // pred_region
        _
      $region76: #{tpu_custom_call.1} parent=11 // pred_fallthru
        _
      // Predicated region
      $region77: #{tpu_custom_call.1} parent=11 // pred_check
        %p562 = pneg %p410
      $region78: #{tpu_custom_call.1} parent=11 // pred_check_branch
        %564 = sbr.rel (%p562) target = $region80
      $region79: #{tpu_custom_call.1} parent=11 // pred_region
        _
      $region80: #{tpu_custom_call.1} parent=11 // pred_fallthru
        _
      // Predicated region
      $region81: #{tpu_custom_call.1} parent=11 // pred_check
        %p565 = pneg %p431
      $region82: #{tpu_custom_call.1} parent=11 // pred_check_branch
        %567 = sbr.rel (%p565) target = $region84
      $region83: #{tpu_custom_call.1} parent=11 // pred_region
        _
      $region84: #{tpu_custom_call.1} parent=11 // pred_fallthru
        _
      // Predicated region
      $region85: #{tpu_custom_call.1} parent=11 // pred_check
        %p568 = pneg %p452
      $region86: #{tpu_custom_call.1} parent=11 // pred_check_branch
        %570 = sbr.rel (%p568) target = $region88
      $region87: #{tpu_custom_call.1} parent=11 // pred_region
        _
      $region88: #{tpu_custom_call.1} parent=11 // pred_fallthru
        _
      // Predicated region
      $region89: #{tpu_custom_call.1} parent=11 // pred_check
        %p571 = pneg %p473
      $region90: #{tpu_custom_call.1} parent=11 // pred_check_branch
        %573 = sbr.rel (%p571) target = $region92
      $region91: #{tpu_custom_call.1} parent=11 // pred_region
        _
      $region92: #{tpu_custom_call.1} parent=11 // pred_fallthru
        _
    $region12: #{tpu_custom_call.1} parent=5 // pred_fallthru
      _
    %p574 = scmp.lt.s32.totalorder %s27, 2
    // Predicated region
    $region93: #{tpu_custom_call.1} parent=5 // pred_check
      %p575 = pneg %p574
    $region94: #{tpu_custom_call.1} parent=5 // pred_check_branch
      %577 = sbr.rel (%p575) target = $region96
    $region95: #{tpu_custom_call.1} parent=5 // pred_region
      // Predicated region
      $region97: #{tpu_custom_call.1} parent=95 // pred_check
        %p578 = pneg %p47
      $region98: #{tpu_custom_call.1} parent=95 // pred_check_branch
        %580 = sbr.rel (%p578) target = $region100
      $region99: #{tpu_custom_call.1} parent=95 // pred_region
        %p581 = scmp.lt.s32.totalorder %s27, 1
        %s582 = scalar_select %p581, %s27, 1
        %s583 = smul.addr %s582, 6
        %s584 = smul.addr %s583, 4
        %s585 = scalar_lea.vmem %s0, %s584
      $region100: #{tpu_custom_call.1} parent=95 // pred_fallthru
        _
    $region96: #{tpu_custom_call.1} parent=5 // pred_fallthru
      _
    %p586 = scmp.le.s32.totalorder 1, %s27
    %p587 = scmp.lt.s32.totalorder %s27, 3
    %p588 = pnand %p586, %p587
    %p589 = pneg %p588
    // Predicated region
    $region101: #{tpu_custom_call.1} parent=5 // pred_check
      _
    $region102: #{tpu_custom_call.1} parent=5 // pred_check_branch
      %591 = sbr.rel (%p588) target = $region104
    $region103: #{tpu_custom_call.1} parent=5 // pred_region
      %s592 = ssub.s32 %s27, 1
      %p593 = scmp.lt.s32.totalorder %s32, 1
      %s594 = scalar_select %p593, %s32, 1
      %s595 = smul.addr %s594, 6
      %s596 = smul.addr %s595, 4
      %s597 = scalar_lea.vmem %s0, %s596
      %p598 = pneg %p53
      %p599 = pneg %p50
      %p600 = pneg %p74
      %p601 = pneg %p71
      %p602 = pneg %p95
      %p603 = pneg %p92
      %p604 = pneg %p116
      %p605 = pneg %p113
      %p606 = pneg %p137
      %p607 = pneg %p134
      %p608 = pneg %p158
      %p609 = pneg %p155
      %p610 = pneg %p179
      %p611 = pneg %p176
      %p612 = pneg %p200
      %p613 = pneg %p197
      %p614 = pneg %p221
      %p615 = pneg %p218
      %p616 = pneg %p242
      %p617 = pneg %p239
      %p618 = pneg %p263
      %p619 = pneg %p260
      %p620 = pneg %p284
      %p621 = pneg %p281
      %p622 = pneg %p305
      %p623 = pneg %p302
      %p624 = pneg %p326
      %p625 = pneg %p323
      %p626 = pneg %p347
      %p627 = pneg %p344
      %p628 = pneg %p368
      %p629 = pneg %p365
      %p630 = pneg %p389
      %p631 = pneg %p386
      %p632 = pneg %p410
      %p633 = pneg %p407
      %p634 = pneg %p431
      %p635 = pneg %p428
      %p636 = pneg %p452
      %p637 = pneg %p449
      %p638 = pneg %p473
      %p639 = pneg %p470
      %p640 = pneg %p499
      %p641 = pneg %p496
      %p642 = scmp.lt.s32.totalorder %s32, 1
      %s643 = scalar_select %p642, %s32, 1
      %s644 = smul.addr %s643, 2
      %s645 = smul.addr %s644, 8
      %s646 = scalar_lea.vmem %s21, %s645
      %p647 = scmp.lt.s32.totalorder %s32, 1
      %s648 = scalar_select %p647, %s32, 1
      %s649 = smul.addr %s648, 6
      %s650 = smul.addr %s649, 4
      %s651 = scalar_lea.vmem %s0, %s650
      %p652 = scmp.lt.s32.totalorder %s32, 1
      %s653 = scalar_select %p652, %s32, 1
      %s654 = smul.addr %s653, 2
      %s655 = smul.addr %s654, 8
      %s656 = scalar_lea.vmem %s21, %s655
      %v658 = vld [vmem:[%s651] sm:$0xff]
      %v659 = vld [vmem:[%s651 + $0x8] sm:$0xff]
      %v660 = vld [vmem:[%s651 + $0x10] sm:$0xff]
      %v661 = vld [vmem:[%s1] sm:$0xf]
      %v662 = vld [vmem:[%s1 + $0x4] sm:$0xf]
      %v663 = vld [vmem:[%s1 + $0x8] sm:$0xf]
      %v664 = vld [vmem:[%s1 + $0xc] sm:$0xf]
      %v665 = vld [vmem:[%s1 + $0x10] sm:$0xf]
      %v666 = vld [vmem:[%s1 + $0x14] sm:$0xf]
      %v667 = vld [vmem:[%s1 + $0x18] sm:$0xf]
      %v668 = vld [vmem:[%s1 + $0x1c] sm:$0xf]
      %v669 = vld [vmem:[%s1 + $0x20] sm:$0xf]
      %v670 = vld [vmem:[%s1 + $0x24] sm:$0xf]
      %v671 = vld [vmem:[%s1 + $0x28] sm:$0xf]
      %v672 = vld [vmem:[%s1 + $0x2c] sm:$0xf]
      %v673 = vld [vmem:[%s1 + $0x30] sm:$0xf]
      %v674 = vld [vmem:[%s1 + $0x34] sm:$0xf]
      %v675 = vld [vmem:[%s1 + $0x38] sm:$0xf]
      %v676 = vld [vmem:[%s1 + $0x3c] sm:$0xf]
      %v677 = vld [vmem:[%s1 + $0x40] sm:$0xf]
      %v678 = vld [vmem:[%s1 + $0x44] sm:$0xf]
      %v679 = vld [vmem:[%s1 + $0x48] sm:$0xf]
      %v680 = vld [vmem:[%s1 + $0x4c] sm:$0xf]
      %v681 = vld [vmem:[%s1 + $0x50] sm:$0xf]
      %v682 = vld [vmem:[%s1 + $0x54] sm:$0xf]
      %v683 = vld [vmem:[%s1 + $0x58] sm:$0xf]
      %v684 = vld [vmem:[%s1 + $0x5c] sm:$0xf]
      %v685 = vld [vmem:[%s1 + $0x60] sm:$0xf]
      %v686 = vld [vmem:[%s1 + $0x64] sm:$0xf]
      %v687 = vld [vmem:[%s1 + $0x68] sm:$0xf]
      %v688 = vld [vmem:[%s1 + $0x6c] sm:$0xf]
      %v689 = vld [vmem:[%s1 + $0x70] sm:$0xf]
      %v690 = vld [vmem:[%s1 + $0x74] sm:$0xf]
      %v691 = vld [vmem:[%s1 + $0x78] sm:$0xf]
      %v692 = vld [vmem:[%s1 + $0x7c] sm:$0xf]
      %v693 = vld [vmem:[%s1 + $0x80] sm:$0xf]
      %v694 = vld [vmem:[%s1 + $0x84] sm:$0xf]
      %v695 = vld [vmem:[%s1 + $0x88] sm:$0xf]
      %v696 = vld [vmem:[%s1 + $0x8c] sm:$0xf]
      %v697 = vld [vmem:[%s1 + $0x90] sm:$0xf]
      %v698 = vld [vmem:[%s1 + $0x94] sm:$0xf]
      %v699 = vld [vmem:[%s1 + $0x98] sm:$0xf]
      %v700 = vld [vmem:[%s1 + $0x9c] sm:$0xf]
      %v701 = vld [vmem:[%s1 + $0xa0] sm:$0xf]
      %v702 = vld [vmem:[%s1 + $0xa4] sm:$0xf]
      %v703 = vld [vmem:[%s1 + $0xa8] sm:$0xf]
      %v704 = vld [vmem:[%s1 + $0xac] sm:$0xf]
      %v705 = vld [vmem:[%s1 + $0xb0] sm:$0xf]
      %v706 = vld [vmem:[%s1 + $0xb4] sm:$0xf]
      %v707 = vld [vmem:[%s1 + $0xb8] sm:$0xf]
      %v708 = vld [vmem:[%s1 + $0xbc] sm:$0xf]
      %v709 = vld [vmem:[%s1 + $0xc0] sm:$0xf]
      %v710 = vld [vmem:[%s1 + $0xc4] sm:$0xf]
      %v711 = vld [vmem:[%s1 + $0xc8] sm:$0xf]
      %v712 = vld [vmem:[%s1 + $0xcc] sm:$0xf]
      %v713 = vld [vmem:[%s1 + $0xd0] sm:$0xf]
      %v714 = vld [vmem:[%s1 + $0xd4] sm:$0xf]
      %v715 = vld [vmem:[%s1 + $0xd8] sm:$0xf]
      %v716 = vld [vmem:[%s1 + $0xdc] sm:$0xf]
      %v717 = vld [vmem:[%s1 + $0xe0] sm:$0xf]
      %v718 = vld [vmem:[%s1 + $0xe4] sm:$0xf]
      %v719 = vld [vmem:[%s1 + $0xe8] sm:$0xf]
      %v720 = vld [vmem:[%s1 + $0xec] sm:$0xf]
      %v721 = vld [vmem:[%s1 + $0xf0] sm:$0xf]
      %v722 = vld [vmem:[%s1 + $0xf4] sm:$0xf]
      %v723 = vld [vmem:[%s1 + $0xf8] sm:$0xf]
      %v724 = vld [vmem:[%s1 + $0xfc] sm:$0xf]
      %v725 = vld [vmem:[%s1 + $0x100] sm:$0xf]
      %v726 = vld [vmem:[%s1 + $0x104] sm:$0xf]
      %v727 = vld [vmem:[%s1 + $0x108] sm:$0xf]
      %v728 = vld [vmem:[%s1 + $0x10c] sm:$0xf]
      %v729 = vld [vmem:[%s1 + $0x110] sm:$0xf]
      %v730 = vld [vmem:[%s1 + $0x114] sm:$0xf]
      %v731 = vld [vmem:[%s1 + $0x118] sm:$0xf]
      %v732 = vld [vmem:[%s1 + $0x11c] sm:$0xf]
      %v733 = vld [vmem:[%s1 + $0x120] sm:$0xf]
      %v734 = vld [vmem:[%s1 + $0x124] sm:$0xf]
      %v735 = vld [vmem:[%s1 + $0x128] sm:$0xf]
      %v736 = vld [vmem:[%s1 + $0x12c] sm:$0xf]
      %v737 = vld [vmem:[%s1 + $0x130] sm:$0xf]
      %v738 = vld [vmem:[%s1 + $0x134] sm:$0xf]
      %v739 = vld [vmem:[%s1 + $0x138] sm:$0xf]
      %v740 = vld [vmem:[%s1 + $0x13c] sm:$0xf]
      %v741 = vld [vmem:[%s1 + $0x140] sm:$0xf]
      %v742 = vld [vmem:[%s1 + $0x144] sm:$0xf]
      %v743 = vld [vmem:[%s1 + $0x148] sm:$0xf]
      %v744 = vld [vmem:[%s1 + $0x14c] sm:$0xf]
      %v745 = vld [vmem:[%s1 + $0x150] sm:$0xf]
      %v746 = vld [vmem:[%s1 + $0x154] sm:$0xf]
      %v747 = vld [vmem:[%s1 + $0x158] sm:$0xf]
      %v748 = vld [vmem:[%s1 + $0x15c] sm:$0xf]
      %v749 = vld [vmem:[%s1 + $0x160] sm:$0xf]
      %v750 = vld [vmem:[%s1 + $0x164] sm:$0xf]
      %v751 = vld [vmem:[%s1 + $0x168] sm:$0xf]
      %v752 = vld [vmem:[%s1 + $0x16c] sm:$0xf]
      %v753 = vld [vmem:[%s1 + $0x170] sm:$0xf]
      %v754 = vld [vmem:[%s1 + $0x174] sm:$0xf]
      %v755 = vld [vmem:[%s1 + $0x178] sm:$0xf]
      %v756 = vld [vmem:[%s1 + $0x17c] sm:$0xf]
      %v760 = vunpack.c.l.b16 %v658
      %v761 = vunpack.c.h.b16 %v658
      %v762 = vunpack.c.l.b16 %v659
      %v763 = vunpack.c.h.b16 %v659
      %v764 = vunpack.c.l.b16 %v660
      %v765 = vunpack.c.h.b16 %v660
      %v766 = vpack.c.b16 %v760, %v760
      %v767 = vpack.c.b16 %v761, %v761
      %v768 = vpack.c.b16 %v762, %v762
      %v769 = vpack.c.b16 %v763, %v763
      %v770 = vpack.c.b16 %v764, %v764
      %v771 = vpack.c.b16 %v765, %v765
      %v874 = vunpack.c.l.b16 %v661
      %v875 = vunpack.c.l.b16 %v662
      %v876 = vunpack.c.l.b16 %v663
      %v877 = vunpack.c.l.b16 %v664
      %v878 = vunpack.c.l.b16 %v665
      %v879 = vunpack.c.l.b16 %v666
      %v880 = vunpack.c.l.b16 %v667
      %v881 = vunpack.c.l.b16 %v668
      %v882 = vunpack.c.l.b16 %v669
      %v883 = vunpack.c.l.b16 %v670
      %v884 = vunpack.c.l.b16 %v671
      %v885 = vunpack.c.l.b16 %v672
      %v886 = vunpack.c.l.b16 %v673
      %v887 = vunpack.c.l.b16 %v674
      %v888 = vunpack.c.l.b16 %v675
      %v889 = vunpack.c.l.b16 %v676
      %v890 = vunpack.c.l.b16 %v677
      %v891 = vunpack.c.l.b16 %v678
      %v892 = vunpack.c.l.b16 %v679
      %v893 = vunpack.c.l.b16 %v680
      %v894 = vunpack.c.l.b16 %v681
      %v895 = vunpack.c.l.b16 %v682
      %v896 = vunpack.c.l.b16 %v683
      %v897 = vunpack.c.l.b16 %v684
      %v898 = vunpack.c.l.b16 %v685
      %v899 = vunpack.c.l.b16 %v686
      %v900 = vunpack.c.l.b16 %v687
      %v901 = vunpack.c.l.b16 %v688
      %v902 = vunpack.c.l.b16 %v689
      %v903 = vunpack.c.l.b16 %v690
      %v904 = vunpack.c.l.b16 %v691
      %v905 = vunpack.c.l.b16 %v692
      %v906 = vunpack.c.l.b16 %v693
      %v907 = vunpack.c.l.b16 %v694
      %v908 = vunpack.c.l.b16 %v695
      %v909 = vunpack.c.l.b16 %v696
      %v910 = vunpack.c.l.b16 %v697
      %v911 = vunpack.c.l.b16 %v698
      %v912 = vunpack.c.l.b16 %v699
      %v913 = vunpack.c.l.b16 %v700
      %v914 = vunpack.c.l.b16 %v701
      %v915 = vunpack.c.l.b16 %v702
      %v916 = vunpack.c.l.b16 %v703
      %v917 = vunpack.c.l.b16 %v704
      %v918 = vunpack.c.l.b16 %v705
      %v919 = vunpack.c.l.b16 %v706
      %v920 = vunpack.c.l.b16 %v707
      %v921 = vunpack.c.l.b16 %v708
      %v922 = vunpack.c.l.b16 %v709
      %v923 = vunpack.c.l.b16 %v710
      %v924 = vunpack.c.l.b16 %v711
      %v925 = vunpack.c.l.b16 %v712
      %v926 = vunpack.c.l.b16 %v713
      %v927 = vunpack.c.l.b16 %v714
      %v928 = vunpack.c.l.b16 %v715
      %v929 = vunpack.c.l.b16 %v716
      %v930 = vunpack.c.l.b16 %v717
      %v931 = vunpack.c.l.b16 %v718
      %v932 = vunpack.c.l.b16 %v719
      %v933 = vunpack.c.l.b16 %v720
      %v934 = vunpack.c.l.b16 %v721
      %v935 = vunpack.c.l.b16 %v722
      %v936 = vunpack.c.l.b16 %v723
      %v937 = vunpack.c.l.b16 %v724
      %v938 = vunpack.c.l.b16 %v725
      %v939 = vunpack.c.l.b16 %v726
      %v940 = vunpack.c.l.b16 %v727
      %v941 = vunpack.c.l.b16 %v728
      %v942 = vunpack.c.l.b16 %v729
      %v943 = vunpack.c.l.b16 %v730
      %v944 = vunpack.c.l.b16 %v731
      %v945 = vunpack.c.l.b16 %v732
      %v946 = vunpack.c.l.b16 %v733
      %v947 = vunpack.c.l.b16 %v734
      %v948 = vunpack.c.l.b16 %v735
      %v949 = vunpack.c.l.b16 %v736
      %v950 = vunpack.c.l.b16 %v737
      %v951 = vunpack.c.l.b16 %v738
      %v952 = vunpack.c.l.b16 %v739
      %v953 = vunpack.c.l.b16 %v740
      %v954 = vunpack.c.l.b16 %v741
      %v955 = vunpack.c.l.b16 %v742
      %v956 = vunpack.c.l.b16 %v743
      %v957 = vunpack.c.l.b16 %v744
      %v958 = vunpack.c.l.b16 %v745
      %v959 = vunpack.c.l.b16 %v746
      %v960 = vunpack.c.l.b16 %v747
      %v961 = vunpack.c.l.b16 %v748
      %v962 = vunpack.c.l.b16 %v749
      %v963 = vunpack.c.l.b16 %v750
      %v964 = vunpack.c.l.b16 %v751
      %v965 = vunpack.c.l.b16 %v752
      %v966 = vunpack.c.l.b16 %v753
      %v967 = vunpack.c.l.b16 %v754
      %v968 = vunpack.c.l.b16 %v755
      %v969 = vunpack.c.l.b16 %v756
      %v970 = vpack.c.b16 %v875, %v874
      %v971 = vpack.c.b16 %v877, %v876
      %v972 = vpack.c.b16 %v879, %v878
      %v973 = vpack.c.b16 %v881, %v880
      %v974 = vpack.c.b16 %v883, %v882
      %v975 = vpack.c.b16 %v885, %v884
      %v976 = vpack.c.b16 %v887, %v886
      %v977 = vpack.c.b16 %v889, %v888
      %v978 = vpack.c.b16 %v891, %v890
      %v979 = vpack.c.b16 %v893, %v892
      %v980 = vpack.c.b16 %v895, %v894
      %v981 = vpack.c.b16 %v897, %v896
      %v982 = vpack.c.b16 %v899, %v898
      %v983 = vpack.c.b16 %v901, %v900
      %v984 = vpack.c.b16 %v903, %v902
      %v985 = vpack.c.b16 %v905, %v904
      %v986 = vpack.c.b16 %v907, %v906
      %v987 = vpack.c.b16 %v909, %v908
      %v988 = vpack.c.b16 %v911, %v910
      %v989 = vpack.c.b16 %v913, %v912
      %v990 = vpack.c.b16 %v915, %v914
      %v991 = vpack.c.b16 %v917, %v916
      %v992 = vpack.c.b16 %v919, %v918
      %v993 = vpack.c.b16 %v921, %v920
      %v994 = vpack.c.b16 %v923, %v922
      %v995 = vpack.c.b16 %v925, %v924
      %v996 = vpack.c.b16 %v927, %v926
      %v997 = vpack.c.b16 %v929, %v928
      %v998 = vpack.c.b16 %v931, %v930
      %v999 = vpack.c.b16 %v933, %v932
      %v1000 = vpack.c.b16 %v935, %v934
      %v1001 = vpack.c.b16 %v937, %v936
      %v1002 = vpack.c.b16 %v939, %v938
      %v1003 = vpack.c.b16 %v941, %v940
      %v1004 = vpack.c.b16 %v943, %v942
      %v1005 = vpack.c.b16 %v945, %v944
      %v1006 = vpack.c.b16 %v947, %v946
      %v1007 = vpack.c.b16 %v949, %v948
      %v1008 = vpack.c.b16 %v951, %v950
      %v1009 = vpack.c.b16 %v953, %v952
      %v1010 = vpack.c.b16 %v955, %v954
      %v1011 = vpack.c.b16 %v957, %v956
      %v1012 = vpack.c.b16 %v959, %v958
      %v1013 = vpack.c.b16 %v961, %v960
      %v1014 = vpack.c.b16 %v963, %v962
      %v1015 = vpack.c.b16 %v965, %v964
      %v1016 = vpack.c.b16 %v967, %v966
      %v1017 = vpack.c.b16 %v969, %v968
      %1066 = vmatprep.subr.bf16.mxu0 0
      %1067 = vmatpush1.bf16.msra.mxu0 %v970
      %1068 = vmatprep.subr.bf16.mxu0 0
      %1069 = vmatpush1.bf16.msra.mxu0 %v971
      %1070 = vmatprep.subr.bf16.mxu0 0
      %1071 = vmatpush1.bf16.msra.mxu0 %v972
      %1072 = vmatprep.subr.bf16.mxu0 0
      %1073 = vmatpush1.bf16.msra.mxu0 %v973
      %1074 = vmatprep.subr.bf16.mxu0 0
      %1075 = vmatpush1.bf16.msra.mxu0 %v974
      %1076 = vmatprep.subr.bf16.mxu0 0
      %1077 = vmatpush1.bf16.msra.mxu0 %v975
      %1078 = vmatprep.subr.bf16.mxu0 0
      %1079 = vmatpush1.bf16.msra.mxu0 %v976
      %1080 = vmatprep.subr.bf16.mxu0 0
      %1081 = vmatpush1.bf16.msra.mxu0 %v977
      %1082 = vmatprep.subr.bf16.mxu0 0
      %1083 = vmatpush1.bf16.msra.mxu0 %v978
      %1084 = vmatprep.subr.bf16.mxu0 0
      %1085 = vmatpush1.bf16.msra.mxu0 %v979
      %1086 = vmatprep.subr.bf16.mxu0 0
      %1087 = vmatpush1.bf16.msra.mxu0 %v980
      %1088 = vmatprep.subr.bf16.mxu0 0
      %1089 = vmatpush1.bf16.msra.mxu0 %v981
      %1090 = vmatprep.subr.bf16.mxu0 0
      %1091 = vmatpush1.bf16.msra.mxu0 %v982
      %1092 = vmatprep.subr.bf16.mxu0 0
      %1093 = vmatpush1.bf16.msra.mxu0 %v983
      %1094 = vmatprep.subr.bf16.mxu0 0
      %1095 = vmatpush1.bf16.msra.mxu0 %v984
      %1096 = vmatprep.subr.bf16.mxu0 0
      %1097 = vmatpush1.bf16.msra.mxu0 %v985
      %1098 = vmatprep.mubr.bf16.mxu0 %v767
      %1099 = vmatmul.mubr.bf16.gmra.mrb[0].mxu0 %v766
      %v1100 = vpop.f32.mrb[0].mxu0
      %v1101 = vadd.f32 0.0, %v1100
      %v1102 = vpop.f32.mrb[0].mxu0
      %v1103 = vpop.f32.mrb[0].mxu0
      %v1104 = vpop.f32.mrb[0].mxu0
      %1105 = vdwg.mxu0
      %1106 = vmatprep.subr.bf16.mxu0 0
      %1107 = vmatpush1.bf16.msra.mxu0 %v986
      %1108 = vmatprep.subr.bf16.mxu0 0
      %1109 = vmatpush1.bf16.msra.mxu0 %v987
      %1110 = vmatprep.subr.bf16.mxu0 0
      %1111 = vmatpush1.bf16.msra.mxu0 %v988
      %1112 = vmatprep.subr.bf16.mxu0 0
      %1113 = vmatpush1.bf16.msra.mxu0 %v989
      %1114 = vmatprep.subr.bf16.mxu0 0
      %1115 = vmatpush1.bf16.msra.mxu0 %v990
      %1116 = vmatprep.subr.bf16.mxu0 0
      %1117 = vmatpush1.bf16.msra.mxu0 %v991
      %1118 = vmatprep.subr.bf16.mxu0 0
      %1119 = vmatpush1.bf16.msra.mxu0 %v992
      %1120 = vmatprep.subr.bf16.mxu0 0
      %1121 = vmatpush1.bf16.msra.mxu0 %v993
      %1122 = vmatprep.subr.bf16.mxu0 0
      %1123 = vmatpush1.bf16.msra.mxu0 %v994
      %1124 = vmatprep.subr.bf16.mxu0 0
      %1125 = vmatpush1.bf16.msra.mxu0 %v995
      %1126 = vmatprep.subr.bf16.mxu0 0
      %1127 = vmatpush1.bf16.msra.mxu0 %v996
      %1128 = vmatprep.subr.bf16.mxu0 0
      %1129 = vmatpush1.bf16.msra.mxu0 %v997
      %1130 = vmatprep.subr.bf16.mxu0 0
      %1131 = vmatpush1.bf16.msra.mxu0 %v998
      %1132 = vmatprep.subr.bf16.mxu0 0
      %1133 = vmatpush1.bf16.msra.mxu0 %v999
      %1134 = vmatprep.subr.bf16.mxu0 0
      %1135 = vmatpush1.bf16.msra.mxu0 %v1000
      %1136 = vmatprep.subr.bf16.mxu0 0
      %1137 = vmatpush1.bf16.msra.mxu0 %v1001
      %1138 = vmatprep.mubr.bf16.mxu0 %v769
      %1139 = vmatmul.mubr.bf16.gmra.mrb[0].mxu0 %v768
      %v1140 = vpop.f32.mrb[0].mxu0
      %v1141 = vadd.f32 %v1101, %v1140
      %v1142 = vpop.f32.mrb[0].mxu0
      %v1143 = vpop.f32.mrb[0].mxu0
      %v1144 = vpop.f32.mrb[0].mxu0
      %1145 = vdwg.mxu0
      %1146 = vmatprep.subr.bf16.mxu0 0
      %1147 = vmatpush1.bf16.msra.mxu0 %v1002
      %1148 = vmatprep.subr.bf16.mxu0 0
      %1149 = vmatpush1.bf16.msra.mxu0 %v1003
      %1150 = vmatprep.subr.bf16.mxu0 0
      %1151 = vmatpush1.bf16.msra.mxu0 %v1004
      %1152 = vmatprep.subr.bf16.mxu0 0
      %1153 = vmatpush1.bf16.msra.mxu0 %v1005
      %1154 = vmatprep.subr.bf16.mxu0 0
      %1155 = vmatpush1.bf16.msra.mxu0 %v1006
      %1156 = vmatprep.subr.bf16.mxu0 0
      %1157 = vmatpush1.bf16.msra.mxu0 %v1007
      %1158 = vmatprep.subr.bf16.mxu0 0
      %1159 = vmatpush1.bf16.msra.mxu0 %v1008
      %1160 = vmatprep.subr.bf16.mxu0 0
      %1161 = vmatpush1.bf16.msra.mxu0 %v1009
      %1162 = vmatprep.subr.bf16.mxu0 0
      %1163 = vmatpush1.bf16.msra.mxu0 %v1010
      %1164 = vmatprep.subr.bf16.mxu0 0
      %1165 = vmatpush1.bf16.msra.mxu0 %v1011
      %1166 = vmatprep.subr.bf16.mxu0 0
      %1167 = vmatpush1.bf16.msra.mxu0 %v1012
      %1168 = vmatprep.subr.bf16.mxu0 0
      %1169 = vmatpush1.bf16.msra.mxu0 %v1013
      %1170 = vmatprep.subr.bf16.mxu0 0
      %1171 = vmatpush1.bf16.msra.mxu0 %v1014
      %1172 = vmatprep.subr.bf16.mxu0 0
      %1173 = vmatpush1.bf16.msra.mxu0 %v1015
      %1174 = vmatprep.subr.bf16.mxu0 0
      %1175 = vmatpush1.bf16.msra.mxu0 %v1016
      %1176 = vmatprep.subr.bf16.mxu0 0
      %1177 = vmatpush1.bf16.msra.mxu0 %v1017
      %1178 = vmatprep.mubr.bf16.mxu0 %v771
      %1179 = vmatmul.mubr.bf16.gmra.mrb[0].mxu0 %v770
      %v1180 = vpop.f32.mrb[0].mxu0
      %v1181 = vadd.f32 %v1141, %v1180
      %v1182 = vpop.f32.mrb[0].mxu0
      %v1183 = vpop.f32.mrb[0].mxu0
      %v1184 = vpop.f32.mrb[0].mxu0
      %1185 = vdwg.mxu0
      %v1186 = vld [vmem:[%s2] sm:$0x1]
      %v1188 = vrot.slane %v1181, 7
      %vm1190 = vcmask 1040384
      %v1191 = vsel %vm1190, %v1186, %v1188
      %v1192 = vld [vmem:[%s3] sm:$0xff]
      %v1193 = vadd.f32 %v1191, %v1192
      %v1194 = vld [vmem:[%s4] sm:$0x1]
      %v1195 = vld [vmem:[%s5] sm:$0x1]
      %vm1196 = vcmask 261120
      %v1197 = vsel %vm1196, %v1193, 0.0
      %1198 = vadd.xlane.f32.xlu0 %v1197
      %v1199 = vpop.xlane.xlu0 %1198
      %v1200 = vrcp.pop 32.0
      %v1201 = vmul.f32 %v1199, %v1200
      %v1202 = vsub.f32 %v1193, %v1201
      %v1203 = vmul.f32 %v1202, %v1202
      %v1204 = vsel %vm1196, %v1203, 0.0
      %1205 = vadd.xlane.f32.xlu0 %v1204
      %v1206 = vpop.xlane.xlu0 %1205
      %v1207 = vmul.f32 %v1206, %v1200
      %v1208 = vadd.f32 %v1207, 1e-05
      %v1209 = vrsqrt.pop %v1208
      %v1210 = vmul.f32 %v1202, %v1209
      %v1212 = vlaneseq
      %v1213 = vshrl.u32 %v1212, 7
      %v1214 = vsub.s32 0, %v1213
      %v1215 = vrot.slane %v1194, %v1214
      %v1217 = vmul.f32 %v1210, %v1215
      %v1219 = vlaneseq
      %v1220 = vshrl.u32 %v1219, 7
      %v1221 = vsub.s32 0, %v1220
      %v1222 = vrot.slane %v1195, %v1221
      %v1224 = vadd.f32 %v1217, %v1222
      %v1225 = vlaneseq
      %v1226 = vand.u32 %v1225, 127
      %vm1227 = vcmp.lt.s32.totalorder %v1226, 5
      %v1228 = vsel %vm1227, 0.0, -1e+30
      %v1229 = vld [vmem:[%s6] sm:$0x1]
      %v1230 = vld [vmem:[%s7] sm:$0x1]
      %v1231 = vsel %vm1196, %v1224, 0.0
      %1232 = vadd.xlane.f32.xlu0 %v1231
      %v1233 = vpop.xlane.xlu0 %1232
      %v1234 = vmul.f32 %v1233, %v1200
      %v1235 = vsub.f32 %v1224, %v1234
      %v1236 = vmul.f32 %v1235, %v1235
      %v1237 = vsel %vm1196, %v1236, 0.0
      %1238 = vadd.xlane.f32.xlu0 %v1237
      %v1239 = vpop.xlane.xlu0 %1238
      %v1240 = vmul.f32 %v1239, %v1200
      %v1241 = vadd.f32 %v1240, 1e-05
      %v1242 = vrsqrt.pop %v1241
      %v1243 = vmul.f32 %v1235, %v1242
      %v1245 = vlaneseq
      %v1246 = vshrl.u32 %v1245, 7
      %v1247 = vsub.s32 0, %v1246
      %v1248 = vrot.slane %v1229, %v1247
      %v1250 = vmul.f32 %v1243, %v1248
      %v1252 = vlaneseq
      %v1253 = vshrl.u32 %v1252, 7
      %v1254 = vsub.s32 0, %v1253
      %v1255 = vrot.slane %v1230, %v1254
      %v1257 = vadd.f32 %v1250, %v1255
      %v1258 = vpack.c.bf16 %v1257, %v1257
      %v1259 = vld [vmem:[%s8] sm:$0xf]
      %v1260 = vld [vmem:[%s8 + $0x4] sm:$0xf]
      %v1261 = vld [vmem:[%s8 + $0x8] sm:$0xf]
      %v1262 = vld [vmem:[%s8 + $0xc] sm:$0xf]
      %v1263 = vld [vmem:[%s9] sm:$0x1]
      %v1265 = vlaneseq
      %v1266 = vshrl.u32 %v1265, 7
      %v1267 = vsub.s32 0, %v1266
      %v1268 = vrot.slane %v1263, %v1267
      %v1274 = vunpack.c.l.b16 %v1259
      %v1275 = vunpack.c.l.b16 %v1260
      %v1276 = vunpack.c.l.b16 %v1261
      %v1277 = vunpack.c.l.b16 %v1262
      %v1278 = vpack.c.b16 %v1275, %v1274
      %v1279 = vpack.c.b16 %v1277, %v1276
      %v1283 = vsel %vm1196, %v1258, 0
      %1285 = vmatprep.subr.bf16.mxu0 0
      %1286 = vmatpush1.bf16.msra.mxu0 %v1278
      %1287 = vmatprep.subr.bf16.mxu0 0
      %1288 = vmatpush1.bf16.msra.mxu0 %v1279
      %1289 = vmatprep.subr.bf16.mxu0 0
      %1290 = vmatpush1.bf16.msra.mxu0 0
      %1291 = vmatprep.subr.bf16.mxu0 0
      %1292 = vmatpush1.bf16.msra.mxu0 0
      %1293 = vmatprep.subr.bf16.mxu0 0
      %1294 = vmatpush1.bf16.msra.mxu0 0
      %1295 = vmatprep.subr.bf16.mxu0 0
      %1296 = vmatpush1.bf16.msra.mxu0 0
      %1297 = vmatprep.subr.bf16.mxu0 0
      %1298 = vmatpush1.bf16.msra.mxu0 0
      %1299 = vmatprep.subr.bf16.mxu0 0
      %1300 = vmatpush1.bf16.msra.mxu0 0
      %1301 = vmatprep.subr.bf16.mxu0 0
      %1302 = vmatpush1.bf16.msra.mxu0 0
      %1303 = vmatprep.subr.bf16.mxu0 0
      %1304 = vmatpush1.bf16.msra.mxu0 0
      %1305 = vmatprep.subr.bf16.mxu0 0
      %1306 = vmatpush1.bf16.msra.mxu0 0
      %1307 = vmatprep.subr.bf16.mxu0 0
      %1308 = vmatpush1.bf16.msra.mxu0 0
      %1309 = vmatprep.subr.bf16.mxu0 0
      %1310 = vmatpush1.bf16.msra.mxu0 0
      %1311 = vmatprep.subr.bf16.mxu0 0
      %1312 = vmatpush1.bf16.msra.mxu0 0
      %1313 = vmatprep.subr.bf16.mxu0 0
      %1314 = vmatpush1.bf16.msra.mxu0 0
      %1315 = vmatprep.subr.bf16.mxu0 0
      %1316 = vmatpush1.bf16.msra.mxu0 0
      %1317 = vmatprep.mubr.bf16.mxu0 0
      %1318 = vmatmul.mubr.bf16.gmra.mrb[0].mxu0 %v1283
      %v1319 = vpop.f32.mrb[0].mxu0
      %v1320 = vadd.f32 %v1268, %v1319
      %v1321 = vpop.f32.mrb[0].mxu0
      %v1322 = vpop.f32.mrb[0].mxu0
      %v1323 = vpop.f32.mrb[0].mxu0
      %1324 = vdwg.mxu0
      %1326 = vrot.lane.b32.xlu0 %v1320, 120
      %v1327 = vpop.permute.xlu0 %1326
      %1329 = vrot.lane.b32.xlu0 %v1320, 112
      %v1330 = vpop.permute.xlu0 %1329
      %1332 = vrot.lane.b32.xlu0 %v1320, 104
      %v1333 = vpop.permute.xlu0 %1332
      %v1335 = vcombine.low %v1320, %v1330
      %v1336 = vcombine.high %v1320, %v1330
      %v1338 = vunpack.c.l.s4 1983009808
      %v1339 = vunpack.c.0.s8 %v1338
      %v1340 = vlaneseq
      %v1341 = vshrl.u32 %v1340, 7
      %v1342 = vsub.s32 %v1339, %v1341
      %v1343 = vrot.slane %v1335, %v1342
      %v1345 = vunpack.c.l.s4 1983009808
      %v1346 = vunpack.c.0.s8 %v1345
      %v1347 = vlaneseq
      %v1348 = vshrl.u32 %v1347, 7
      %v1349 = vsub.s32 %v1346, %v1348
      %v1350 = vrot.slane %v1336, %v1349
      %v1351 = vcombine.low %v1327, %v1333
      %v1352 = vcombine.high %v1327, %v1333
      %v1354 = vunpack.c.l.s4 1983009808
      %v1355 = vunpack.c.0.s8 %v1354
      %v1356 = vlaneseq
      %v1357 = vshrl.u32 %v1356, 7
      %v1358 = vsub.s32 %v1355, %v1357
      %v1359 = vrot.slane %v1351, %v1358
      %v1361 = vunpack.c.l.s4 1983009808
      %v1362 = vunpack.c.0.s8 %v1361
      %v1363 = vlaneseq
      %v1364 = vshrl.u32 %v1363, 7
      %v1365 = vsub.s32 %v1362, %v1364
      %v1366 = vrot.slane %v1352, %v1365
      %v1367 = vcombine.low %v1343, %v1359
      %v1368 = vcombine.high %v1343, %v1359
      %v1370 = vunpack.c.l.s4 1934713408
      %v1371 = vunpack.c.0.s8 %v1370
      %v1372 = vlaneseq
      %v1373 = vshrl.u32 %v1372, 7
      %v1374 = vsub.s32 %v1371, %v1373
      %v1375 = vrot.slane %v1367, %v1374
      %v1377 = vunpack.c.l.s4 1934713408
      %v1378 = vunpack.c.0.s8 %v1377
      %v1379 = vlaneseq
      %v1380 = vshrl.u32 %v1379, 7
      %v1381 = vsub.s32 %v1378, %v1380
      %v1382 = vrot.slane %v1368, %v1381
      %v1383 = vcombine.low %v1350, %v1366
      %v1384 = vcombine.high %v1350, %v1366
      %v1386 = vunpack.c.l.s4 1934713408
      %v1387 = vunpack.c.0.s8 %v1386
      %v1388 = vlaneseq
      %v1389 = vshrl.u32 %v1388, 7
      %v1390 = vsub.s32 %v1387, %v1389
      %v1391 = vrot.slane %v1383, %v1390
      %v1393 = vunpack.c.l.s4 1934713408
      %v1394 = vunpack.c.0.s8 %v1393
      %v1395 = vlaneseq
      %v1396 = vshrl.u32 %v1395, 7
      %v1397 = vsub.s32 %v1394, %v1396
      %v1398 = vrot.slane %v1384, %v1397
      %v1399 = vcombine.high %v1375, 0.0
      %v1400 = vcombine.high %v1382, 0.0
      %v1401 = vcombine.high %v1391, 0.0
      %v1402 = vcombine.high %v1398, 0.0
      %1403 = vrot.lane.b32.xlu0 %v1320, 96
      %v1404 = vpop.permute.xlu0 %1403
      %1405 = vrot.lane.b32.xlu0 %v1327, 96
      %v1406 = vpop.permute.xlu0 %1405
      %1407 = vrot.lane.b32.xlu0 %v1330, 96
      %v1408 = vpop.permute.xlu0 %1407
      %1409 = vrot.lane.b32.xlu0 %v1333, 96
      %v1410 = vpop.permute.xlu0 %1409
      %v1415 = vcombine.low %v1404, %v1408
      %v1416 = vcombine.high %v1404, %v1408
      %v1418 = vunpack.c.l.s4 1983009808
      %v1419 = vunpack.c.0.s8 %v1418
      %v1420 = vlaneseq
      %v1421 = vshrl.u32 %v1420, 7
      %v1422 = vsub.s32 %v1419, %v1421
      %v1423 = vrot.slane %v1415, %v1422
      %v1425 = vunpack.c.l.s4 1983009808
      %v1426 = vunpack.c.0.s8 %v1425
      %v1427 = vlaneseq
      %v1428 = vshrl.u32 %v1427, 7
      %v1429 = vsub.s32 %v1426, %v1428
      %v1430 = vrot.slane %v1416, %v1429
      %v1431 = vcombine.low %v1406, %v1410
      %v1432 = vcombine.high %v1406, %v1410
      %v1434 = vunpack.c.l.s4 1983009808
      %v1435 = vunpack.c.0.s8 %v1434
      %v1436 = vlaneseq
      %v1437 = vshrl.u32 %v1436, 7
      %v1438 = vsub.s32 %v1435, %v1437
      %v1439 = vrot.slane %v1431, %v1438
      %v1441 = vunpack.c.l.s4 1983009808
      %v1442 = vunpack.c.0.s8 %v1441
      %v1443 = vlaneseq
      %v1444 = vshrl.u32 %v1443, 7
      %v1445 = vsub.s32 %v1442, %v1444
      %v1446 = vrot.slane %v1432, %v1445
      %v1447 = vcombine.low %v1423, %v1439
      %v1448 = vcombine.high %v1423, %v1439
      %v1450 = vunpack.c.l.s4 1934713408
      %v1451 = vunpack.c.0.s8 %v1450
      %v1452 = vlaneseq
      %v1453 = vshrl.u32 %v1452, 7
      %v1454 = vsub.s32 %v1451, %v1453
      %v1455 = vrot.slane %v1447, %v1454
      %v1457 = vunpack.c.l.s4 1934713408
      %v1458 = vunpack.c.0.s8 %v1457
      %v1459 = vlaneseq
      %v1460 = vshrl.u32 %v1459, 7
      %v1461 = vsub.s32 %v1458, %v1460
      %v1462 = vrot.slane %v1448, %v1461
      %v1463 = vcombine.low %v1430, %v1446
      %v1464 = vcombine.high %v1430, %v1446
      %v1466 = vunpack.c.l.s4 1934713408
      %v1467 = vunpack.c.0.s8 %v1466
      %v1468 = vlaneseq
      %v1469 = vshrl.u32 %v1468, 7
      %v1470 = vsub.s32 %v1467, %v1469
      %v1471 = vrot.slane %v1463, %v1470
      %v1473 = vunpack.c.l.s4 1934713408
      %v1474 = vunpack.c.0.s8 %v1473
      %v1475 = vlaneseq
      %v1476 = vshrl.u32 %v1475, 7
      %v1477 = vsub.s32 %v1474, %v1476
      %v1478 = vrot.slane %v1464, %v1477
      %v1479 = vcombine.high %v1455, 0.0
      %v1480 = vcombine.high %v1462, 0.0
      %v1481 = vcombine.high %v1471, 0.0
      %v1482 = vcombine.high %v1478, 0.0
      %1483 = vrot.lane.b32.xlu0 %v1320, 64
      %v1484 = vpop.permute.xlu0 %1483
      %1485 = vrot.lane.b32.xlu0 %v1327, 64
      %v1486 = vpop.permute.xlu0 %1485
      %1487 = vrot.lane.b32.xlu0 %v1330, 64
      %v1488 = vpop.permute.xlu0 %1487
      %1489 = vrot.lane.b32.xlu0 %v1333, 64
      %v1490 = vpop.permute.xlu0 %1489
      %v1495 = vcombine.low %v1484, %v1488
      %v1496 = vcombine.high %v1484, %v1488
      %v1498 = vunpack.c.l.s4 1983009808
      %v1499 = vunpack.c.0.s8 %v1498
      %v1500 = vlaneseq
      %v1501 = vshrl.u32 %v1500, 7
      %v1502 = vsub.s32 %v1499, %v1501
      %v1503 = vrot.slane %v1495, %v1502
      %v1505 = vunpack.c.l.s4 1983009808
      %v1506 = vunpack.c.0.s8 %v1505
      %v1507 = vlaneseq
      %v1508 = vshrl.u32 %v1507, 7
      %v1509 = vsub.s32 %v1506, %v1508
      %v1510 = vrot.slane %v1496, %v1509
      %v1511 = vcombine.low %v1486, %v1490
      %v1512 = vcombine.high %v1486, %v1490
      %v1514 = vunpack.c.l.s4 1983009808
      %v1515 = vunpack.c.0.s8 %v1514
      %v1516 = vlaneseq
      %v1517 = vshrl.u32 %v1516, 7
      %v1518 = vsub.s32 %v1515, %v1517
      %v1519 = vrot.slane %v1511, %v1518
      %v1521 = vunpack.c.l.s4 1983009808
      %v1522 = vunpack.c.0.s8 %v1521
      %v1523 = vlaneseq
      %v1524 = vshrl.u32 %v1523, 7
      %v1525 = vsub.s32 %v1522, %v1524
      %v1526 = vrot.slane %v1512, %v1525
      %v1527 = vcombine.low %v1503, %v1519
      %v1528 = vcombine.high %v1503, %v1519
      %v1530 = vunpack.c.l.s4 1934713408
      %v1531 = vunpack.c.0.s8 %v1530
      %v1532 = vlaneseq
      %v1533 = vshrl.u32 %v1532, 7
      %v1534 = vsub.s32 %v1531, %v1533
      %v1535 = vrot.slane %v1527, %v1534
      %v1537 = vunpack.c.l.s4 1934713408
      %v1538 = vunpack.c.0.s8 %v1537
      %v1539 = vlaneseq
      %v1540 = vshrl.u32 %v1539, 7
      %v1541 = vsub.s32 %v1538, %v1540
      %v1542 = vrot.slane %v1528, %v1541
      %v1543 = vcombine.low %v1510, %v1526
      %v1544 = vcombine.high %v1510, %v1526
      %v1546 = vunpack.c.l.s4 1934713408
      %v1547 = vunpack.c.0.s8 %v1546
      %v1548 = vlaneseq
      %v1549 = vshrl.u32 %v1548, 7
      %v1550 = vsub.s32 %v1547, %v1549
      %v1551 = vrot.slane %v1543, %v1550
      %v1553 = vunpack.c.l.s4 1934713408
      %v1554 = vunpack.c.0.s8 %v1553
      %v1555 = vlaneseq
      %v1556 = vshrl.u32 %v1555, 7
      %v1557 = vsub.s32 %v1554, %v1556
      %v1558 = vrot.slane %v1544, %v1557
      %v1559 = vcombine.high %v1535, 0.0
      %v1560 = vcombine.high %v1542, 0.0
      %v1561 = vcombine.high %v1551, 0.0
      %v1562 = vcombine.high %v1558, 0.0
      %v1563 = vpack.c.bf16 %v1375, %v1375
      %v1564 = vpack.c.bf16 %v1399, %v1399
      %v1565 = vpack.c.bf16 %v1382, %v1382
      %v1566 = vpack.c.bf16 %v1400, %v1400
      %v1567 = vpack.c.bf16 %v1391, %v1391
      %v1568 = vpack.c.bf16 %v1401, %v1401
      %v1569 = vpack.c.bf16 %v1398, %v1398
      %v1570 = vpack.c.bf16 %v1402, %v1402
      %v1571 = vpack.c.bf16 %v1455, %v1455
      %v1572 = vpack.c.bf16 %v1479, %v1479
      %v1573 = vpack.c.bf16 %v1462, %v1462
      %v1574 = vpack.c.bf16 %v1480, %v1480
      %v1575 = vpack.c.bf16 %v1471, %v1471
      %v1576 = vpack.c.bf16 %v1481, %v1481
      %v1577 = vpack.c.bf16 %v1478, %v1478
      %v1578 = vpack.c.bf16 %v1482, %v1482
      %v1579 = vcombine.low %v1563, %v1567
      %v1581 = vunpack.c.l.s4 1983009808
      %v1582 = vunpack.c.0.s8 %v1581
      %v1583 = vlaneseq
      %v1584 = vshrl.u32 %v1583, 7
      %v1585 = vsub.s32 %v1582, %v1584
      %v1586 = vrot.slane %v1579, %v1585
      %v1587 = vcombine.low %v1565, %v1569
      %v1589 = vunpack.c.l.s4 1983009808
      %v1590 = vunpack.c.0.s8 %v1589
      %v1591 = vlaneseq
      %v1592 = vshrl.u32 %v1591, 7
      %v1593 = vsub.s32 %v1590, %v1592
      %v1594 = vrot.slane %v1587, %v1593
      %v1595 = vcombine.low %v1586, %v1594
      %v1597 = vunpack.c.l.s4 1934713408
      %v1598 = vunpack.c.0.s8 %v1597
      %v1599 = vlaneseq
      %v1600 = vshrl.u32 %v1599, 7
      %v1601 = vsub.s32 %v1598, %v1600
      %v1602 = vrot.slane %v1595, %v1601
      %v1603 = vcombine.high %v1602, 0
      %v1604 = vcombine.low %v1564, %v1568
      %v1606 = vunpack.c.l.s4 1983009808
      %v1607 = vunpack.c.0.s8 %v1606
      %v1608 = vlaneseq
      %v1609 = vshrl.u32 %v1608, 7
      %v1610 = vsub.s32 %v1607, %v1609
      %v1611 = vrot.slane %v1604, %v1610
      %v1612 = vcombine.low %v1566, %v1570
      %v1614 = vunpack.c.l.s4 1983009808
      %v1615 = vunpack.c.0.s8 %v1614
      %v1616 = vlaneseq
      %v1617 = vshrl.u32 %v1616, 7
      %v1618 = vsub.s32 %v1615, %v1617
      %v1619 = vrot.slane %v1612, %v1618
      %v1620 = vcombine.low %v1611, %v1619
      %v1622 = vunpack.c.l.s4 1934713408
      %v1623 = vunpack.c.0.s8 %v1622
      %v1624 = vlaneseq
      %v1625 = vshrl.u32 %v1624, 7
      %v1626 = vsub.s32 %v1623, %v1625
      %v1627 = vrot.slane %v1620, %v1626
      %v1628 = vcombine.high %v1627, 0
      %v1631 = vpack.i.b16 %v1627, %v1602
      %v1632 = vshrl.u32 %v1602, 16
      %v1633 = vshrl.u32 %v1627, 16
      %v1634 = vpack.i.b16 %v1633, %v1632
      %v1637 = vpack.i.b16 %v1628, %v1603
      %v1638 = vshrl.u32 %v1603, 16
      %v1639 = vshrl.u32 %v1628, 16
      %v1640 = vpack.i.b16 %v1639, %v1638
      %1641 = vxpose.xlu0.c.b16.start [1/8] %v1571, 128
      %1642 = vxpose.xlu0.c.b16.cont [2/8] 0, 128
      %1643 = vxpose.xlu0.c.b16.cont [3/8] 0, 128
      %1644 = vxpose.xlu0.c.b16.cont [4/8] 0, 128
      %1645 = vxpose.xlu0.c.b16.cont [5/8] 0, 128
      %1646 = vxpose.xlu0.c.b16.cont [6/8] 0, 128
      %1647 = vxpose.xlu0.c.b16.cont [7/8] 0, 128
      %1648 = vxpose.xlu0.c.b16.end [8/8] 0, 128
      %v1649 = vpop.trf.xlu0
      %v1650 = vpop.trf.xlu0
      %v1651 = vpop.trf.xlu0
      %v1652 = vpop.trf.xlu0
      %v1653 = vpop.trf.xlu0
      %v1654 = vpop.trf.xlu0
      %v1655 = vpop.trf.xlu0
      %v1656 = vpop.trf.xlu0
      %1657 = vxpose.xlu0.c.b16.start [1/8] %v1572, 128
      %1658 = vxpose.xlu0.c.b16.cont [2/8] 0, 128
      %1659 = vxpose.xlu0.c.b16.cont [3/8] 0, 128
      %1660 = vxpose.xlu0.c.b16.cont [4/8] 0, 128
      %1661 = vxpose.xlu0.c.b16.cont [5/8] 0, 128
      %1662 = vxpose.xlu0.c.b16.cont [6/8] 0, 128
      %1663 = vxpose.xlu0.c.b16.cont [7/8] 0, 128
      %1664 = vxpose.xlu0.c.b16.end [8/8] 0, 128
      %v1665 = vpop.trf.xlu0
      %v1666 = vpop.trf.xlu0
      %v1667 = vpop.trf.xlu0
      %v1668 = vpop.trf.xlu0
      %v1669 = vpop.trf.xlu0
      %v1670 = vpop.trf.xlu0
      %v1671 = vpop.trf.xlu0
      %v1672 = vpop.trf.xlu0
      %1673 = vxpose.xlu0.c.b16.start [1/8] %v1573, 128
      %1674 = vxpose.xlu0.c.b16.cont [2/8] 0, 128
      %1675 = vxpose.xlu0.c.b16.cont [3/8] 0, 128
      %1676 = vxpose.xlu0.c.b16.cont [4/8] 0, 128
      %1677 = vxpose.xlu0.c.b16.cont [5/8] 0, 128
      %1678 = vxpose.xlu0.c.b16.cont [6/8] 0, 128
      %1679 = vxpose.xlu0.c.b16.cont [7/8] 0, 128
      %1680 = vxpose.xlu0.c.b16.end [8/8] 0, 128
      %v1681 = vpop.trf.xlu0
      %v1682 = vpop.trf.xlu0
      %v1683 = vpop.trf.xlu0
      %v1684 = vpop.trf.xlu0
      %v1685 = vpop.trf.xlu0
      %v1686 = vpop.trf.xlu0
      %v1687 = vpop.trf.xlu0
      %v1688 = vpop.trf.xlu0
      %1689 = vxpose.xlu0.c.b16.start [1/8] %v1574, 128
      %1690 = vxpose.xlu0.c.b16.cont [2/8] 0, 128
      %1691 = vxpose.xlu0.c.b16.cont [3/8] 0, 128
      %1692 = vxpose.xlu0.c.b16.cont [4/8] 0, 128
      %1693 = vxpose.xlu0.c.b16.cont [5/8] 0, 128
      %1694 = vxpose.xlu0.c.b16.cont [6/8] 0, 128
      %1695 = vxpose.xlu0.c.b16.cont [7/8] 0, 128
      %1696 = vxpose.xlu0.c.b16.end [8/8] 0, 128
      %v1697 = vpop.trf.xlu0
      %v1698 = vpop.trf.xlu0
      %v1699 = vpop.trf.xlu0
      %v1700 = vpop.trf.xlu0
      %v1701 = vpop.trf.xlu0
      %v1702 = vpop.trf.xlu0
      %v1703 = vpop.trf.xlu0
      %v1704 = vpop.trf.xlu0
      %1705 = vxpose.xlu0.c.b16.start [1/8] %v1575, 128
      %1706 = vxpose.xlu0.c.b16.cont [2/8] 0, 128
      %1707 = vxpose.xlu0.c.b16.cont [3/8] 0, 128
      %1708 = vxpose.xlu0.c.b16.cont [4/8] 0, 128
      %1709 = vxpose.xlu0.c.b16.cont [5/8] 0, 128
      %1710 = vxpose.xlu0.c.b16.cont [6/8] 0, 128
      %1711 = vxpose.xlu0.c.b16.cont [7/8] 0, 128
      %1712 = vxpose.xlu0.c.b16.end [8/8] 0, 128
      %v1713 = vpop.trf.xlu0
      %v1714 = vpop.trf.xlu0
      %v1715 = vpop.trf.xlu0
      %v1716 = vpop.trf.xlu0
      %v1717 = vpop.trf.xlu0
      %v1718 = vpop.trf.xlu0
      %v1719 = vpop.trf.xlu0
      %v1720 = vpop.trf.xlu0
      %1721 = vxpose.xlu0.c.b16.start [1/8] %v1576, 128
      %1722 = vxpose.xlu0.c.b16.cont [2/8] 0, 128
      %1723 = vxpose.xlu0.c.b16.cont [3/8] 0, 128
      %1724 = vxpose.xlu0.c.b16.cont [4/8] 0, 128
      %1725 = vxpose.xlu0.c.b16.cont [5/8] 0, 128
      %1726 = vxpose.xlu0.c.b16.cont [6/8] 0, 128
      %1727 = vxpose.xlu0.c.b16.cont [7/8] 0, 128
      %1728 = vxpose.xlu0.c.b16.end [8/8] 0, 128
      %v1729 = vpop.trf.xlu0
      %v1730 = vpop.trf.xlu0
      %v1731 = vpop.trf.xlu0
      %v1732 = vpop.trf.xlu0
      %v1733 = vpop.trf.xlu0
      %v1734 = vpop.trf.xlu0
      %v1735 = vpop.trf.xlu0
      %v1736 = vpop.trf.xlu0
      %1737 = vxpose.xlu0.c.b16.start [1/8] %v1577, 128
      %1738 = vxpose.xlu0.c.b16.cont [2/8] 0, 128
      %1739 = vxpose.xlu0.c.b16.cont [3/8] 0, 128
      %1740 = vxpose.xlu0.c.b16.cont [4/8] 0, 128
      %1741 = vxpose.xlu0.c.b16.cont [5/8] 0, 128
      %1742 = vxpose.xlu0.c.b16.cont [6/8] 0, 128
      %1743 = vxpose.xlu0.c.b16.cont [7/8] 0, 128
      %1744 = vxpose.xlu0.c.b16.end [8/8] 0, 128
      %v1745 = vpop.trf.xlu0
      %v1746 = vpop.trf.xlu0
      %v1747 = vpop.trf.xlu0
      %v1748 = vpop.trf.xlu0
      %v1749 = vpop.trf.xlu0
      %v1750 = vpop.trf.xlu0
      %v1751 = vpop.trf.xlu0
      %v1752 = vpop.trf.xlu0
      %1753 = vxpose.xlu0.c.b16.start [1/8] %v1578, 128
      %1754 = vxpose.xlu0.c.b16.cont [2/8] 0, 128
      %1755 = vxpose.xlu0.c.b16.cont [3/8] 0, 128
      %1756 = vxpose.xlu0.c.b16.cont [4/8] 0, 128
      %1757 = vxpose.xlu0.c.b16.cont [5/8] 0, 128
      %1758 = vxpose.xlu0.c.b16.cont [6/8] 0, 128
      %1759 = vxpose.xlu0.c.b16.cont [7/8] 0, 128
      %1760 = vxpose.xlu0.c.b16.end [8/8] 0, 128
      %v1761 = vpop.trf.xlu0
      %v1762 = vpop.trf.xlu0
      %v1763 = vpop.trf.xlu0
      %v1764 = vpop.trf.xlu0
      %v1765 = vpop.trf.xlu0
      %v1766 = vpop.trf.xlu0
      %v1767 = vpop.trf.xlu0
      %v1768 = vpop.trf.xlu0
      %v1769 = vcombine.low %v1649, %v1713
      %v1771 = vunpack.c.l.s4 1983009808
      %v1772 = vunpack.c.0.s8 %v1771
      %v1773 = vlaneseq
      %v1774 = vshrl.u32 %v1773, 7
      %v1775 = vsub.s32 %v1772, %v1774
      %v1776 = vrot.slane %v1769, %v1775
      %v1777 = vcombine.low %v1681, %v1745
      %v1779 = vunpack.c.l.s4 1983009808
      %v1780 = vunpack.c.0.s8 %v1779
      %v1781 = vlaneseq
      %v1782 = vshrl.u32 %v1781, 7
      %v1783 = vsub.s32 %v1780, %v1782
      %v1784 = vrot.slane %v1777, %v1783
      %v1785 = vcombine.low %v1776, %v1784
      %v1786 = vcombine.high %v1776, %v1784
      %v1788 = vunpack.c.l.s4 1934713408
      %v1789 = vunpack.c.0.s8 %v1788
      %v1790 = vlaneseq
      %v1791 = vshrl.u32 %v1790, 7
      %v1792 = vsub.s32 %v1789, %v1791
      %v1793 = vrot.slane %v1785, %v1792
      %v1795 = vunpack.c.l.s4 1934713408
      %v1796 = vunpack.c.0.s8 %v1795
      %v1797 = vlaneseq
      %v1798 = vshrl.u32 %v1797, 7
      %v1799 = vsub.s32 %v1796, %v1798
      %v1800 = vrot.slane %v1786, %v1799
      %v1801 = vcombine.high %v1793, 0
      %v1802 = vcombine.high %v1800, 0
      %v1803 = vcombine.low %v1665, %v1729
      %v1805 = vunpack.c.l.s4 1983009808
      %v1806 = vunpack.c.0.s8 %v1805
      %v1807 = vlaneseq
      %v1808 = vshrl.u32 %v1807, 7
      %v1809 = vsub.s32 %v1806, %v1808
      %v1810 = vrot.slane %v1803, %v1809
      %v1811 = vcombine.low %v1697, %v1761
      %v1813 = vunpack.c.l.s4 1983009808
      %v1814 = vunpack.c.0.s8 %v1813
      %v1815 = vlaneseq
      %v1816 = vshrl.u32 %v1815, 7
      %v1817 = vsub.s32 %v1814, %v1816
      %v1818 = vrot.slane %v1811, %v1817
      %v1819 = vcombine.low %v1810, %v1818
      %v1820 = vcombine.high %v1810, %v1818
      %v1822 = vunpack.c.l.s4 1934713408
      %v1823 = vunpack.c.0.s8 %v1822
      %v1824 = vlaneseq
      %v1825 = vshrl.u32 %v1824, 7
      %v1826 = vsub.s32 %v1823, %v1825
      %v1827 = vrot.slane %v1819, %v1826
      %v1829 = vunpack.c.l.s4 1934713408
      %v1830 = vunpack.c.0.s8 %v1829
      %v1831 = vlaneseq
      %v1832 = vshrl.u32 %v1831, 7
      %v1833 = vsub.s32 %v1830, %v1832
      %v1834 = vrot.slane %v1820, %v1833
      %v1835 = vcombine.high %v1827, 0
      %v1836 = vcombine.high %v1834, 0
      %v1839 = vpack.i.b16 %v1827, %v1793
      %v1841 = vshrl.u32 %v1793, 16
      %v1842 = vshrl.u32 %v1827, 16
      %v1843 = vpack.i.b16 %v1842, %v1841
      %v1847 = vpack.i.b16 %v1835, %v1801
      %v1849 = vshrl.u32 %v1801, 16
      %v1850 = vshrl.u32 %v1835, 16
      %v1851 = vpack.i.b16 %v1850, %v1849
      %v1855 = vpack.i.b16 %v1834, %v1800
      %v1857 = vshrl.u32 %v1800, 16
      %v1858 = vshrl.u32 %v1834, 16
      %v1859 = vpack.i.b16 %v1858, %v1857
      %v1863 = vpack.i.b16 %v1836, %v1802
      %v1865 = vshrl.u32 %v1802, 16
      %v1866 = vshrl.u32 %v1836, 16
      %v1867 = vpack.i.b16 %v1866, %v1865
      %1869 = vxpose.xlu0.c.b16.start [1/8] %v1839, 128
      %1870 = vxpose.xlu0.c.b16.cont [2/8] 0, 128
      %1871 = vxpose.xlu0.c.b16.cont [3/8] 0, 128
      %1872 = vxpose.xlu0.c.b16.cont [4/8] 0, 128
      %1873 = vxpose.xlu0.c.b16.cont [5/8] 0, 128
      %1874 = vxpose.xlu0.c.b16.cont [6/8] 0, 128
      %1875 = vxpose.xlu0.c.b16.cont [7/8] 0, 128
      %1876 = vxpose.xlu0.c.b16.end [8/8] 0, 128
      %v1877 = vpop.trf.xlu0
      %v1878 = vpop.trf.xlu0
      %v1879 = vpop.trf.xlu0
      %v1880 = vpop.trf.xlu0
      %v1881 = vpop.trf.xlu0
      %v1882 = vpop.trf.xlu0
      %v1883 = vpop.trf.xlu0
      %v1884 = vpop.trf.xlu0
      %1885 = vxpose.xlu0.c.b16.start [1/8] %v1843, 128
      %1886 = vxpose.xlu0.c.b16.cont [2/8] 0, 128
      %1887 = vxpose.xlu0.c.b16.cont [3/8] 0, 128
      %1888 = vxpose.xlu0.c.b16.cont [4/8] 0, 128
      %1889 = vxpose.xlu0.c.b16.cont [5/8] 0, 128
      %1890 = vxpose.xlu0.c.b16.cont [6/8] 0, 128
      %1891 = vxpose.xlu0.c.b16.cont [7/8] 0, 128
      %1892 = vxpose.xlu0.c.b16.end [8/8] 0, 128
      %v1893 = vpop.trf.xlu0
      %v1894 = vpop.trf.xlu0
      %v1895 = vpop.trf.xlu0
      %v1896 = vpop.trf.xlu0
      %v1897 = vpop.trf.xlu0
      %v1898 = vpop.trf.xlu0
      %v1899 = vpop.trf.xlu0
      %v1900 = vpop.trf.xlu0
      %1901 = vxpose.xlu0.c.b16.start [1/8] %v1847, 128
      %1902 = vxpose.xlu0.c.b16.cont [2/8] 0, 128
      %1903 = vxpose.xlu0.c.b16.cont [3/8] 0, 128
      %1904 = vxpose.xlu0.c.b16.cont [4/8] 0, 128
      %1905 = vxpose.xlu0.c.b16.cont [5/8] 0, 128
      %1906 = vxpose.xlu0.c.b16.cont [6/8] 0, 128
      %1907 = vxpose.xlu0.c.b16.cont [7/8] 0, 128
      %1908 = vxpose.xlu0.c.b16.end [8/8] 0, 128
      %v1909 = vpop.trf.xlu0
      %v1910 = vpop.trf.xlu0
      %v1911 = vpop.trf.xlu0
      %v1912 = vpop.trf.xlu0
      %v1913 = vpop.trf.xlu0
      %v1914 = vpop.trf.xlu0
      %v1915 = vpop.trf.xlu0
      %v1916 = vpop.trf.xlu0
      %1917 = vxpose.xlu0.c.b16.start [1/8] %v1851, 128
      %1918 = vxpose.xlu0.c.b16.cont [2/8] 0, 128
      %1919 = vxpose.xlu0.c.b16.cont [3/8] 0, 128
      %1920 = vxpose.xlu0.c.b16.cont [4/8] 0, 128
      %1921 = vxpose.xlu0.c.b16.cont [5/8] 0, 128
      %1922 = vxpose.xlu0.c.b16.cont [6/8] 0, 128
      %1923 = vxpose.xlu0.c.b16.cont [7/8] 0, 128
      %1924 = vxpose.xlu0.c.b16.end [8/8] 0, 128
      %v1925 = vpop.trf.xlu0
      %v1926 = vpop.trf.xlu0
      %v1927 = vpop.trf.xlu0
      %v1928 = vpop.trf.xlu0
      %v1929 = vpop.trf.xlu0
      %v1930 = vpop.trf.xlu0
      %v1931 = vpop.trf.xlu0
      %v1932 = vpop.trf.xlu0
      %1933 = vxpose.xlu0.c.b16.start [1/8] %v1855, 128
      %1934 = vxpose.xlu0.c.b16.cont [2/8] 0, 128
      %1935 = vxpose.xlu0.c.b16.cont [3/8] 0, 128
      %1936 = vxpose.xlu0.c.b16.cont [4/8] 0, 128
      %1937 = vxpose.xlu0.c.b16.cont [5/8] 0, 128
      %1938 = vxpose.xlu0.c.b16.cont [6/8] 0, 128
      %1939 = vxpose.xlu0.c.b16.cont [7/8] 0, 128
      %1940 = vxpose.xlu0.c.b16.end [8/8] 0, 128
      %v1941 = vpop.trf.xlu0
      %v1942 = vpop.trf.xlu0
      %v1943 = vpop.trf.xlu0
      %v1944 = vpop.trf.xlu0
      %v1945 = vpop.trf.xlu0
      %v1946 = vpop.trf.xlu0
      %v1947 = vpop.trf.xlu0
      %v1948 = vpop.trf.xlu0
      %1949 = vxpose.xlu0.c.b16.start [1/8] %v1859, 128
      %1950 = vxpose.xlu0.c.b16.cont [2/8] 0, 128
      %1951 = vxpose.xlu0.c.b16.cont [3/8] 0, 128
      %1952 = vxpose.xlu0.c.b16.cont [4/8] 0, 128
      %1953 = vxpose.xlu0.c.b16.cont [5/8] 0, 128
      %1954 = vxpose.xlu0.c.b16.cont [6/8] 0, 128
      %1955 = vxpose.xlu0.c.b16.cont [7/8] 0, 128
      %1956 = vxpose.xlu0.c.b16.end [8/8] 0, 128
      %v1957 = vpop.trf.xlu0
      %v1958 = vpop.trf.xlu0
      %v1959 = vpop.trf.xlu0
      %v1960 = vpop.trf.xlu0
      %v1961 = vpop.trf.xlu0
      %v1962 = vpop.trf.xlu0
      %v1963 = vpop.trf.xlu0
      %v1964 = vpop.trf.xlu0
      %1965 = vxpose.xlu0.c.b16.start [1/8] %v1863, 128
      %1966 = vxpose.xlu0.c.b16.cont [2/8] 0, 128
      %1967 = vxpose.xlu0.c.b16.cont [3/8] 0, 128
      %1968 = vxpose.xlu0.c.b16.cont [4/8] 0, 128
      %1969 = vxpose.xlu0.c.b16.cont [5/8] 0, 128
      %1970 = vxpose.xlu0.c.b16.cont [6/8] 0, 128
      %1971 = vxpose.xlu0.c.b16.cont [7/8] 0, 128
      %1972 = vxpose.xlu0.c.b16.end [8/8] 0, 128
      %v1973 = vpop.trf.xlu0
      %v1974 = vpop.trf.xlu0
      %v1975 = vpop.trf.xlu0
      %v1976 = vpop.trf.xlu0
      %v1977 = vpop.trf.xlu0
      %v1978 = vpop.trf.xlu0
      %v1979 = vpop.trf.xlu0
      %v1980 = vpop.trf.xlu0
      %1981 = vxpose.xlu0.c.b16.start [1/8] %v1867, 128
      %1982 = vxpose.xlu0.c.b16.cont [2/8] 0, 128
      %1983 = vxpose.xlu0.c.b16.cont [3/8] 0, 128
      %1984 = vxpose.xlu0.c.b16.cont [4/8] 0, 128
      %1985 = vxpose.xlu0.c.b16.cont [5/8] 0, 128
      %1986 = vxpose.xlu0.c.b16.cont [6/8] 0, 128
      %1987 = vxpose.xlu0.c.b16.cont [7/8] 0, 128
      %1988 = vxpose.xlu0.c.b16.end [8/8] 0, 128
      %v1989 = vpop.trf.xlu0
      %v1990 = vpop.trf.xlu0
      %v1991 = vpop.trf.xlu0
      %v1992 = vpop.trf.xlu0
      %v1993 = vpop.trf.xlu0
      %v1994 = vpop.trf.xlu0
      %v1995 = vpop.trf.xlu0
      %v1996 = vpop.trf.xlu0
      %v1997 = vcombine.low %v1877, %v1941
      %v1999 = vunpack.c.l.s4 1983009808
      %v2000 = vunpack.c.0.s8 %v1999
      %v2001 = vlaneseq
      %v2002 = vshrl.u32 %v2001, 7
      %v2003 = vsub.s32 %v2000, %v2002
      %v2004 = vrot.slane %v1997, %v2003
      %v2005 = vcombine.low %v1909, %v1973
      %v2007 = vunpack.c.l.s4 1983009808
      %v2008 = vunpack.c.0.s8 %v2007
      %v2009 = vlaneseq
      %v2010 = vshrl.u32 %v2009, 7
      %v2011 = vsub.s32 %v2008, %v2010
      %v2012 = vrot.slane %v2005, %v2011
      %v2013 = vcombine.low %v2004, %v2012
      %v2015 = vunpack.c.l.s4 1934713408
      %v2016 = vunpack.c.0.s8 %v2015
      %v2017 = vlaneseq
      %v2018 = vshrl.u32 %v2017, 7
      %v2019 = vsub.s32 %v2016, %v2018
      %v2020 = vrot.slane %v2013, %v2019
      %v2021 = vcombine.high %v2020, 0
      %v2022 = vcombine.low %v1893, %v1957
      %v2024 = vunpack.c.l.s4 1983009808
      %v2025 = vunpack.c.0.s8 %v2024
      %v2026 = vlaneseq
      %v2027 = vshrl.u32 %v2026, 7
      %v2028 = vsub.s32 %v2025, %v2027
      %v2029 = vrot.slane %v2022, %v2028
      %v2030 = vcombine.low %v1925, %v1989
      %v2032 = vunpack.c.l.s4 1983009808
      %v2033 = vunpack.c.0.s8 %v2032
      %v2034 = vlaneseq
      %v2035 = vshrl.u32 %v2034, 7
      %v2036 = vsub.s32 %v2033, %v2035
      %v2037 = vrot.slane %v2030, %v2036
      %v2038 = vcombine.low %v2029, %v2037
      %v2040 = vunpack.c.l.s4 1934713408
      %v2041 = vunpack.c.0.s8 %v2040
      %v2042 = vlaneseq
      %v2043 = vshrl.u32 %v2042, 7
      %v2044 = vsub.s32 %v2041, %v2043
      %v2045 = vrot.slane %v2038, %v2044
      %v2046 = vcombine.high %v2045, 0
      %v2049 = vpack.i.b16 %v2045, %v2020
      %v2050 = vshrl.u32 %v2020, 16
      %v2051 = vshrl.u32 %v2045, 16
      %v2052 = vpack.i.b16 %v2051, %v2050
      %v2055 = vpack.i.b16 %v2046, %v2021
      %v2056 = vshrl.u32 %v2021, 16
      %v2057 = vshrl.u32 %v2046, 16
      %v2058 = vpack.i.b16 %v2057, %v2056
      %vm2059 = vcmask 64512
      %v2061 = vsel %vm2059, %v1631, 0
      %vm2063 = vcmask 1043456
      %v2065 = vsel %vm2063, %v2049, 0
      %2067 = vmatprep.subr.bf16.mxu0 0
      %2068 = vmatpush1.bf16.msra.mxu0 %v2065
      %2069 = vmatprep.subr.bf16.mxu0 0
      %2070 = vmatpush1.bf16.msra.mxu0 0
      %2071 = vmatprep.subr.bf16.mxu0 0
      %2072 = vmatpush1.bf16.msra.mxu0 0
      %2073 = vmatprep.subr.bf16.mxu0 0
      %2074 = vmatpush1.bf16.msra.mxu0 0
      %2075 = vmatprep.subr.bf16.mxu0 0
      %2076 = vmatpush1.bf16.msra.mxu0 0
      %2077 = vmatprep.subr.bf16.mxu0 0
      %2078 = vmatpush1.bf16.msra.mxu0 0
      %2079 = vmatprep.subr.bf16.mxu0 0
      %2080 = vmatpush1.bf16.msra.mxu0 0
      %2081 = vmatprep.subr.bf16.mxu0 0
      %2082 = vmatpush1.bf16.msra.mxu0 0
      %2083 = vmatprep.subr.bf16.mxu0 0
      %2084 = vmatpush1.bf16.msra.mxu0 0
      %2085 = vmatprep.subr.bf16.mxu0 0
      %2086 = vmatpush1.bf16.msra.mxu0 0
      %2087 = vmatprep.subr.bf16.mxu0 0
      %2088 = vmatpush1.bf16.msra.mxu0 0
      %2089 = vmatprep.subr.bf16.mxu0 0
      %2090 = vmatpush1.bf16.msra.mxu0 0
      %2091 = vmatprep.subr.bf16.mxu0 0
      %2092 = vmatpush1.bf16.msra.mxu0 0
      %2093 = vmatprep.subr.bf16.mxu0 0
      %2094 = vmatpush1.bf16.msra.mxu0 0
      %2095 = vmatprep.subr.bf16.mxu0 0
      %2096 = vmatpush1.bf16.msra.mxu0 0
      %2097 = vmatprep.subr.bf16.mxu0 0
      %2098 = vmatpush1.bf16.msra.mxu0 0
      %2099 = vmatprep.mubr.bf16.mxu0 0
      %2100 = vmatmul.mubr.bf16.gmra.mrb[0].mxu0 %v2061
      %v2101 = vpop.f32.mrb[0].mxu0
      %v2102 = vadd.f32 0.0, %v2101
      %v2103 = vpop.f32.mrb[0].mxu0
      %v2104 = vpop.f32.mrb[0].mxu0
      %v2105 = vpop.f32.mrb[0].mxu0
      %2106 = vdwg.mxu0
      %v2108 = vsel %vm2059, %v1634, 0
      %v2111 = vsel %vm2063, %v2052, 0
      %2113 = vmatprep.subr.bf16.mxu0 0
      %2114 = vmatpush1.bf16.msra.mxu0 %v2111
      %2115 = vmatprep.subr.bf16.mxu0 0
      %2116 = vmatpush1.bf16.msra.mxu0 0
      %2117 = vmatprep.subr.bf16.mxu0 0
      %2118 = vmatpush1.bf16.msra.mxu0 0
      %2119 = vmatprep.subr.bf16.mxu0 0
      %2120 = vmatpush1.bf16.msra.mxu0 0
      %2121 = vmatprep.subr.bf16.mxu0 0
      %2122 = vmatpush1.bf16.msra.mxu0 0
      %2123 = vmatprep.subr.bf16.mxu0 0
      %2124 = vmatpush1.bf16.msra.mxu0 0
      %2125 = vmatprep.subr.bf16.mxu0 0
      %2126 = vmatpush1.bf16.msra.mxu0 0
      %2127 = vmatprep.subr.bf16.mxu0 0
      %2128 = vmatpush1.bf16.msra.mxu0 0
      %2129 = vmatprep.subr.bf16.mxu0 0
      %2130 = vmatpush1.bf16.msra.mxu0 0
      %2131 = vmatprep.subr.bf16.mxu0 0
      %2132 = vmatpush1.bf16.msra.mxu0 0
      %2133 = vmatprep.subr.bf16.mxu0 0
      %2134 = vmatpush1.bf16.msra.mxu0 0
      %2135 = vmatprep.subr.bf16.mxu0 0
      %2136 = vmatpush1.bf16.msra.mxu0 0
      %2137 = vmatprep.subr.bf16.mxu0 0
      %2138 = vmatpush1.bf16.msra.mxu0 0
      %2139 = vmatprep.subr.bf16.mxu0 0
      %2140 = vmatpush1.bf16.msra.mxu0 0
      %2141 = vmatprep.subr.bf16.mxu0 0
      %2142 = vmatpush1.bf16.msra.mxu0 0
      %2143 = vmatprep.subr.bf16.mxu0 0
      %2144 = vmatpush1.bf16.msra.mxu0 0
      %2145 = vmatprep.mubr.bf16.mxu0 0
      %2146 = vmatmul.mubr.bf16.gmra.mrb[0].mxu0 %v2108
      %v2147 = vpop.f32.mrb[0].mxu0
      %v2148 = vadd.f32 0.0, %v2147
      %v2149 = vpop.f32.mrb[0].mxu0
      %v2150 = vpop.f32.mrb[0].mxu0
      %v2151 = vpop.f32.mrb[0].mxu0
      %2152 = vdwg.mxu0
      %v2154 = vsel %vm2059, %v1637, 0
      %v2157 = vsel %vm2063, %v2055, 0
      %2159 = vmatprep.subr.bf16.mxu0 0
      %2160 = vmatpush1.bf16.msra.mxu0 %v2157
      %2161 = vmatprep.subr.bf16.mxu0 0
      %2162 = vmatpush1.bf16.msra.mxu0 0
      %2163 = vmatprep.subr.bf16.mxu0 0
      %2164 = vmatpush1.bf16.msra.mxu0 0
      %2165 = vmatprep.subr.bf16.mxu0 0
      %2166 = vmatpush1.bf16.msra.mxu0 0
      %2167 = vmatprep.subr.bf16.mxu0 0
      %2168 = vmatpush1.bf16.msra.mxu0 0
      %2169 = vmatprep.subr.bf16.mxu0 0
      %2170 = vmatpush1.bf16.msra.mxu0 0
      %2171 = vmatprep.subr.bf16.mxu0 0
      %2172 = vmatpush1.bf16.msra.mxu0 0
      %2173 = vmatprep.subr.bf16.mxu0 0
      %2174 = vmatpush1.bf16.msra.mxu0 0
      %2175 = vmatprep.subr.bf16.mxu0 0
      %2176 = vmatpush1.bf16.msra.mxu0 0
      %2177 = vmatprep.subr.bf16.mxu0 0
      %2178 = vmatpush1.bf16.msra.mxu0 0
      %2179 = vmatprep.subr.bf16.mxu0 0
      %2180 = vmatpush1.bf16.msra.mxu0 0
      %2181 = vmatprep.subr.bf16.mxu0 0
      %2182 = vmatpush1.bf16.msra.mxu0 0
      %2183 = vmatprep.subr.bf16.mxu0 0
      %2184 = vmatpush1.bf16.msra.mxu0 0
      %2185 = vmatprep.subr.bf16.mxu0 0
      %2186 = vmatpush1.bf16.msra.mxu0 0
      %2187 = vmatprep.subr.bf16.mxu0 0
      %2188 = vmatpush1.bf16.msra.mxu0 0
      %2189 = vmatprep.subr.bf16.mxu0 0
      %2190 = vmatpush1.bf16.msra.mxu0 0
      %2191 = vmatprep.mubr.bf16.mxu0 0
      %2192 = vmatmul.mubr.bf16.gmra.mrb[0].mxu0 %v2154
      %v2193 = vpop.f32.mrb[0].mxu0
      %v2194 = vadd.f32 0.0, %v2193
      %v2195 = vpop.f32.mrb[0].mxu0
      %v2196 = vpop.f32.mrb[0].mxu0
      %v2197 = vpop.f32.mrb[0].mxu0
      %2198 = vdwg.mxu0
      %v2200 = vsel %vm2059, %v1640, 0
      %v2203 = vsel %vm2063, %v2058, 0
      %2205 = vmatprep.subr.bf16.mxu0 0
      %2206 = vmatpush1.bf16.msra.mxu0 %v2203
      %2207 = vmatprep.subr.bf16.mxu0 0
      %2208 = vmatpush1.bf16.msra.mxu0 0
      %2209 = vmatprep.subr.bf16.mxu0 0
      %2210 = vmatpush1.bf16.msra.mxu0 0
      %2211 = vmatprep.subr.bf16.mxu0 0
      %2212 = vmatpush1.bf16.msra.mxu0 0
      %2213 = vmatprep.subr.bf16.mxu0 0
      %2214 = vmatpush1.bf16.msra.mxu0 0
      %2215 = vmatprep.subr.bf16.mxu0 0
      %2216 = vmatpush1.bf16.msra.mxu0 0
      %2217 = vmatprep.subr.bf16.mxu0 0
      %2218 = vmatpush1.bf16.msra.mxu0 0
      %2219 = vmatprep.subr.bf16.mxu0 0
      %2220 = vmatpush1.bf16.msra.mxu0 0
      %2221 = vmatprep.subr.bf16.mxu0 0
      %2222 = vmatpush1.bf16.msra.mxu0 0
      %2223 = vmatprep.subr.bf16.mxu0 0
      %2224 = vmatpush1.bf16.msra.mxu0 0
      %2225 = vmatprep.subr.bf16.mxu0 0
      %2226 = vmatpush1.bf16.msra.mxu0 0
      %2227 = vmatprep.subr.bf16.mxu0 0
      %2228 = vmatpush1.bf16.msra.mxu0 0
      %2229 = vmatprep.subr.bf16.mxu0 0
      %2230 = vmatpush1.bf16.msra.mxu0 0
      %2231 = vmatprep.subr.bf16.mxu0 0
      %2232 = vmatpush1.bf16.msra.mxu0 0
      %2233 = vmatprep.subr.bf16.mxu0 0
      %2234 = vmatpush1.bf16.msra.mxu0 0
      %2235 = vmatprep.subr.bf16.mxu0 0
      %2236 = vmatpush1.bf16.msra.mxu0 0
      %2237 = vmatprep.mubr.bf16.mxu0 0
      %2238 = vmatmul.mubr.bf16.gmra.mrb[0].mxu0 %v2200
      %v2239 = vpop.f32.mrb[0].mxu0
      %v2240 = vadd.f32 0.0, %v2239
      %v2241 = vpop.f32.mrb[0].mxu0
      %v2242 = vpop.f32.mrb[0].mxu0
      %v2243 = vpop.f32.mrb[0].mxu0
      %2244 = vdwg.mxu0
      %v2245 = vmul.f32 %v2102, 0.35355338
      %v2246 = vmul.f32 %v2148, 0.35355338
      %v2247 = vmul.f32 %v2194, 0.35355338
      %v2248 = vmul.f32 %v2240, 0.35355338
      %v2249 = vadd.f32 %v2245, %v1228
      %v2250 = vadd.f32 %v2246, %v1228
      %v2251 = vadd.f32 %v2247, %v1228
      %v2252 = vadd.f32 %v2248, %v1228
      %v2253 = vsel %vm2059, %v2249, -inf
      %2254 = vmax.xlane.f32.xlu0 %v2253
      %v2255 = vpop.xlane.xlu0 %2254
      %v2256 = vsel %vm2059, %v2250, -inf
      %2257 = vmax.xlane.f32.xlu0 %v2256
      %v2258 = vpop.xlane.xlu0 %2257
      %v2259 = vsel %vm2059, %v2251, -inf
      %2260 = vmax.xlane.f32.xlu0 %v2259
      %v2261 = vpop.xlane.xlu0 %2260
      %v2262 = vsel %vm2059, %v2252, -inf
      %2263 = vmax.xlane.f32.xlu0 %v2262
      %v2264 = vpop.xlane.xlu0 %2263
      %v2265 = vsub.f32 %v2249, %v2255
      %v2266 = vsub.f32 %v2250, %v2258
      %v2267 = vsub.f32 %v2251, %v2261
      %v2268 = vsub.f32 %v2252, %v2264
      %v2269 = vmul.f32 %v2265, 1.442695
      %v2270 = vpow.pop %v2269
      %v2271 = vmul.f32 %v2266, 1.442695
      %v2272 = vpow.pop %v2271
      %v2273 = vmul.f32 %v2267, 1.442695
      %v2274 = vpow.pop %v2273
      %v2275 = vmul.f32 %v2268, 1.442695
      %v2276 = vpow.pop %v2275
      %v2277 = vsel %vm2059, %v2270, 0.0
      %2278 = vadd.xlane.f32.xlu0 %v2277
      %v2279 = vpop.xlane.xlu0 %2278
      %v2280 = vsel %vm2059, %v2272, 0.0
      %2281 = vadd.xlane.f32.xlu0 %v2280
      %v2282 = vpop.xlane.xlu0 %2281
      %v2283 = vsel %vm2059, %v2274, 0.0
      %2284 = vadd.xlane.f32.xlu0 %v2283
      %v2285 = vpop.xlane.xlu0 %2284
      %v2286 = vsel %vm2059, %v2276, 0.0
      %2287 = vadd.xlane.f32.xlu0 %v2286
      %v2288 = vpop.xlane.xlu0 %2287
      %v2289 = vrcp.pop %v2279
      %v2290 = vrcp.pop %v2282
      %v2291 = vrcp.pop %v2285
      %v2292 = vrcp.pop %v2288
      %v2293 = vmul.f32 %v2270, %v2289
      %v2294 = vmul.f32 %v2272, %v2290
      %v2295 = vmul.f32 %v2274, %v2291
      %v2296 = vmul.f32 %v2276, %v2292
      %v2297 = vpack.c.bf16 %v2293, %v2293
      %v2298 = vpack.c.bf16 %v2294, %v2294
      %v2299 = vpack.c.bf16 %v2295, %v2295
      %v2300 = vpack.c.bf16 %v2296, %v2296
      %v2301 = vpack.c.bf16 %v1535, %v1535
      %v2302 = vpack.c.bf16 %v1559, %v1559
      %v2303 = vpack.c.bf16 %v1542, %v1542
      %v2304 = vpack.c.bf16 %v1560, %v1560
      %v2305 = vpack.c.bf16 %v1551, %v1551
      %v2306 = vpack.c.bf16 %v1561, %v1561
      %v2307 = vpack.c.bf16 %v1558, %v1558
      %v2308 = vpack.c.bf16 %v1562, %v1562
      %2309 = vxpose.xlu0.c.b16.start [1/8] %v2301, 128
      %2310 = vxpose.xlu0.c.b16.cont [2/8] 0, 128
      %2311 = vxpose.xlu0.c.b16.cont [3/8] 0, 128
      %2312 = vxpose.xlu0.c.b16.cont [4/8] 0, 128
      %2313 = vxpose.xlu0.c.b16.cont [5/8] 0, 128
      %2314 = vxpose.xlu0.c.b16.cont [6/8] 0, 128
      %2315 = vxpose.xlu0.c.b16.cont [7/8] 0, 128
      %2316 = vxpose.xlu0.c.b16.end [8/8] 0, 128
      %v2317 = vpop.trf.xlu0
      %v2318 = vpop.trf.xlu0
      %v2319 = vpop.trf.xlu0
      %v2320 = vpop.trf.xlu0
      %v2321 = vpop.trf.xlu0
      %v2322 = vpop.trf.xlu0
      %v2323 = vpop.trf.xlu0
      %v2324 = vpop.trf.xlu0
      %2325 = vxpose.xlu0.c.b16.start [1/8] %v2302, 128
      %2326 = vxpose.xlu0.c.b16.cont [2/8] 0, 128
      %2327 = vxpose.xlu0.c.b16.cont [3/8] 0, 128
      %2328 = vxpose.xlu0.c.b16.cont [4/8] 0, 128
      %2329 = vxpose.xlu0.c.b16.cont [5/8] 0, 128
      %2330 = vxpose.xlu0.c.b16.cont [6/8] 0, 128
      %2331 = vxpose.xlu0.c.b16.cont [7/8] 0, 128
      %2332 = vxpose.xlu0.c.b16.end [8/8] 0, 128
      %v2333 = vpop.trf.xlu0
      %v2334 = vpop.trf.xlu0
      %v2335 = vpop.trf.xlu0
      %v2336 = vpop.trf.xlu0
      %v2337 = vpop.trf.xlu0
      %v2338 = vpop.trf.xlu0
      %v2339 = vpop.trf.xlu0
      %v2340 = vpop.trf.xlu0
      %2341 = vxpose.xlu0.c.b16.start [1/8] %v2303, 128
      %2342 = vxpose.xlu0.c.b16.cont [2/8] 0, 128
      %2343 = vxpose.xlu0.c.b16.cont [3/8] 0, 128
      %2344 = vxpose.xlu0.c.b16.cont [4/8] 0, 128
      %2345 = vxpose.xlu0.c.b16.cont [5/8] 0, 128
      %2346 = vxpose.xlu0.c.b16.cont [6/8] 0, 128
      %2347 = vxpose.xlu0.c.b16.cont [7/8] 0, 128
      %2348 = vxpose.xlu0.c.b16.end [8/8] 0, 128
      %v2349 = vpop.trf.xlu0
      %v2350 = vpop.trf.xlu0
      %v2351 = vpop.trf.xlu0
      %v2352 = vpop.trf.xlu0
      %v2353 = vpop.trf.xlu0
      %v2354 = vpop.trf.xlu0
      %v2355 = vpop.trf.xlu0
      %v2356 = vpop.trf.xlu0
      %2357 = vxpose.xlu0.c.b16.start [1/8] %v2304, 128
      %2358 = vxpose.xlu0.c.b16.cont [2/8] 0, 128
      %2359 = vxpose.xlu0.c.b16.cont [3/8] 0, 128
      %2360 = vxpose.xlu0.c.b16.cont [4/8] 0, 128
      %2361 = vxpose.xlu0.c.b16.cont [5/8] 0, 128
      %2362 = vxpose.xlu0.c.b16.cont [6/8] 0, 128
      %2363 = vxpose.xlu0.c.b16.cont [7/8] 0, 128
      %2364 = vxpose.xlu0.c.b16.end [8/8] 0, 128
      %v2365 = vpop.trf.xlu0
      %v2366 = vpop.trf.xlu0
      %v2367 = vpop.trf.xlu0
      %v2368 = vpop.trf.xlu0
      %v2369 = vpop.trf.xlu0
      %v2370 = vpop.trf.xlu0
      %v2371 = vpop.trf.xlu0
      %v2372 = vpop.trf.xlu0
      %2373 = vxpose.xlu0.c.b16.start [1/8] %v2305, 128
      %2374 = vxpose.xlu0.c.b16.cont [2/8] 0, 128
      %2375 = vxpose.xlu0.c.b16.cont [3/8] 0, 128
      %2376 = vxpose.xlu0.c.b16.cont [4/8] 0, 128
      %2377 = vxpose.xlu0.c.b16.cont [5/8] 0, 128
      %2378 = vxpose.xlu0.c.b16.cont [6/8] 0, 128
      %2379 = vxpose.xlu0.c.b16.cont [7/8] 0, 128
      %2380 = vxpose.xlu0.c.b16.end [8/8] 0, 128
      %v2381 = vpop.trf.xlu0
      %v2382 = vpop.trf.xlu0
      %v2383 = vpop.trf.xlu0
      %v2384 = vpop.trf.xlu0
      %v2385 = vpop.trf.xlu0
      %v2386 = vpop.trf.xlu0
      %v2387 = vpop.trf.xlu0
      %v2388 = vpop.trf.xlu0
      %2389 = vxpose.xlu0.c.b16.start [1/8] %v2306, 128
      %2390 = vxpose.xlu0.c.b16.cont [2/8] 0, 128
      %2391 = vxpose.xlu0.c.b16.cont [3/8] 0, 128
      %2392 = vxpose.xlu0.c.b16.cont [4/8] 0, 128
      %2393 = vxpose.xlu0.c.b16.cont [5/8] 0, 128
      %2394 = vxpose.xlu0.c.b16.cont [6/8] 0, 128
      %2395 = vxpose.xlu0.c.b16.cont [7/8] 0, 128
      %2396 = vxpose.xlu0.c.b16.end [8/8] 0, 128
      %v2397 = vpop.trf.xlu0
      %v2398 = vpop.trf.xlu0
      %v2399 = vpop.trf.xlu0
      %v2400 = vpop.trf.xlu0
      %v2401 = vpop.trf.xlu0
      %v2402 = vpop.trf.xlu0
      %v2403 = vpop.trf.xlu0
      %v2404 = vpop.trf.xlu0
      %2405 = vxpose.xlu0.c.b16.start [1/8] %v2307, 128
      %2406 = vxpose.xlu0.c.b16.cont [2/8] 0, 128
      %2407 = vxpose.xlu0.c.b16.cont [3/8] 0, 128
      %2408 = vxpose.xlu0.c.b16.cont [4/8] 0, 128
      %2409 = vxpose.xlu0.c.b16.cont [5/8] 0, 128
      %2410 = vxpose.xlu0.c.b16.cont [6/8] 0, 128
      %2411 = vxpose.xlu0.c.b16.cont [7/8] 0, 128
      %2412 = vxpose.xlu0.c.b16.end [8/8] 0, 128
      %v2413 = vpop.trf.xlu0
      %v2414 = vpop.trf.xlu0
      %v2415 = vpop.trf.xlu0
      %v2416 = vpop.trf.xlu0
      %v2417 = vpop.trf.xlu0
      %v2418 = vpop.trf.xlu0
      %v2419 = vpop.trf.xlu0
      %v2420 = vpop.trf.xlu0
      %2421 = vxpose.xlu0.c.b16.start [1/8] %v2308, 128
      %2422 = vxpose.xlu0.c.b16.cont [2/8] 0, 128
      %2423 = vxpose.xlu0.c.b16.cont [3/8] 0, 128
      %2424 = vxpose.xlu0.c.b16.cont [4/8] 0, 128
      %2425 = vxpose.xlu0.c.b16.cont [5/8] 0, 128
      %2426 = vxpose.xlu0.c.b16.cont [6/8] 0, 128
      %2427 = vxpose.xlu0.c.b16.cont [7/8] 0, 128
      %2428 = vxpose.xlu0.c.b16.end [8/8] 0, 128
      %v2429 = vpop.trf.xlu0
      %v2430 = vpop.trf.xlu0
      %v2431 = vpop.trf.xlu0
      %v2432 = vpop.trf.xlu0
      %v2433 = vpop.trf.xlu0
      %v2434 = vpop.trf.xlu0
      %v2435 = vpop.trf.xlu0
      %v2436 = vpop.trf.xlu0
      %v2437 = vcombine.low %v2317, %v2381
      %v2439 = vunpack.c.l.s4 1983009808
      %v2440 = vunpack.c.0.s8 %v2439
      %v2441 = vlaneseq
      %v2442 = vshrl.u32 %v2441, 7
      %v2443 = vsub.s32 %v2440, %v2442
      %v2444 = vrot.slane %v2437, %v2443
      %v2445 = vcombine.low %v2349, %v2413
      %v2447 = vunpack.c.l.s4 1983009808
      %v2448 = vunpack.c.0.s8 %v2447
      %v2449 = vlaneseq
      %v2450 = vshrl.u32 %v2449, 7
      %v2451 = vsub.s32 %v2448, %v2450
      %v2452 = vrot.slane %v2445, %v2451
      %v2453 = vcombine.low %v2444, %v2452
      %v2454 = vcombine.high %v2444, %v2452
      %v2456 = vunpack.c.l.s4 1934713408
      %v2457 = vunpack.c.0.s8 %v2456
      %v2458 = vlaneseq
      %v2459 = vshrl.u32 %v2458, 7
      %v2460 = vsub.s32 %v2457, %v2459
      %v2461 = vrot.slane %v2453, %v2460
      %v2463 = vunpack.c.l.s4 1934713408
      %v2464 = vunpack.c.0.s8 %v2463
      %v2465 = vlaneseq
      %v2466 = vshrl.u32 %v2465, 7
      %v2467 = vsub.s32 %v2464, %v2466
      %v2468 = vrot.slane %v2454, %v2467
      %v2469 = vcombine.high %v2461, 0
      %v2470 = vcombine.high %v2468, 0
      %v2471 = vcombine.low %v2333, %v2397
      %v2473 = vunpack.c.l.s4 1983009808
      %v2474 = vunpack.c.0.s8 %v2473
      %v2475 = vlaneseq
      %v2476 = vshrl.u32 %v2475, 7
      %v2477 = vsub.s32 %v2474, %v2476
      %v2478 = vrot.slane %v2471, %v2477
      %v2479 = vcombine.low %v2365, %v2429
      %v2481 = vunpack.c.l.s4 1983009808
      %v2482 = vunpack.c.0.s8 %v2481
      %v2483 = vlaneseq
      %v2484 = vshrl.u32 %v2483, 7
      %v2485 = vsub.s32 %v2482, %v2484
      %v2486 = vrot.slane %v2479, %v2485
      %v2487 = vcombine.low %v2478, %v2486
      %v2488 = vcombine.high %v2478, %v2486
      %v2490 = vunpack.c.l.s4 1934713408
      %v2491 = vunpack.c.0.s8 %v2490
      %v2492 = vlaneseq
      %v2493 = vshrl.u32 %v2492, 7
      %v2494 = vsub.s32 %v2491, %v2493
      %v2495 = vrot.slane %v2487, %v2494
      %v2497 = vunpack.c.l.s4 1934713408
      %v2498 = vunpack.c.0.s8 %v2497
      %v2499 = vlaneseq
      %v2500 = vshrl.u32 %v2499, 7
      %v2501 = vsub.s32 %v2498, %v2500
      %v2502 = vrot.slane %v2488, %v2501
      %v2503 = vcombine.high %v2495, 0
      %v2504 = vcombine.high %v2502, 0
      %v2507 = vpack.i.b16 %v2495, %v2461
      %v2509 = vshrl.u32 %v2461, 16
      %v2510 = vshrl.u32 %v2495, 16
      %v2511 = vpack.i.b16 %v2510, %v2509
      %v2515 = vpack.i.b16 %v2503, %v2469
      %v2517 = vshrl.u32 %v2469, 16
      %v2518 = vshrl.u32 %v2503, 16
      %v2519 = vpack.i.b16 %v2518, %v2517
      %v2523 = vpack.i.b16 %v2502, %v2468
      %v2525 = vshrl.u32 %v2468, 16
      %v2526 = vshrl.u32 %v2502, 16
      %v2527 = vpack.i.b16 %v2526, %v2525
      %v2531 = vpack.i.b16 %v2504, %v2470
      %v2533 = vshrl.u32 %v2470, 16
      %v2534 = vshrl.u32 %v2504, 16
      %v2535 = vpack.i.b16 %v2534, %v2533
      %2537 = vxpose.xlu0.c.b16.start [1/8] %v2507, 128
      %2538 = vxpose.xlu0.c.b16.cont [2/8] 0, 128
      %2539 = vxpose.xlu0.c.b16.cont [3/8] 0, 128
      %2540 = vxpose.xlu0.c.b16.cont [4/8] 0, 128
      %2541 = vxpose.xlu0.c.b16.cont [5/8] 0, 128
      %2542 = vxpose.xlu0.c.b16.cont [6/8] 0, 128
      %2543 = vxpose.xlu0.c.b16.cont [7/8] 0, 128
      %2544 = vxpose.xlu0.c.b16.end [8/8] 0, 128
      %v2545 = vpop.trf.xlu0
      %v2546 = vpop.trf.xlu0
      %v2547 = vpop.trf.xlu0
      %v2548 = vpop.trf.xlu0
      %v2549 = vpop.trf.xlu0
      %v2550 = vpop.trf.xlu0
      %v2551 = vpop.trf.xlu0
      %v2552 = vpop.trf.xlu0
      %2553 = vxpose.xlu0.c.b16.start [1/8] %v2511, 128
      %2554 = vxpose.xlu0.c.b16.cont [2/8] 0, 128
      %2555 = vxpose.xlu0.c.b16.cont [3/8] 0, 128
      %2556 = vxpose.xlu0.c.b16.cont [4/8] 0, 128
      %2557 = vxpose.xlu0.c.b16.cont [5/8] 0, 128
      %2558 = vxpose.xlu0.c.b16.cont [6/8] 0, 128
      %2559 = vxpose.xlu0.c.b16.cont [7/8] 0, 128
      %2560 = vxpose.xlu0.c.b16.end [8/8] 0, 128
      %v2561 = vpop.trf.xlu0
      %v2562 = vpop.trf.xlu0
      %v2563 = vpop.trf.xlu0
      %v2564 = vpop.trf.xlu0
      %v2565 = vpop.trf.xlu0
      %v2566 = vpop.trf.xlu0
      %v2567 = vpop.trf.xlu0
      %v2568 = vpop.trf.xlu0
      %2569 = vxpose.xlu0.c.b16.start [1/8] %v2515, 128
      %2570 = vxpose.xlu0.c.b16.cont [2/8] 0, 128
      %2571 = vxpose.xlu0.c.b16.cont [3/8] 0, 128
      %2572 = vxpose.xlu0.c.b16.cont [4/8] 0, 128
      %2573 = vxpose.xlu0.c.b16.cont [5/8] 0, 128
      %2574 = vxpose.xlu0.c.b16.cont [6/8] 0, 128
      %2575 = vxpose.xlu0.c.b16.cont [7/8] 0, 128
      %2576 = vxpose.xlu0.c.b16.end [8/8] 0, 128
      %v2577 = vpop.trf.xlu0
      %v2578 = vpop.trf.xlu0
      %v2579 = vpop.trf.xlu0
      %v2580 = vpop.trf.xlu0
      %v2581 = vpop.trf.xlu0
      %v2582 = vpop.trf.xlu0
      %v2583 = vpop.trf.xlu0
      %v2584 = vpop.trf.xlu0
      %2585 = vxpose.xlu0.c.b16.start [1/8] %v2519, 128
      %2586 = vxpose.xlu0.c.b16.cont [2/8] 0, 128
      %2587 = vxpose.xlu0.c.b16.cont [3/8] 0, 128
      %2588 = vxpose.xlu0.c.b16.cont [4/8] 0, 128
      %2589 = vxpose.xlu0.c.b16.cont [5/8] 0, 128
      %2590 = vxpose.xlu0.c.b16.cont [6/8] 0, 128
      %2591 = vxpose.xlu0.c.b16.cont [7/8] 0, 128
      %2592 = vxpose.xlu0.c.b16.end [8/8] 0, 128
      %v2593 = vpop.trf.xlu0
      %v2594 = vpop.trf.xlu0
      %v2595 = vpop.trf.xlu0
      %v2596 = vpop.trf.xlu0
      %v2597 = vpop.trf.xlu0
      %v2598 = vpop.trf.xlu0
      %v2599 = vpop.trf.xlu0
      %v2600 = vpop.trf.xlu0
      %2601 = vxpose.xlu0.c.b16.start [1/8] %v2523, 128
      %2602 = vxpose.xlu0.c.b16.cont [2/8] 0, 128
      %2603 = vxpose.xlu0.c.b16.cont [3/8] 0, 128
      %2604 = vxpose.xlu0.c.b16.cont [4/8] 0, 128
      %2605 = vxpose.xlu0.c.b16.cont [5/8] 0, 128
      %2606 = vxpose.xlu0.c.b16.cont [6/8] 0, 128
      %2607 = vxpose.xlu0.c.b16.cont [7/8] 0, 128
      %2608 = vxpose.xlu0.c.b16.end [8/8] 0, 128
      %v2609 = vpop.trf.xlu0
      %v2610 = vpop.trf.xlu0
      %v2611 = vpop.trf.xlu0
      %v2612 = vpop.trf.xlu0
      %v2613 = vpop.trf.xlu0
      %v2614 = vpop.trf.xlu0
      %v2615 = vpop.trf.xlu0
      %v2616 = vpop.trf.xlu0
      %2617 = vxpose.xlu0.c.b16.start [1/8] %v2527, 128
      %2618 = vxpose.xlu0.c.b16.cont [2/8] 0, 128
      %2619 = vxpose.xlu0.c.b16.cont [3/8] 0, 128
      %2620 = vxpose.xlu0.c.b16.cont [4/8] 0, 128
      %2621 = vxpose.xlu0.c.b16.cont [5/8] 0, 128
      %2622 = vxpose.xlu0.c.b16.cont [6/8] 0, 128
      %2623 = vxpose.xlu0.c.b16.cont [7/8] 0, 128
      %2624 = vxpose.xlu0.c.b16.end [8/8] 0, 128
      %v2625 = vpop.trf.xlu0
      %v2626 = vpop.trf.xlu0
      %v2627 = vpop.trf.xlu0
      %v2628 = vpop.trf.xlu0
      %v2629 = vpop.trf.xlu0
      %v2630 = vpop.trf.xlu0
      %v2631 = vpop.trf.xlu0
      %v2632 = vpop.trf.xlu0
      %2633 = vxpose.xlu0.c.b16.start [1/8] %v2531, 128
      %2634 = vxpose.xlu0.c.b16.cont [2/8] 0, 128
      %2635 = vxpose.xlu0.c.b16.cont [3/8] 0, 128
      %2636 = vxpose.xlu0.c.b16.cont [4/8] 0, 128
      %2637 = vxpose.xlu0.c.b16.cont [5/8] 0, 128
      %2638 = vxpose.xlu0.c.b16.cont [6/8] 0, 128
      %2639 = vxpose.xlu0.c.b16.cont [7/8] 0, 128
      %2640 = vxpose.xlu0.c.b16.end [8/8] 0, 128
      %v2641 = vpop.trf.xlu0
      %v2642 = vpop.trf.xlu0
      %v2643 = vpop.trf.xlu0
      %v2644 = vpop.trf.xlu0
      %v2645 = vpop.trf.xlu0
      %v2646 = vpop.trf.xlu0
      %v2647 = vpop.trf.xlu0
      %v2648 = vpop.trf.xlu0
      %2649 = vxpose.xlu0.c.b16.start [1/8] %v2535, 128
      %2650 = vxpose.xlu0.c.b16.cont [2/8] 0, 128
      %2651 = vxpose.xlu0.c.b16.cont [3/8] 0, 128
      %2652 = vxpose.xlu0.c.b16.cont [4/8] 0, 128
      %2653 = vxpose.xlu0.c.b16.cont [5/8] 0, 128
      %2654 = vxpose.xlu0.c.b16.cont [6/8] 0, 128
      %2655 = vxpose.xlu0.c.b16.cont [7/8] 0, 128
      %2656 = vxpose.xlu0.c.b16.end [8/8] 0, 128
      %v2657 = vpop.trf.xlu0
      %v2658 = vpop.trf.xlu0
      %v2659 = vpop.trf.xlu0
      %v2660 = vpop.trf.xlu0
      %v2661 = vpop.trf.xlu0
      %v2662 = vpop.trf.xlu0
      %v2663 = vpop.trf.xlu0
      %v2664 = vpop.trf.xlu0
      %v2665 = vcombine.low %v2545, %v2609
      %v2667 = vunpack.c.l.s4 1983009808
      %v2668 = vunpack.c.0.s8 %v2667
      %v2669 = vlaneseq
      %v2670 = vshrl.u32 %v2669, 7
      %v2671 = vsub.s32 %v2668, %v2670
      %v2672 = vrot.slane %v2665, %v2671
      %v2673 = vcombine.low %v2577, %v2641
      %v2675 = vunpack.c.l.s4 1983009808
      %v2676 = vunpack.c.0.s8 %v2675
      %v2677 = vlaneseq
      %v2678 = vshrl.u32 %v2677, 7
      %v2679 = vsub.s32 %v2676, %v2678
      %v2680 = vrot.slane %v2673, %v2679
      %v2681 = vcombine.low %v2672, %v2680
      %v2683 = vunpack.c.l.s4 1934713408
      %v2684 = vunpack.c.0.s8 %v2683
      %v2685 = vlaneseq
      %v2686 = vshrl.u32 %v2685, 7
      %v2687 = vsub.s32 %v2684, %v2686
      %v2688 = vrot.slane %v2681, %v2687
      %v2689 = vcombine.high %v2688, 0
      %v2690 = vcombine.low %v2561, %v2625
      %v2692 = vunpack.c.l.s4 1983009808
      %v2693 = vunpack.c.0.s8 %v2692
      %v2694 = vlaneseq
      %v2695 = vshrl.u32 %v2694, 7
      %v2696 = vsub.s32 %v2693, %v2695
      %v2697 = vrot.slane %v2690, %v2696
      %v2698 = vcombine.low %v2593, %v2657
      %v2700 = vunpack.c.l.s4 1983009808
      %v2701 = vunpack.c.0.s8 %v2700
      %v2702 = vlaneseq
      %v2703 = vshrl.u32 %v2702, 7
      %v2704 = vsub.s32 %v2701, %v2703
      %v2705 = vrot.slane %v2698, %v2704
      %v2706 = vcombine.low %v2697, %v2705
      %v2708 = vunpack.c.l.s4 1934713408
      %v2709 = vunpack.c.0.s8 %v2708
      %v2710 = vlaneseq
      %v2711 = vshrl.u32 %v2710, 7
      %v2712 = vsub.s32 %v2709, %v2711
      %v2713 = vrot.slane %v2706, %v2712
      %v2714 = vcombine.high %v2713, 0
      %v2717 = vpack.i.b16 %v2713, %v2688
      %v2718 = vshrl.u32 %v2688, 16
      %v2719 = vshrl.u32 %v2713, 16
      %v2720 = vpack.i.b16 %v2719, %v2718
      %v2723 = vpack.i.b16 %v2714, %v2689
      %v2724 = vshrl.u32 %v2689, 16
      %v2725 = vshrl.u32 %v2714, 16
      %v2726 = vpack.i.b16 %v2725, %v2724
      %v2728 = vsel %vm2059, %v2717, 0
      %v2731 = vsel %vm2059, %v2297, 0
      %2733 = vmatprep.subr.bf16.mxu0 0
      %2734 = vmatpush1.bf16.xpose.msra.mxu0 %v2731
      %2735 = vmatprep.subr.bf16.mxu0 0
      %2736 = vmatpush1.bf16.xpose.msra.mxu0 0
      %2737 = vmatprep.subr.bf16.mxu0 0
      %2738 = vmatpush1.bf16.xpose.msra.mxu0 0
      %2739 = vmatprep.subr.bf16.mxu0 0
      %2740 = vmatpush1.bf16.xpose.msra.mxu0 0
      %2741 = vmatprep.subr.bf16.mxu0 0
      %2742 = vmatpush1.bf16.xpose.msra.mxu0 0
      %2743 = vmatprep.subr.bf16.mxu0 0
      %2744 = vmatpush1.bf16.xpose.msra.mxu0 0
      %2745 = vmatprep.subr.bf16.mxu0 0
      %2746 = vmatpush1.bf16.xpose.msra.mxu0 0
      %2747 = vmatprep.subr.bf16.mxu0 0
      %2748 = vmatpush1.bf16.xpose.msra.mxu0 0
      %2749 = vmatprep.subr.bf16.mxu0 0
      %2750 = vmatpush1.bf16.xpose.msra.mxu0 0
      %2751 = vmatprep.subr.bf16.mxu0 0
      %2752 = vmatpush1.bf16.xpose.msra.mxu0 0
      %2753 = vmatprep.subr.bf16.mxu0 0
      %2754 = vmatpush1.bf16.xpose.msra.mxu0 0
      %2755 = vmatprep.subr.bf16.mxu0 0
      %2756 = vmatpush1.bf16.xpose.msra.mxu0 0
      %2757 = vmatprep.subr.bf16.mxu0 0
      %2758 = vmatpush1.bf16.xpose.msra.mxu0 0
      %2759 = vmatprep.subr.bf16.mxu0 0
      %2760 = vmatpush1.bf16.xpose.msra.mxu0 0
      %2761 = vmatprep.subr.bf16.mxu0 0
      %2762 = vmatpush1.bf16.xpose.msra.mxu0 0
      %2763 = vmatprep.subr.bf16.mxu0 0
      %2764 = vmatpush1.bf16.xpose.msra.mxu0 0
      %2765 = vmatprep.mubr.bf16.mxu0 0
      %2766 = vmatmul.mubr.bf16.gmra.mrb[0].mxu0 %v2728
      %v2767 = vpop.f32.mrb[0].mxu0
      %v2768 = vadd.f32 0.0, %v2767
      %v2769 = vpop.f32.mrb[0].mxu0
      %v2770 = vpop.f32.mrb[0].mxu0
      %v2771 = vpop.f32.mrb[0].mxu0
      %2772 = vdwg.mxu0
      %v2774 = vsel %vm2059, %v2720, 0
      %v2777 = vsel %vm2059, %v2298, 0
      %2779 = vmatprep.subr.bf16.mxu0 0
      %2780 = vmatpush1.bf16.xpose.msra.mxu0 %v2777
      %2781 = vmatprep.subr.bf16.mxu0 0
      %2782 = vmatpush1.bf16.xpose.msra.mxu0 0
      %2783 = vmatprep.subr.bf16.mxu0 0
      %2784 = vmatpush1.bf16.xpose.msra.mxu0 0
      %2785 = vmatprep.subr.bf16.mxu0 0
      %2786 = vmatpush1.bf16.xpose.msra.mxu0 0
      %2787 = vmatprep.subr.bf16.mxu0 0
      %2788 = vmatpush1.bf16.xpose.msra.mxu0 0
      %2789 = vmatprep.subr.bf16.mxu0 0
      %2790 = vmatpush1.bf16.xpose.msra.mxu0 0
      %2791 = vmatprep.subr.bf16.mxu0 0
      %2792 = vmatpush1.bf16.xpose.msra.mxu0 0
      %2793 = vmatprep.subr.bf16.mxu0 0
      %2794 = vmatpush1.bf16.xpose.msra.mxu0 0
      %2795 = vmatprep.subr.bf16.mxu0 0
      %2796 = vmatpush1.bf16.xpose.msra.mxu0 0
      %2797 = vmatprep.subr.bf16.mxu0 0
      %2798 = vmatpush1.bf16.xpose.msra.mxu0 0
      %2799 = vmatprep.subr.bf16.mxu0 0
      %2800 = vmatpush1.bf16.xpose.msra.mxu0 0
      %2801 = vmatprep.subr.bf16.mxu0 0
      %2802 = vmatpush1.bf16.xpose.msra.mxu0 0
      %2803 = vmatprep.subr.bf16.mxu0 0
      %2804 = vmatpush1.bf16.xpose.msra.mxu0 0
      %2805 = vmatprep.subr.bf16.mxu0 0
      %2806 = vmatpush1.bf16.xpose.msra.mxu0 0
      %2807 = vmatprep.subr.bf16.mxu0 0
      %2808 = vmatpush1.bf16.xpose.msra.mxu0 0
      %2809 = vmatprep.subr.bf16.mxu0 0
      %2810 = vmatpush1.bf16.xpose.msra.mxu0 0
      %2811 = vmatprep.mubr.bf16.mxu0 0
      %2812 = vmatmul.mubr.bf16.gmra.mrb[0].mxu0 %v2774
      %v2813 = vpop.f32.mrb[0].mxu0
      %v2814 = vadd.f32 0.0, %v2813
      %v2815 = vpop.f32.mrb[0].mxu0
      %v2816 = vpop.f32.mrb[0].mxu0
      %v2817 = vpop.f32.mrb[0].mxu0
      %2818 = vdwg.mxu0
      %v2820 = vsel %vm2059, %v2723, 0
      %v2823 = vsel %vm2059, %v2299, 0
      %2825 = vmatprep.subr.bf16.mxu0 0
      %2826 = vmatpush1.bf16.xpose.msra.mxu0 %v2823
      %2827 = vmatprep.subr.bf16.mxu0 0
      %2828 = vmatpush1.bf16.xpose.msra.mxu0 0
      %2829 = vmatprep.subr.bf16.mxu0 0
      %2830 = vmatpush1.bf16.xpose.msra.mxu0 0
      %2831 = vmatprep.subr.bf16.mxu0 0
      %2832 = vmatpush1.bf16.xpose.msra.mxu0 0
      %2833 = vmatprep.subr.bf16.mxu0 0
      %2834 = vmatpush1.bf16.xpose.msra.mxu0 0
      %2835 = vmatprep.subr.bf16.mxu0 0
      %2836 = vmatpush1.bf16.xpose.msra.mxu0 0
      %2837 = vmatprep.subr.bf16.mxu0 0
      %2838 = vmatpush1.bf16.xpose.msra.mxu0 0
      %2839 = vmatprep.subr.bf16.mxu0 0
      %2840 = vmatpush1.bf16.xpose.msra.mxu0 0
      %2841 = vmatprep.subr.bf16.mxu0 0
      %2842 = vmatpush1.bf16.xpose.msra.mxu0 0
      %2843 = vmatprep.subr.bf16.mxu0 0
      %2844 = vmatpush1.bf16.xpose.msra.mxu0 0
      %2845 = vmatprep.subr.bf16.mxu0 0
      %2846 = vmatpush1.bf16.xpose.msra.mxu0 0
      %2847 = vmatprep.subr.bf16.mxu0 0
      %2848 = vmatpush1.bf16.xpose.msra.mxu0 0
      %2849 = vmatprep.subr.bf16.mxu0 0
      %2850 = vmatpush1.bf16.xpose.msra.mxu0 0
      %2851 = vmatprep.subr.bf16.mxu0 0
      %2852 = vmatpush1.bf16.xpose.msra.mxu0 0
      %2853 = vmatprep.subr.bf16.mxu0 0
      %2854 = vmatpush1.bf16.xpose.msra.mxu0 0
      %2855 = vmatprep.subr.bf16.mxu0 0
      %2856 = vmatpush1.bf16.xpose.msra.mxu0 0
      %2857 = vmatprep.mubr.bf16.mxu0 0
      %2858 = vmatmul.mubr.bf16.gmra.mrb[0].mxu0 %v2820
      %v2859 = vpop.f32.mrb[0].mxu0
      %v2860 = vadd.f32 0.0, %v2859
      %v2861 = vpop.f32.mrb[0].mxu0
      %v2862 = vpop.f32.mrb[0].mxu0
      %v2863 = vpop.f32.mrb[0].mxu0
      %2864 = vdwg.mxu0
      %v2866 = vsel %vm2059, %v2726, 0
      %v2869 = vsel %vm2059, %v2300, 0
      %2871 = vmatprep.subr.bf16.mxu0 0
      %2872 = vmatpush1.bf16.xpose.msra.mxu0 %v2869
      %2873 = vmatprep.subr.bf16.mxu0 0
      %2874 = vmatpush1.bf16.xpose.msra.mxu0 0
      %2875 = vmatprep.subr.bf16.mxu0 0
      %2876 = vmatpush1.bf16.xpose.msra.mxu0 0
      %2877 = vmatprep.subr.bf16.mxu0 0
      %2878 = vmatpush1.bf16.xpose.msra.mxu0 0
      %2879 = vmatprep.subr.bf16.mxu0 0
      %2880 = vmatpush1.bf16.xpose.msra.mxu0 0
      %2881 = vmatprep.subr.bf16.mxu0 0
      %2882 = vmatpush1.bf16.xpose.msra.mxu0 0
      %2883 = vmatprep.subr.bf16.mxu0 0
      %2884 = vmatpush1.bf16.xpose.msra.mxu0 0
      %2885 = vmatprep.subr.bf16.mxu0 0
      %2886 = vmatpush1.bf16.xpose.msra.mxu0 0
      %2887 = vmatprep.subr.bf16.mxu0 0
      %2888 = vmatpush1.bf16.xpose.msra.mxu0 0
      %2889 = vmatprep.subr.bf16.mxu0 0
      %2890 = vmatpush1.bf16.xpose.msra.mxu0 0
      %2891 = vmatprep.subr.bf16.mxu0 0
      %2892 = vmatpush1.bf16.xpose.msra.mxu0 0
      %2893 = vmatprep.subr.bf16.mxu0 0
      %2894 = vmatpush1.bf16.xpose.msra.mxu0 0
      %2895 = vmatprep.subr.bf16.mxu0 0
      %2896 = vmatpush1.bf16.xpose.msra.mxu0 0
      %2897 = vmatprep.subr.bf16.mxu0 0
      %2898 = vmatpush1.bf16.xpose.msra.mxu0 0
      %2899 = vmatprep.subr.bf16.mxu0 0
      %2900 = vmatpush1.bf16.xpose.msra.mxu0 0
      %2901 = vmatprep.subr.bf16.mxu0 0
      %2902 = vmatpush1.bf16.xpose.msra.mxu0 0
      %2903 = vmatprep.mubr.bf16.mxu0 0
      %2904 = vmatmul.mubr.bf16.gmra.mrb[0].mxu0 %v2866
      %v2905 = vpop.f32.mrb[0].mxu0
      %v2906 = vadd.f32 0.0, %v2905
      %v2907 = vpop.f32.mrb[0].mxu0
      %v2908 = vpop.f32.mrb[0].mxu0
      %v2909 = vpop.f32.mrb[0].mxu0
      %2910 = vdwg.mxu0
      %2911 = vxpose.xlu0.b32.start [1/16] %v2768, 128
      %2912 = vxpose.xlu0.b32.cont [2/16] 0.0, 128
      %2913 = vxpose.xlu0.b32.cont [3/16] 0.0, 128
      %2914 = vxpose.xlu0.b32.cont [4/16] 0.0, 128
      %2915 = vxpose.xlu0.b32.cont [5/16] 0.0, 128
      %2916 = vxpose.xlu0.b32.cont [6/16] 0.0, 128
      %2917 = vxpose.xlu0.b32.cont [7/16] 0.0, 128
      %2918 = vxpose.xlu0.b32.cont [8/16] 0.0, 128
      %2919 = vxpose.xlu0.b32.cont [9/16] 0.0, 128
      %2920 = vxpose.xlu0.b32.cont [10/16] 0.0, 128
      %2921 = vxpose.xlu0.b32.cont [11/16] 0.0, 128
      %2922 = vxpose.xlu0.b32.cont [12/16] 0.0, 128
      %2923 = vxpose.xlu0.b32.cont [13/16] 0.0, 128
      %2924 = vxpose.xlu0.b32.cont [14/16] 0.0, 128
      %2925 = vxpose.xlu0.b32.cont [15/16] 0.0, 128
      %2926 = vxpose.xlu0.b32.end [16/16] 0.0, 128
      %v2927 = vpop.trf.xlu0
      %v2928 = vpop.trf.xlu0
      %v2929 = vpop.trf.xlu0
      %v2930 = vpop.trf.xlu0
      %v2931 = vpop.trf.xlu0
      %v2932 = vpop.trf.xlu0
      %v2933 = vpop.trf.xlu0
      %v2934 = vpop.trf.xlu0
      %v2935 = vpop.trf.xlu0
      %v2936 = vpop.trf.xlu0
      %v2937 = vpop.trf.xlu0
      %v2938 = vpop.trf.xlu0
      %v2939 = vpop.trf.xlu0
      %v2940 = vpop.trf.xlu0
      %v2941 = vpop.trf.xlu0
      %v2942 = vpop.trf.xlu0
      %2943 = vxpose.xlu0.b32.start [1/16] %v2814, 128
      %2944 = vxpose.xlu0.b32.cont [2/16] 0.0, 128
      %2945 = vxpose.xlu0.b32.cont [3/16] 0.0, 128
      %2946 = vxpose.xlu0.b32.cont [4/16] 0.0, 128
      %2947 = vxpose.xlu0.b32.cont [5/16] 0.0, 128
      %2948 = vxpose.xlu0.b32.cont [6/16] 0.0, 128
      %2949 = vxpose.xlu0.b32.cont [7/16] 0.0, 128
      %2950 = vxpose.xlu0.b32.cont [8/16] 0.0, 128
      %2951 = vxpose.xlu0.b32.cont [9/16] 0.0, 128
      %2952 = vxpose.xlu0.b32.cont [10/16] 0.0, 128
      %2953 = vxpose.xlu0.b32.cont [11/16] 0.0, 128
      %2954 = vxpose.xlu0.b32.cont [12/16] 0.0, 128
      %2955 = vxpose.xlu0.b32.cont [13/16] 0.0, 128
      %2956 = vxpose.xlu0.b32.cont [14/16] 0.0, 128
      %2957 = vxpose.xlu0.b32.cont [15/16] 0.0, 128
      %2958 = vxpose.xlu0.b32.end [16/16] 0.0, 128
      %v2959 = vpop.trf.xlu0
      %v2960 = vpop.trf.xlu0
      %v2961 = vpop.trf.xlu0
      %v2962 = vpop.trf.xlu0
      %v2963 = vpop.trf.xlu0
      %v2964 = vpop.trf.xlu0
      %v2965 = vpop.trf.xlu0
      %v2966 = vpop.trf.xlu0
      %v2967 = vpop.trf.xlu0
      %v2968 = vpop.trf.xlu0
      %v2969 = vpop.trf.xlu0
      %v2970 = vpop.trf.xlu0
      %v2971 = vpop.trf.xlu0
      %v2972 = vpop.trf.xlu0
      %v2973 = vpop.trf.xlu0
      %v2974 = vpop.trf.xlu0
      %2975 = vxpose.xlu0.b32.start [1/16] %v2860, 128
      %2976 = vxpose.xlu0.b32.cont [2/16] 0.0, 128
      %2977 = vxpose.xlu0.b32.cont [3/16] 0.0, 128
      %2978 = vxpose.xlu0.b32.cont [4/16] 0.0, 128
      %2979 = vxpose.xlu0.b32.cont [5/16] 0.0, 128
      %2980 = vxpose.xlu0.b32.cont [6/16] 0.0, 128
      %2981 = vxpose.xlu0.b32.cont [7/16] 0.0, 128
      %2982 = vxpose.xlu0.b32.cont [8/16] 0.0, 128
      %2983 = vxpose.xlu0.b32.cont [9/16] 0.0, 128
      %2984 = vxpose.xlu0.b32.cont [10/16] 0.0, 128
      %2985 = vxpose.xlu0.b32.cont [11/16] 0.0, 128
      %2986 = vxpose.xlu0.b32.cont [12/16] 0.0, 128
      %2987 = vxpose.xlu0.b32.cont [13/16] 0.0, 128
      %2988 = vxpose.xlu0.b32.cont [14/16] 0.0, 128
      %2989 = vxpose.xlu0.b32.cont [15/16] 0.0, 128
      %2990 = vxpose.xlu0.b32.end [16/16] 0.0, 128
      %v2991 = vpop.trf.xlu0
      %v2992 = vpop.trf.xlu0
      %v2993 = vpop.trf.xlu0
      %v2994 = vpop.trf.xlu0
      %v2995 = vpop.trf.xlu0
      %v2996 = vpop.trf.xlu0
      %v2997 = vpop.trf.xlu0
      %v2998 = vpop.trf.xlu0
      %v2999 = vpop.trf.xlu0
      %v3000 = vpop.trf.xlu0
      %v3001 = vpop.trf.xlu0
      %v3002 = vpop.trf.xlu0
      %v3003 = vpop.trf.xlu0
      %v3004 = vpop.trf.xlu0
      %v3005 = vpop.trf.xlu0
      %v3006 = vpop.trf.xlu0
      %3007 = vxpose.xlu0.b32.start [1/16] %v2906, 128
      %3008 = vxpose.xlu0.b32.cont [2/16] 0.0, 128
      %3009 = vxpose.xlu0.b32.cont [3/16] 0.0, 128
      %3010 = vxpose.xlu0.b32.cont [4/16] 0.0, 128
      %3011 = vxpose.xlu0.b32.cont [5/16] 0.0, 128
      %3012 = vxpose.xlu0.b32.cont [6/16] 0.0, 128
      %3013 = vxpose.xlu0.b32.cont [7/16] 0.0, 128
      %3014 = vxpose.xlu0.b32.cont [8/16] 0.0, 128
      %3015 = vxpose.xlu0.b32.cont [9/16] 0.0, 128
      %3016 = vxpose.xlu0.b32.cont [10/16] 0.0, 128
      %3017 = vxpose.xlu0.b32.cont [11/16] 0.0, 128
      %3018 = vxpose.xlu0.b32.cont [12/16] 0.0, 128
      %3019 = vxpose.xlu0.b32.cont [13/16] 0.0, 128
      %3020 = vxpose.xlu0.b32.cont [14/16] 0.0, 128
      %3021 = vxpose.xlu0.b32.cont [15/16] 0.0, 128
      %3022 = vxpose.xlu0.b32.end [16/16] 0.0, 128
      %v3023 = vpop.trf.xlu0
      %v3024 = vpop.trf.xlu0
      %v3025 = vpop.trf.xlu0
      %v3026 = vpop.trf.xlu0
      %v3027 = vpop.trf.xlu0
      %v3028 = vpop.trf.xlu0
      %v3029 = vpop.trf.xlu0
      %v3030 = vpop.trf.xlu0
      %v3031 = vpop.trf.xlu0
      %v3032 = vpop.trf.xlu0
      %v3033 = vpop.trf.xlu0
      %v3034 = vpop.trf.xlu0
      %v3035 = vpop.trf.xlu0
      %v3036 = vpop.trf.xlu0
      %v3037 = vpop.trf.xlu0
      %v3038 = vpop.trf.xlu0
      %v3039 = vcombine.low %v2927, %v2991
      %v3040 = vcombine.high %v2927, %v2991
      %v3042 = vunpack.c.l.s4 1983009808
      %v3043 = vunpack.c.0.s8 %v3042
      %v3044 = vlaneseq
      %v3045 = vshrl.u32 %v3044, 7
      %v3046 = vsub.s32 %v3043, %v3045
      %v3047 = vrot.slane %v3039, %v3046
      %v3049 = vunpack.c.l.s4 1983009808
      %v3050 = vunpack.c.0.s8 %v3049
      %v3051 = vlaneseq
      %v3052 = vshrl.u32 %v3051, 7
      %v3053 = vsub.s32 %v3050, %v3052
      %v3054 = vrot.slane %v3040, %v3053
      %v3055 = vcombine.low %v2959, %v3023
      %v3056 = vcombine.high %v2959, %v3023
      %v3058 = vunpack.c.l.s4 1983009808
      %v3059 = vunpack.c.0.s8 %v3058
      %v3060 = vlaneseq
      %v3061 = vshrl.u32 %v3060, 7
      %v3062 = vsub.s32 %v3059, %v3061
      %v3063 = vrot.slane %v3055, %v3062
      %v3065 = vunpack.c.l.s4 1983009808
      %v3066 = vunpack.c.0.s8 %v3065
      %v3067 = vlaneseq
      %v3068 = vshrl.u32 %v3067, 7
      %v3069 = vsub.s32 %v3066, %v3068
      %v3070 = vrot.slane %v3056, %v3069
      %v3071 = vcombine.low %v3047, %v3063
      %v3072 = vcombine.high %v3047, %v3063
      %v3074 = vunpack.c.l.s4 1934713408
      %v3075 = vunpack.c.0.s8 %v3074
      %v3076 = vlaneseq
      %v3077 = vshrl.u32 %v3076, 7
      %v3078 = vsub.s32 %v3075, %v3077
      %v3079 = vrot.slane %v3071, %v3078
      %v3081 = vunpack.c.l.s4 1934713408
      %v3082 = vunpack.c.0.s8 %v3081
      %v3083 = vlaneseq
      %v3084 = vshrl.u32 %v3083, 7
      %v3085 = vsub.s32 %v3082, %v3084
      %v3086 = vrot.slane %v3072, %v3085
      %v3087 = vcombine.low %v3054, %v3070
      %v3088 = vcombine.high %v3054, %v3070
      %v3090 = vunpack.c.l.s4 1934713408
      %v3091 = vunpack.c.0.s8 %v3090
      %v3092 = vlaneseq
      %v3093 = vshrl.u32 %v3092, 7
      %v3094 = vsub.s32 %v3091, %v3093
      %v3095 = vrot.slane %v3087, %v3094
      %v3097 = vunpack.c.l.s4 1934713408
      %v3098 = vunpack.c.0.s8 %v3097
      %v3099 = vlaneseq
      %v3100 = vshrl.u32 %v3099, 7
      %v3101 = vsub.s32 %v3098, %v3100
      %v3102 = vrot.slane %v3088, %v3101
      %v3103 = vcombine.high %v3079, 0.0
      %v3104 = vcombine.high %v3086, 0.0
      %v3105 = vcombine.high %v3095, 0.0
      %v3106 = vcombine.high %v3102, 0.0
      %v3107 = vcombine.low %v3079, %v3086
      %v3109 = vunpack.c.l.s4 1983009808
      %v3110 = vunpack.c.0.s8 %v3109
      %v3111 = vlaneseq
      %v3112 = vshrl.u32 %v3111, 7
      %v3113 = vsub.s32 %v3110, %v3112
      %v3114 = vrot.slane %v3107, %v3113
      %v3115 = vcombine.low %v3103, %v3104
      %v3117 = vunpack.c.l.s4 1983009808
      %v3118 = vunpack.c.0.s8 %v3117
      %v3119 = vlaneseq
      %v3120 = vshrl.u32 %v3119, 7
      %v3121 = vsub.s32 %v3118, %v3120
      %v3122 = vrot.slane %v3115, %v3121
      %v3123 = vcombine.low %v3095, %v3102
      %v3125 = vunpack.c.l.s4 1983009808
      %v3126 = vunpack.c.0.s8 %v3125
      %v3127 = vlaneseq
      %v3128 = vshrl.u32 %v3127, 7
      %v3129 = vsub.s32 %v3126, %v3128
      %v3130 = vrot.slane %v3123, %v3129
      %v3131 = vcombine.low %v3105, %v3106
      %v3133 = vunpack.c.l.s4 1983009808
      %v3134 = vunpack.c.0.s8 %v3133
      %v3135 = vlaneseq
      %v3136 = vshrl.u32 %v3135, 7
      %v3137 = vsub.s32 %v3134, %v3136
      %v3138 = vrot.slane %v3131, %v3137
      %v3139 = vcombine.low %v3114, %v3122
      %v3140 = vcombine.high %v3114, %v3122
      %v3142 = vunpack.c.l.s4 1934713408
      %v3143 = vunpack.c.0.s8 %v3142
      %v3144 = vlaneseq
      %v3145 = vshrl.u32 %v3144, 7
      %v3146 = vsub.s32 %v3143, %v3145
      %v3147 = vrot.slane %v3139, %v3146
      %v3149 = vunpack.c.l.s4 1934713408
      %v3150 = vunpack.c.0.s8 %v3149
      %v3151 = vlaneseq
      %v3152 = vshrl.u32 %v3151, 7
      %v3153 = vsub.s32 %v3150, %v3152
      %v3154 = vrot.slane %v3140, %v3153
      %v3155 = vcombine.low %v3130, %v3138
      %v3156 = vcombine.high %v3130, %v3138
      %v3158 = vunpack.c.l.s4 1934713408
      %v3159 = vunpack.c.0.s8 %v3158
      %v3160 = vlaneseq
      %v3161 = vshrl.u32 %v3160, 7
      %v3162 = vsub.s32 %v3159, %v3161
      %v3163 = vrot.slane %v3155, %v3162
      %v3165 = vunpack.c.l.s4 1934713408
      %v3166 = vunpack.c.0.s8 %v3165
      %v3167 = vlaneseq
      %v3168 = vshrl.u32 %v3167, 7
      %v3169 = vsub.s32 %v3166, %v3168
      %v3170 = vrot.slane %v3156, %v3169
      %v3171 = vcombine.low %v3147, %v3163
      %v3172 = vcombine.high %v3147, %v3163
      %v3173 = vcombine.low %v3154, %v3170
      %v3174 = vcombine.high %v3154, %v3170
      %3176 = vrot.lane.b32.xlu0 %v3172, 8
      %v3177 = vpop.permute.xlu0 %3176
      %3180 = vrot.lane.b32.xlu0 %v3173, 16
      %v3181 = vpop.permute.xlu0 %3180
      %3184 = vrot.lane.b32.xlu0 %v3174, 24
      %v3185 = vpop.permute.xlu0 %3184
      %v3187 = vsel %vm2059, %v3171, %v3177
      %vm3188 = vcmask 130048
      %v3189 = vsel %vm3188, %v3187, %v3181
      %vm3190 = vcmask 195584
      %v3191 = vsel %vm3190, %v3189, %v3185
      %v3192 = vpack.c.bf16 %v3191, %v3191
      %v3193 = vld [vmem:[%s10] sm:$0xf]
      %v3194 = vld [vmem:[%s10 + $0x4] sm:$0xf]
      %v3195 = vld [vmem:[%s10 + $0x8] sm:$0xf]
      %v3196 = vld [vmem:[%s10 + $0xc] sm:$0xf]
      %v3201 = vunpack.c.l.b16 %v3193
      %v3202 = vunpack.c.l.b16 %v3194
      %v3203 = vunpack.c.l.b16 %v3195
      %v3204 = vunpack.c.l.b16 %v3196
      %v3205 = vpack.c.b16 %v3202, %v3201
      %v3206 = vpack.c.b16 %v3204, %v3203
      %v3210 = vsel %vm1196, %v3192, 0
      %3212 = vmatprep.subr.bf16.mxu0 0
      %3213 = vmatpush1.bf16.msra.mxu0 %v3205
      %3214 = vmatprep.subr.bf16.mxu0 0
      %3215 = vmatpush1.bf16.msra.mxu0 %v3206
      %3216 = vmatprep.subr.bf16.mxu0 0
      %3217 = vmatpush1.bf16.msra.mxu0 0
      %3218 = vmatprep.subr.bf16.mxu0 0
      %3219 = vmatpush1.bf16.msra.mxu0 0
      %3220 = vmatprep.subr.bf16.mxu0 0
      %3221 = vmatpush1.bf16.msra.mxu0 0
      %3222 = vmatprep.subr.bf16.mxu0 0
      %3223 = vmatpush1.bf16.msra.mxu0 0
      %3224 = vmatprep.subr.bf16.mxu0 0
      %3225 = vmatpush1.bf16.msra.mxu0 0
      %3226 = vmatprep.subr.bf16.mxu0 0
      %3227 = vmatpush1.bf16.msra.mxu0 0
      %3228 = vmatprep.subr.bf16.mxu0 0
      %3229 = vmatpush1.bf16.msra.mxu0 0
      %3230 = vmatprep.subr.bf16.mxu0 0
      %3231 = vmatpush1.bf16.msra.mxu0 0
      %3232 = vmatprep.subr.bf16.mxu0 0
      %3233 = vmatpush1.bf16.msra.mxu0 0
      %3234 = vmatprep.subr.bf16.mxu0 0
      %3235 = vmatpush1.bf16.msra.mxu0 0
      %3236 = vmatprep.subr.bf16.mxu0 0
      %3237 = vmatpush1.bf16.msra.mxu0 0
      %3238 = vmatprep.subr.bf16.mxu0 0
      %3239 = vmatpush1.bf16.msra.mxu0 0
      %3240 = vmatprep.subr.bf16.mxu0 0
      %3241 = vmatpush1.bf16.msra.mxu0 0
      %3242 = vmatprep.subr.bf16.mxu0 0
      %3243 = vmatpush1.bf16.msra.mxu0 0
      %3244 = vmatprep.mubr.bf16.mxu0 0
      %3245 = vmatmul.mubr.bf16.gmra.mrb[0].mxu0 %v3210
      %v3246 = vpop.f32.mrb[0].mxu0
      %v3247 = vadd.f32 0.0, %v3246
      %v3248 = vpop.f32.mrb[0].mxu0
      %v3249 = vpop.f32.mrb[0].mxu0
      %v3250 = vpop.f32.mrb[0].mxu0
      %3251 = vdwg.mxu0
      %v3252 = vadd.f32 %v1224, %v3247
      %v3253 = vld [vmem:[%s11] sm:$0x1]
      %v3255 = vlaneseq
      %v3256 = vshrl.u32 %v3255, 7
      %v3257 = vsub.s32 0, %v3256
      %v3258 = vrot.slane %v3253, %v3257
      %v3260 = vadd.f32 %v3252, %v3258
      %v3261 = vld [vmem:[%s12] sm:$0x1]
      %v3262 = vld [vmem:[%s13] sm:$0x1]
      %v3263 = vsel %vm1196, %v3260, 0.0
      %3264 = vadd.xlane.f32.xlu0 %v3263
      %v3265 = vpop.xlane.xlu0 %3264
      %v3266 = vmul.f32 %v3265, %v1200
      %v3267 = vsub.f32 %v3260, %v3266
      %v3268 = vmul.f32 %v3267, %v3267
      %v3269 = vsel %vm1196, %v3268, 0.0
      %3270 = vadd.xlane.f32.xlu0 %v3269
      %v3271 = vpop.xlane.xlu0 %3270
      %v3272 = vmul.f32 %v3271, %v1200
      %v3273 = vadd.f32 %v3272, 1e-05
      %v3274 = vrsqrt.pop %v3273
      %v3275 = vmul.f32 %v3267, %v3274
      %v3277 = vlaneseq
      %v3278 = vshrl.u32 %v3277, 7
      %v3279 = vsub.s32 0, %v3278
      %v3280 = vrot.slane %v3261, %v3279
      %v3282 = vmul.f32 %v3275, %v3280
      %v3284 = vlaneseq
      %v3285 = vshrl.u32 %v3284, 7
      %v3286 = vsub.s32 0, %v3285
      %v3287 = vrot.slane %v3262, %v3286
      %v3289 = vadd.f32 %v3282, %v3287
      %v3290 = vpack.c.bf16 %v3289, %v3289
      %v3291 = vld [vmem:[%s14] sm:$0xf]
      %v3292 = vld [vmem:[%s14 + $0x4] sm:$0xf]
      %v3293 = vld [vmem:[%s14 + $0x8] sm:$0xf]
      %v3294 = vld [vmem:[%s14 + $0xc] sm:$0xf]
      %v3295 = vld [vmem:[%s15] sm:$0x1]
      %v3297 = vlaneseq
      %v3298 = vshrl.u32 %v3297, 7
      %v3299 = vsub.s32 0, %v3298
      %v3300 = vrot.slane %v3295, %v3299
      %v3306 = vunpack.c.l.b16 %v3291
      %v3307 = vunpack.c.l.b16 %v3292
      %v3308 = vunpack.c.l.b16 %v3293
      %v3309 = vunpack.c.l.b16 %v3294
      %v3310 = vpack.c.b16 %v3307, %v3306
      %v3311 = vpack.c.b16 %v3309, %v3308
      %v3315 = vsel %vm1196, %v3290, 0
      %3317 = vmatprep.subr.bf16.mxu0 0
      %3318 = vmatpush1.bf16.msra.mxu0 %v3310
      %3319 = vmatprep.subr.bf16.mxu0 0
      %3320 = vmatpush1.bf16.msra.mxu0 %v3311
      %3321 = vmatprep.subr.bf16.mxu0 0
      %3322 = vmatpush1.bf16.msra.mxu0 0
      %3323 = vmatprep.subr.bf16.mxu0 0
      %3324 = vmatpush1.bf16.msra.mxu0 0
      %3325 = vmatprep.subr.bf16.mxu0 0
      %3326 = vmatpush1.bf16.msra.mxu0 0
      %3327 = vmatprep.subr.bf16.mxu0 0
      %3328 = vmatpush1.bf16.msra.mxu0 0
      %3329 = vmatprep.subr.bf16.mxu0 0
      %3330 = vmatpush1.bf16.msra.mxu0 0
      %3331 = vmatprep.subr.bf16.mxu0 0
      %3332 = vmatpush1.bf16.msra.mxu0 0
      %3333 = vmatprep.subr.bf16.mxu0 0
      %3334 = vmatpush1.bf16.msra.mxu0 0
      %3335 = vmatprep.subr.bf16.mxu0 0
      %3336 = vmatpush1.bf16.msra.mxu0 0
      %3337 = vmatprep.subr.bf16.mxu0 0
      %3338 = vmatpush1.bf16.msra.mxu0 0
      %3339 = vmatprep.subr.bf16.mxu0 0
      %3340 = vmatpush1.bf16.msra.mxu0 0
      %3341 = vmatprep.subr.bf16.mxu0 0
      %3342 = vmatpush1.bf16.msra.mxu0 0
      %3343 = vmatprep.subr.bf16.mxu0 0
      %3344 = vmatpush1.bf16.msra.mxu0 0
      %3345 = vmatprep.subr.bf16.mxu0 0
      %3346 = vmatpush1.bf16.msra.mxu0 0
      %3347 = vmatprep.subr.bf16.mxu0 0
      %3348 = vmatpush1.bf16.msra.mxu0 0
      %3349 = vmatprep.mubr.bf16.mxu0 0
      %3350 = vmatmul.mubr.bf16.gmra.mrb[0].mxu0 %v3315
      %v3351 = vpop.f32.mrb[0].mxu0
      %v3352 = vadd.f32 %v3300, %v3351
      %v3353 = vpop.f32.mrb[0].mxu0
      %v3354 = vpop.f32.mrb[0].mxu0
      %v3355 = vpop.f32.mrb[0].mxu0
      %3356 = vdwg.mxu0
      %v3357 = vmul.f32 %v3352, 1.702
      %v3358 = vxor.u32 %v3357, 2147483648
      %v3359 = vmul.f32 %v3358, 1.442695
      %v3360 = vpow.pop %v3359
      %v3361 = vadd.f32 %v3360, 1.0
      %v3362 = vrcp.pop %v3361
      %v3363 = vmul.f32 1.0, %v3362
      %v3364 = vmul.f32 %v3352, %v3363
      %v3365 = vpack.c.bf16 %v3364, %v3364
      %v3366 = vld [vmem:[%s16] sm:$0xf]
      %v3367 = vld [vmem:[%s16 + $0x4] sm:$0xf]
      %v3368 = vld [vmem:[%s16 + $0x8] sm:$0xf]
      %v3369 = vld [vmem:[%s16 + $0xc] sm:$0xf]
      %v3370 = vld [vmem:[%s16 + $0x10] sm:$0xf]
      %v3371 = vld [vmem:[%s16 + $0x14] sm:$0xf]
      %v3372 = vld [vmem:[%s16 + $0x18] sm:$0xf]
      %v3373 = vld [vmem:[%s16 + $0x1c] sm:$0xf]
      %v3374 = vld [vmem:[%s16 + $0x20] sm:$0xf]
      %v3375 = vld [vmem:[%s16 + $0x24] sm:$0xf]
      %v3376 = vld [vmem:[%s16 + $0x28] sm:$0xf]
      %v3377 = vld [vmem:[%s16 + $0x2c] sm:$0xf]
      %v3378 = vld [vmem:[%s16 + $0x30] sm:$0xf]
      %v3379 = vld [vmem:[%s16 + $0x34] sm:$0xf]
      %v3380 = vld [vmem:[%s16 + $0x38] sm:$0xf]
      %v3381 = vld [vmem:[%s16 + $0x3c] sm:$0xf]
      %v3398 = vunpack.c.l.b16 %v3366
      %v3399 = vunpack.c.l.b16 %v3367
      %v3400 = vunpack.c.l.b16 %v3368
      %v3401 = vunpack.c.l.b16 %v3369
      %v3402 = vunpack.c.l.b16 %v3370
      %v3403 = vunpack.c.l.b16 %v3371
      %v3404 = vunpack.c.l.b16 %v3372
      %v3405 = vunpack.c.l.b16 %v3373
      %v3406 = vunpack.c.l.b16 %v3374
      %v3407 = vunpack.c.l.b16 %v3375
      %v3408 = vunpack.c.l.b16 %v3376
      %v3409 = vunpack.c.l.b16 %v3377
      %v3410 = vunpack.c.l.b16 %v3378
      %v3411 = vunpack.c.l.b16 %v3379
      %v3412 = vunpack.c.l.b16 %v3380
      %v3413 = vunpack.c.l.b16 %v3381
      %v3414 = vpack.c.b16 %v3399, %v3398
      %v3415 = vpack.c.b16 %v3401, %v3400
      %v3416 = vpack.c.b16 %v3403, %v3402
      %v3417 = vpack.c.b16 %v3405, %v3404
      %v3418 = vpack.c.b16 %v3407, %v3406
      %v3419 = vpack.c.b16 %v3409, %v3408
      %v3420 = vpack.c.b16 %v3411, %v3410
      %v3421 = vpack.c.b16 %v3413, %v3412
      %3430 = vmatprep.subr.bf16.mxu0 0
      %3431 = vmatpush1.bf16.msra.mxu0 %v3414
      %3432 = vmatprep.subr.bf16.mxu0 0
      %3433 = vmatpush1.bf16.msra.mxu0 %v3415
      %3434 = vmatprep.subr.bf16.mxu0 0
      %3435 = vmatpush1.bf16.msra.mxu0 %v3416
      %3436 = vmatprep.subr.bf16.mxu0 0
      %3437 = vmatpush1.bf16.msra.mxu0 %v3417
      %3438 = vmatprep.subr.bf16.mxu0 0
      %3439 = vmatpush1.bf16.msra.mxu0 %v3418
      %3440 = vmatprep.subr.bf16.mxu0 0
      %3441 = vmatpush1.bf16.msra.mxu0 %v3419
      %3442 = vmatprep.subr.bf16.mxu0 0
      %3443 = vmatpush1.bf16.msra.mxu0 %v3420
      %3444 = vmatprep.subr.bf16.mxu0 0
      %3445 = vmatpush1.bf16.msra.mxu0 %v3421
      %3446 = vmatprep.subr.bf16.mxu0 0
      %3447 = vmatpush1.bf16.msra.mxu0 0
      %3448 = vmatprep.subr.bf16.mxu0 0
      %3449 = vmatpush1.bf16.msra.mxu0 0
      %3450 = vmatprep.subr.bf16.mxu0 0
      %3451 = vmatpush1.bf16.msra.mxu0 0
      %3452 = vmatprep.subr.bf16.mxu0 0
      %3453 = vmatpush1.bf16.msra.mxu0 0
      %3454 = vmatprep.subr.bf16.mxu0 0
      %3455 = vmatpush1.bf16.msra.mxu0 0
      %3456 = vmatprep.subr.bf16.mxu0 0
      %3457 = vmatpush1.bf16.msra.mxu0 0
      %3458 = vmatprep.subr.bf16.mxu0 0
      %3459 = vmatpush1.bf16.msra.mxu0 0
      %3460 = vmatprep.subr.bf16.mxu0 0
      %3461 = vmatpush1.bf16.msra.mxu0 0
      %3462 = vmatprep.mubr.bf16.mxu0 0
      %3463 = vmatmul.mubr.bf16.gmra.mrb[0].mxu0 %v3365
      %v3464 = vpop.f32.mrb[0].mxu0
      %v3465 = vadd.f32 0.0, %v3464
      %v3466 = vpop.f32.mrb[0].mxu0
      %v3467 = vpop.f32.mrb[0].mxu0
      %v3468 = vpop.f32.mrb[0].mxu0
      %3469 = vdwg.mxu0
      %v3470 = vadd.f32 %v3260, %v3465
      %v3471 = vld [vmem:[%s17] sm:$0x1]
      %v3473 = vlaneseq
      %v3474 = vshrl.u32 %v3473, 7
      %v3475 = vsub.s32 0, %v3474
      %v3476 = vrot.slane %v3471, %v3475
      %v3478 = vadd.f32 %v3470, %v3476
      %s3479 = scalar_lea.vmem %s6, 1
      %v3480 = vld [vmem:[%s3479] sm:$0x1]
      %s3481 = scalar_lea.vmem %s7, 1
      %v3482 = vld [vmem:[%s3481] sm:$0x1]
      %v3483 = vsel %vm1196, %v3478, 0.0
      %3484 = vadd.xlane.f32.xlu0 %v3483
      %v3485 = vpop.xlane.xlu0 %3484
      %v3486 = vmul.f32 %v3485, %v1200
      %v3487 = vsub.f32 %v3478, %v3486
      %v3488 = vmul.f32 %v3487, %v3487
      %v3489 = vsel %vm1196, %v3488, 0.0
      %3490 = vadd.xlane.f32.xlu0 %v3489
      %v3491 = vpop.xlane.xlu0 %3490
      %v3492 = vmul.f32 %v3491, %v1200
      %v3493 = vadd.f32 %v3492, 1e-05
      %v3494 = vrsqrt.pop %v3493
      %v3495 = vmul.f32 %v3487, %v3494
      %v3497 = vlaneseq
      %v3498 = vshrl.u32 %v3497, 7
      %v3499 = vsub.s32 0, %v3498
      %v3500 = vrot.slane %v3480, %v3499
      %v3502 = vmul.f32 %v3495, %v3500
      %v3504 = vlaneseq
      %v3505 = vshrl.u32 %v3504, 7
      %v3506 = vsub.s32 0, %v3505
      %v3507 = vrot.slane %v3482, %v3506
      %v3509 = vadd.f32 %v3502, %v3507
      %v3510 = vpack.c.bf16 %v3509, %v3509
      %s3511 = scalar_lea.vmem %s8, 16
      %v3512 = vld [vmem:[%s3511] sm:$0xf]
      %v3513 = vld [vmem:[%s3511 + $0x4] sm:$0xf]
      %v3514 = vld [vmem:[%s3511 + $0x8] sm:$0xf]
      %v3515 = vld [vmem:[%s3511 + $0xc] sm:$0xf]
      %s3516 = scalar_lea.vmem %s9, 1
      %v3517 = vld [vmem:[%s3516] sm:$0x1]
      %v3519 = vlaneseq
      %v3520 = vshrl.u32 %v3519, 7
      %v3521 = vsub.s32 0, %v3520
      %v3522 = vrot.slane %v3517, %v3521
      %v3528 = vunpack.c.l.b16 %v3512
      %v3529 = vunpack.c.l.b16 %v3513
      %v3530 = vunpack.c.l.b16 %v3514
      %v3531 = vunpack.c.l.b16 %v3515
      %v3532 = vpack.c.b16 %v3529, %v3528
      %v3533 = vpack.c.b16 %v3531, %v3530
      %v3537 = vsel %vm1196, %v3510, 0
      %3539 = vmatprep.subr.bf16.mxu0 0
      %3540 = vmatpush1.bf16.msra.mxu0 %v3532
      %3541 = vmatprep.subr.bf16.mxu0 0
      %3542 = vmatpush1.bf16.msra.mxu0 %v3533
      %3543 = vmatprep.subr.bf16.mxu0 0
      %3544 = vmatpush1.bf16.msra.mxu0 0
      %3545 = vmatprep.subr.bf16.mxu0 0
      %3546 = vmatpush1.bf16.msra.mxu0 0
      %3547 = vmatprep.subr.bf16.mxu0 0
      %3548 = vmatpush1.bf16.msra.mxu0 0
      %3549 = vmatprep.subr.bf16.mxu0 0
      %3550 = vmatpush1.bf16.msra.mxu0 0
      %3551 = vmatprep.subr.bf16.mxu0 0
      %3552 = vmatpush1.bf16.msra.mxu0 0
      %3553 = vmatprep.subr.bf16.mxu0 0
      %3554 = vmatpush1.bf16.msra.mxu0 0
      %3555 = vmatprep.subr.bf16.mxu0 0
      %3556 = vmatpush1.bf16.msra.mxu0 0
      %3557 = vmatprep.subr.bf16.mxu0 0
      %3558 = vmatpush1.bf16.msra.mxu0 0
      %3559 = vmatprep.subr.bf16.mxu0 0
      %3560 = vmatpush1.bf16.msra.mxu0 0
      %3561 = vmatprep.subr.bf16.mxu0 0
      %3562 = vmatpush1.bf16.msra.mxu0 0
      %3563 = vmatprep.subr.bf16.mxu0 0
      %3564 = vmatpush1.bf16.msra.mxu0 0
      %3565 = vmatprep.subr.bf16.mxu0 0
      %3566 = vmatpush1.bf16.msra.mxu0 0
      %3567 = vmatprep.subr.bf16.mxu0 0
      %3568 = vmatpush1.bf16.msra.mxu0 0
      %3569 = vmatprep.subr.bf16.mxu0 0
      %3570 = vmatpush1.bf16.msra.mxu0 0
      %3571 = vmatprep.mubr.bf16.mxu0 0
      %3572 = vmatmul.mubr.bf16.gmra.mrb[0].mxu0 %v3537
      %v3573 = vpop.f32.mrb[0].mxu0
      %v3574 = vadd.f32 %v3522, %v3573
      %v3575 = vpop.f32.mrb[0].mxu0
      %v3576 = vpop.f32.mrb[0].mxu0
      %v3577 = vpop.f32.mrb[0].mxu0
      %3578 = vdwg.mxu0
      %v3579 = vpack.c.bf16 %v3574, %v3574
      %s3580 = scalar_lea.vmem %s10, 16
      %v3581 = vld [vmem:[%s3580] sm:$0xf]
      %v3582 = vld [vmem:[%s3580 + $0x4] sm:$0xf]
      %v3583 = vld [vmem:[%s3580 + $0x8] sm:$0xf]
      %v3584 = vld [vmem:[%s3580 + $0xc] sm:$0xf]
      %3586 = vrot.lane.b32.xlu0 %v3579, 64
      %v3587 = vpop.permute.xlu0 %3586
      %v3592 = vunpack.c.l.b16 %v3581
      %v3593 = vunpack.c.l.b16 %v3582
      %v3594 = vunpack.c.l.b16 %v3583
      %v3595 = vunpack.c.l.b16 %v3584
      %v3596 = vpack.c.b16 %v3593, %v3592
      %v3597 = vpack.c.b16 %v3595, %v3594
      %v3601 = vsel %vm1196, %v3587, 0
      %3603 = vmatprep.subr.bf16.mxu0 0
      %3604 = vmatpush1.bf16.msra.mxu0 %v3596
      %3605 = vmatprep.subr.bf16.mxu0 0
      %3606 = vmatpush1.bf16.msra.mxu0 %v3597
      %3607 = vmatprep.subr.bf16.mxu0 0
      %3608 = vmatpush1.bf16.msra.mxu0 0
      %3609 = vmatprep.subr.bf16.mxu0 0
      %3610 = vmatpush1.bf16.msra.mxu0 0
      %3611 = vmatprep.subr.bf16.mxu0 0
      %3612 = vmatpush1.bf16.msra.mxu0 0
      %3613 = vmatprep.subr.bf16.mxu0 0
      %3614 = vmatpush1.bf16.msra.mxu0 0
      %3615 = vmatprep.subr.bf16.mxu0 0
      %3616 = vmatpush1.bf16.msra.mxu0 0
      %3617 = vmatprep.subr.bf16.mxu0 0
      %3618 = vmatpush1.bf16.msra.mxu0 0
      %3619 = vmatprep.subr.bf16.mxu0 0
      %3620 = vmatpush1.bf16.msra.mxu0 0
      %3621 = vmatprep.subr.bf16.mxu0 0
      %3622 = vmatpush1.bf16.msra.mxu0 0
      %3623 = vmatprep.subr.bf16.mxu0 0
      %3624 = vmatpush1.bf16.msra.mxu0 0
      %3625 = vmatprep.subr.bf16.mxu0 0
      %3626 = vmatpush1.bf16.msra.mxu0 0
      %3627 = vmatprep.subr.bf16.mxu0 0
      %3628 = vmatpush1.bf16.msra.mxu0 0
      %3629 = vmatprep.subr.bf16.mxu0 0
      %3630 = vmatpush1.bf16.msra.mxu0 0
      %3631 = vmatprep.subr.bf16.mxu0 0
      %3632 = vmatpush1.bf16.msra.mxu0 0
      %3633 = vmatprep.subr.bf16.mxu0 0
      %3634 = vmatpush1.bf16.msra.mxu0 0
      %3635 = vmatprep.mubr.bf16.mxu0 0
      %3636 = vmatmul.mubr.bf16.gmra.mrb[0].mxu0 %v3601
      %v3637 = vpop.f32.mrb[0].mxu0
      %v3638 = vadd.f32 0.0, %v3637
      %v3639 = vpop.f32.mrb[0].mxu0
      %v3640 = vpop.f32.mrb[0].mxu0
      %v3641 = vpop.f32.mrb[0].mxu0
      %3642 = vdwg.mxu0
      %v3643 = vadd.f32 %v3478, %v3638
      %s3644 = scalar_lea.vmem %s11, 1
      %v3645 = vld [vmem:[%s3644] sm:$0x1]
      %v3647 = vlaneseq
      %v3648 = vshrl.u32 %v3647, 7
      %v3649 = vsub.s32 0, %v3648
      %v3650 = vrot.slane %v3645, %v3649
      %v3652 = vadd.f32 %v3643, %v3650
      %s3653 = scalar_lea.vmem %s12, 1
      %v3654 = vld [vmem:[%s3653] sm:$0x1]
      %s3655 = scalar_lea.vmem %s13, 1
      %v3656 = vld [vmem:[%s3655] sm:$0x1]
      %v3657 = vsel %vm1196, %v3652, 0.0
      %3658 = vadd.xlane.f32.xlu0 %v3657
      %v3659 = vpop.xlane.xlu0 %3658
      %v3660 = vmul.f32 %v3659, %v1200
      %v3661 = vsub.f32 %v3652, %v3660
      %v3662 = vmul.f32 %v3661, %v3661
      %v3663 = vsel %vm1196, %v3662, 0.0
      %3664 = vadd.xlane.f32.xlu0 %v3663
      %v3665 = vpop.xlane.xlu0 %3664
      %v3666 = vmul.f32 %v3665, %v1200
      %v3667 = vadd.f32 %v3666, 1e-05
      %v3668 = vrsqrt.pop %v3667
      %v3669 = vmul.f32 %v3661, %v3668
      %v3671 = vlaneseq
      %v3672 = vshrl.u32 %v3671, 7
      %v3673 = vsub.s32 0, %v3672
      %v3674 = vrot.slane %v3654, %v3673
      %v3676 = vmul.f32 %v3669, %v3674
      %v3678 = vlaneseq
      %v3679 = vshrl.u32 %v3678, 7
      %v3680 = vsub.s32 0, %v3679
      %v3681 = vrot.slane %v3656, %v3680
      %v3683 = vadd.f32 %v3676, %v3681
      %v3684 = vpack.c.bf16 %v3683, %v3683
      %s3685 = scalar_lea.vmem %s14, 16
      %v3686 = vld [vmem:[%s3685] sm:$0xf]
      %v3687 = vld [vmem:[%s3685 + $0x4] sm:$0xf]
      %v3688 = vld [vmem:[%s3685 + $0x8] sm:$0xf]
      %v3689 = vld [vmem:[%s3685 + $0xc] sm:$0xf]
      %s3690 = scalar_lea.vmem %s15, 1
      %v3691 = vld [vmem:[%s3690] sm:$0x1]
      %v3693 = vlaneseq
      %v3694 = vshrl.u32 %v3693, 7
      %v3695 = vsub.s32 0, %v3694
      %v3696 = vrot.slane %v3691, %v3695
      %v3702 = vunpack.c.l.b16 %v3686
      %v3703 = vunpack.c.l.b16 %v3687
      %v3704 = vunpack.c.l.b16 %v3688
      %v3705 = vunpack.c.l.b16 %v3689
      %v3706 = vpack.c.b16 %v3703, %v3702
      %v3707 = vpack.c.b16 %v3705, %v3704
      %v3711 = vsel %vm1196, %v3684, 0
      %3713 = vmatprep.subr.bf16.mxu0 0
      %3714 = vmatpush1.bf16.msra.mxu0 %v3706
      %3715 = vmatprep.subr.bf16.mxu0 0
      %3716 = vmatpush1.bf16.msra.mxu0 %v3707
      %3717 = vmatprep.subr.bf16.mxu0 0
      %3718 = vmatpush1.bf16.msra.mxu0 0
      %3719 = vmatprep.subr.bf16.mxu0 0
      %3720 = vmatpush1.bf16.msra.mxu0 0
      %3721 = vmatprep.subr.bf16.mxu0 0
      %3722 = vmatpush1.bf16.msra.mxu0 0
      %3723 = vmatprep.subr.bf16.mxu0 0
      %3724 = vmatpush1.bf16.msra.mxu0 0
      %3725 = vmatprep.subr.bf16.mxu0 0
      %3726 = vmatpush1.bf16.msra.mxu0 0
      %3727 = vmatprep.subr.bf16.mxu0 0
      %3728 = vmatpush1.bf16.msra.mxu0 0
      %3729 = vmatprep.subr.bf16.mxu0 0
      %3730 = vmatpush1.bf16.msra.mxu0 0
      %3731 = vmatprep.subr.bf16.mxu0 0
      %3732 = vmatpush1.bf16.msra.mxu0 0
      %3733 = vmatprep.subr.bf16.mxu0 0
      %3734 = vmatpush1.bf16.msra.mxu0 0
      %3735 = vmatprep.subr.bf16.mxu0 0
      %3736 = vmatpush1.bf16.msra.mxu0 0
      %3737 = vmatprep.subr.bf16.mxu0 0
      %3738 = vmatpush1.bf16.msra.mxu0 0
      %3739 = vmatprep.subr.bf16.mxu0 0
      %3740 = vmatpush1.bf16.msra.mxu0 0
      %3741 = vmatprep.subr.bf16.mxu0 0
      %3742 = vmatpush1.bf16.msra.mxu0 0
      %3743 = vmatprep.subr.bf16.mxu0 0
      %3744 = vmatpush1.bf16.msra.mxu0 0
      %3745 = vmatprep.mubr.bf16.mxu0 0
      %3746 = vmatmul.mubr.bf16.gmra.mrb[0].mxu0 %v3711
      %v3747 = vpop.f32.mrb[0].mxu0
      %v3748 = vadd.f32 %v3696, %v3747
      %v3749 = vpop.f32.mrb[0].mxu0
      %v3750 = vpop.f32.mrb[0].mxu0
      %v3751 = vpop.f32.mrb[0].mxu0
      %3752 = vdwg.mxu0
      %v3753 = vmul.f32 %v3748, 1.702
      %v3754 = vxor.u32 %v3753, 2147483648
      %v3755 = vmul.f32 %v3754, 1.442695
      %v3756 = vpow.pop %v3755
      %v3757 = vadd.f32 %v3756, 1.0
      %v3758 = vrcp.pop %v3757
      %v3759 = vmul.f32 1.0, %v3758
      %v3760 = vmul.f32 %v3748, %v3759
      %v3761 = vpack.c.bf16 %v3760, %v3760
      %s3762 = scalar_lea.vmem %s16, 64
      %v3763 = vld [vmem:[%s3762] sm:$0xf]
      %v3764 = vld [vmem:[%s3762 + $0x4] sm:$0xf]
      %v3765 = vld [vmem:[%s3762 + $0x8] sm:$0xf]
      %v3766 = vld [vmem:[%s3762 + $0xc] sm:$0xf]
      %v3767 = vld [vmem:[%s3762 + $0x10] sm:$0xf]
      %v3768 = vld [vmem:[%s3762 + $0x14] sm:$0xf]
      %v3769 = vld [vmem:[%s3762 + $0x18] sm:$0xf]
      %v3770 = vld [vmem:[%s3762 + $0x1c] sm:$0xf]
      %v3771 = vld [vmem:[%s3762 + $0x20] sm:$0xf]
      %v3772 = vld [vmem:[%s3762 + $0x24] sm:$0xf]
      %v3773 = vld [vmem:[%s3762 + $0x28] sm:$0xf]
      %v3774 = vld [vmem:[%s3762 + $0x2c] sm:$0xf]
      %v3775 = vld [vmem:[%s3762 + $0x30] sm:$0xf]
      %v3776 = vld [vmem:[%s3762 + $0x34] sm:$0xf]
      %v3777 = vld [vmem:[%s3762 + $0x38] sm:$0xf]
      %v3778 = vld [vmem:[%s3762 + $0x3c] sm:$0xf]
      %v3795 = vunpack.c.l.b16 %v3763
      %v3796 = vunpack.c.l.b16 %v3764
      %v3797 = vunpack.c.l.b16 %v3765
      %v3798 = vunpack.c.l.b16 %v3766
      %v3799 = vunpack.c.l.b16 %v3767
      %v3800 = vunpack.c.l.b16 %v3768
      %v3801 = vunpack.c.l.b16 %v3769
      %v3802 = vunpack.c.l.b16 %v3770
      %v3803 = vunpack.c.l.b16 %v3771
      %v3804 = vunpack.c.l.b16 %v3772
      %v3805 = vunpack.c.l.b16 %v3773
      %v3806 = vunpack.c.l.b16 %v3774
      %v3807 = vunpack.c.l.b16 %v3775
      %v3808 = vunpack.c.l.b16 %v3776
      %v3809 = vunpack.c.l.b16 %v3777
      %v3810 = vunpack.c.l.b16 %v3778
      %v3811 = vpack.c.b16 %v3796, %v3795
      %v3812 = vpack.c.b16 %v3798, %v3797
      %v3813 = vpack.c.b16 %v3800, %v3799
      %v3814 = vpack.c.b16 %v3802, %v3801
      %v3815 = vpack.c.b16 %v3804, %v3803
      %v3816 = vpack.c.b16 %v3806, %v3805
      %v3817 = vpack.c.b16 %v3808, %v3807
      %v3818 = vpack.c.b16 %v3810, %v3809
      %3827 = vmatprep.subr.bf16.mxu0 0
      %3828 = vmatpush1.bf16.msra.mxu0 %v3811
      %3829 = vmatprep.subr.bf16.mxu0 0
      %3830 = vmatpush1.bf16.msra.mxu0 %v3812
      %3831 = vmatprep.subr.bf16.mxu0 0
      %3832 = vmatpush1.bf16.msra.mxu0 %v3813
      %3833 = vmatprep.subr.bf16.mxu0 0
      %3834 = vmatpush1.bf16.msra.mxu0 %v3814
      %3835 = vmatprep.subr.bf16.mxu0 0
      %3836 = vmatpush1.bf16.msra.mxu0 %v3815
      %3837 = vmatprep.subr.bf16.mxu0 0
      %3838 = vmatpush1.bf16.msra.mxu0 %v3816
      %3839 = vmatprep.subr.bf16.mxu0 0
      %3840 = vmatpush1.bf16.msra.mxu0 %v3817
      %3841 = vmatprep.subr.bf16.mxu0 0
      %3842 = vmatpush1.bf16.msra.mxu0 %v3818
      %3843 = vmatprep.subr.bf16.mxu0 0
      %3844 = vmatpush1.bf16.msra.mxu0 0
      %3845 = vmatprep.subr.bf16.mxu0 0
      %3846 = vmatpush1.bf16.msra.mxu0 0
      %3847 = vmatprep.subr.bf16.mxu0 0
      %3848 = vmatpush1.bf16.msra.mxu0 0
      %3849 = vmatprep.subr.bf16.mxu0 0
      %3850 = vmatpush1.bf16.msra.mxu0 0
      %3851 = vmatprep.subr.bf16.mxu0 0
      %3852 = vmatpush1.bf16.msra.mxu0 0
      %3853 = vmatprep.subr.bf16.mxu0 0
      %3854 = vmatpush1.bf16.msra.mxu0 0
      %3855 = vmatprep.subr.bf16.mxu0 0
      %3856 = vmatpush1.bf16.msra.mxu0 0
      %3857 = vmatprep.subr.bf16.mxu0 0
      %3858 = vmatpush1.bf16.msra.mxu0 0
      %3859 = vmatprep.mubr.bf16.mxu0 0
      %3860 = vmatmul.mubr.bf16.gmra.mrb[0].mxu0 %v3761
      %v3861 = vpop.f32.mrb[0].mxu0
      %v3862 = vadd.f32 0.0, %v3861
      %v3863 = vpop.f32.mrb[0].mxu0
      %v3864 = vpop.f32.mrb[0].mxu0
      %v3865 = vpop.f32.mrb[0].mxu0
      %3866 = vdwg.mxu0
      %v3867 = vadd.f32 %v3652, %v3862
      %s3868 = scalar_lea.vmem %s17, 1
      %v3869 = vld [vmem:[%s3868] sm:$0x1]
      %v3871 = vlaneseq
      %v3872 = vshrl.u32 %v3871, 7
      %v3873 = vsub.s32 0, %v3872
      %v3874 = vrot.slane %v3869, %v3873
      %v3876 = vadd.f32 %v3867, %v3874
      %v3877 = vld [vmem:[%s18] sm:$0x1]
      %v3878 = vld [vmem:[%s19] sm:$0x1]
      %vm3879 = vcmask 258049
      %v3880 = vsel %vm3879, %v3876, 0.0
      %3881 = vadd.xlane.f32.xlu0 %v3880
      %v3882 = vpop.xlane.xlu0 %3881
      %v3883 = vmul.f32 %v3882, %v1200
      %v3884 = vsub.f32 %v3876, %v3883
      %v3885 = vmul.f32 %v3884, %v3884
      %v3886 = vsel %vm3879, %v3885, 0.0
      %3887 = vadd.xlane.f32.xlu0 %v3886
      %v3888 = vpop.xlane.xlu0 %3887
      %v3889 = vmul.f32 %v3888, %v1200
      %v3890 = vadd.f32 %v3889, 1e-05
      %v3891 = vrsqrt.pop %v3890
      %v3892 = vmul.f32 %v3884, %v3891
      %v3894 = vlaneseq
      %v3895 = vshrl.u32 %v3894, 7
      %v3896 = vsub.s32 0, %v3895
      %v3897 = vrot.slane %v3877, %v3896
      %v3899 = vmul.f32 %v3892, %v3897
      %v3901 = vlaneseq
      %v3902 = vshrl.u32 %v3901, 7
      %v3903 = vsub.s32 0, %v3902
      %v3904 = vrot.slane %v3878, %v3903
      %v3906 = vadd.f32 %v3899, %v3904
      %v3907 = vld [vmem:[%s20] sm:$0xf]
      %v3908 = vld [vmem:[%s20 + $0x4] sm:$0xf]
      %v3909 = vld [vmem:[%s20 + $0x8] sm:$0xf]
      %v3910 = vld [vmem:[%s20 + $0xc] sm:$0xf]
      %v3911 = vpack.c.bf16 %v3906, %v3906
      %v3916 = vunpack.c.l.b16 %v3907
      %v3917 = vunpack.c.l.b16 %v3908
      %v3918 = vunpack.c.l.b16 %v3909
      %v3919 = vunpack.c.l.b16 %v3910
      %v3920 = vpack.c.b16 %v3917, %v3916
      %v3921 = vpack.c.b16 %v3919, %v3918
      %3924 = vxpose.xlu0.c.b16.start [1/8] %v3920, 128
      %3925 = vxpose.xlu0.c.b16.cont [2/8] %v3921, 128
      %3926 = vxpose.xlu0.c.b16.cont [3/8] 0, 128
      %3927 = vxpose.xlu0.c.b16.cont [4/8] 0, 128
      %3928 = vxpose.xlu0.c.b16.cont [5/8] 0, 128
      %3929 = vxpose.xlu0.c.b16.cont [6/8] 0, 128
      %3930 = vxpose.xlu0.c.b16.cont [7/8] 0, 128
      %3931 = vxpose.xlu0.c.b16.end [8/8] 0, 128
      %v3932 = vpop.trf.xlu0
      %v3933 = vpop.trf.xlu0
      %v3934 = vpop.trf.xlu0
      %v3935 = vpop.trf.xlu0
      %v3936 = vpop.trf.xlu0
      %v3937 = vpop.trf.xlu0
      %v3938 = vpop.trf.xlu0
      %v3939 = vpop.trf.xlu0
      %v3941 = vshrl.u32 %v3911, 16
      %v3943 = vshll.u32 %v3911, 16
      %v3945 = vrot.slane %v3943, 1
      %v3946 = vor.u32 %v3941, %v3945
      %v3948 = vsel %vm1196, %v3932, 0
      %v3951 = vsel %vm1196, %v3946, 0
      %3953 = vmatprep.subr.bf16.mxu0 0
      %3954 = vmatpush1.bf16.xpose.msra.mxu0 %v3951
      %3955 = vmatprep.subr.bf16.mxu0 0
      %3956 = vmatpush1.bf16.xpose.msra.mxu0 0
      %3957 = vmatprep.subr.bf16.mxu0 0
      %3958 = vmatpush1.bf16.xpose.msra.mxu0 0
      %3959 = vmatprep.subr.bf16.mxu0 0
      %3960 = vmatpush1.bf16.xpose.msra.mxu0 0
      %3961 = vmatprep.subr.bf16.mxu0 0
      %3962 = vmatpush1.bf16.xpose.msra.mxu0 0
      %3963 = vmatprep.subr.bf16.mxu0 0
      %3964 = vmatpush1.bf16.xpose.msra.mxu0 0
      %3965 = vmatprep.subr.bf16.mxu0 0
      %3966 = vmatpush1.bf16.xpose.msra.mxu0 0
      %3967 = vmatprep.subr.bf16.mxu0 0
      %3968 = vmatpush1.bf16.xpose.msra.mxu0 0
      %3969 = vmatprep.subr.bf16.mxu0 0
      %3970 = vmatpush1.bf16.xpose.msra.mxu0 0
      %3971 = vmatprep.subr.bf16.mxu0 0
      %3972 = vmatpush1.bf16.xpose.msra.mxu0 0
      %3973 = vmatprep.subr.bf16.mxu0 0
      %3974 = vmatpush1.bf16.xpose.msra.mxu0 0
      %3975 = vmatprep.subr.bf16.mxu0 0
      %3976 = vmatpush1.bf16.xpose.msra.mxu0 0
      %3977 = vmatprep.subr.bf16.mxu0 0
      %3978 = vmatpush1.bf16.xpose.msra.mxu0 0
      %3979 = vmatprep.subr.bf16.mxu0 0
      %3980 = vmatpush1.bf16.xpose.msra.mxu0 0
      %3981 = vmatprep.subr.bf16.mxu0 0
      %3982 = vmatpush1.bf16.xpose.msra.mxu0 0
      %3983 = vmatprep.subr.bf16.mxu0 0
      %3984 = vmatpush1.bf16.xpose.msra.mxu0 0
      %3985 = vmatprep.mubr.bf16.mxu0 0
      %3986 = vmatmul.mubr.bf16.gmra.mrb[0].mxu0 %v3948
      %v3987 = vpop.f32.mrb[0].mxu0
      %v3988 = vadd.f32 0.0, %v3987
      %v3989 = vpop.f32.mrb[0].mxu0
      %v3990 = vpop.f32.mrb[0].mxu0
      %v3991 = vadd.f32 0.0, %v3990
      %v3992 = vpop.f32.mrb[0].mxu0
      %3993 = vdwg.mxu0
      %vm3994 = vcmask 31744
      %3995 = vst.msk [vmem:[%s656] sm:$0xff] %vm3994, %v3988
      %3996 = vst.msk [vmem:[%s656 + $0x8] sm:$0xff] %vm3994, %v3991
      %p3997 = scmp.lt.s32.totalorder %s32, 1
      %s3998 = scalar_select %p3997, %s32, 1
      %s3999 = smul.addr %s3998, 2
      %s4000 = smul.addr %s3999, 8
      %s4001 = scalar_lea.vmem %s21, %s4000
      // Predicated region
      $region105: #{tpu_custom_call.1} parent=103 // pred_check
        %p4002 = pneg %p496
      $region106: #{tpu_custom_call.1} parent=103 // pred_check_branch
        %4004 = sbr.rel (%p4002) target = $region108
      $region107: #{tpu_custom_call.1} parent=103 // pred_region
        _
      $region108: #{tpu_custom_call.1} parent=103 // pred_fallthru
        _
    $region104: #{tpu_custom_call.1} parent=5 // pred_fallthru
      _
    %p4005 = scmp.le.s32.totalorder 2, %s27
    // Predicated region
    $region109: #{tpu_custom_call.1} parent=5 // pred_check
      %p4006 = pneg %p4005
    $region110: #{tpu_custom_call.1} parent=5 // pred_check_branch
      %4008 = sbr.rel (%p4006) target = $region112
    $region111: #{tpu_custom_call.1} parent=5 // pred_region
      %s4009 = ssub.s32 %s27, 2
      // Predicated region
      $region113: #{tpu_custom_call.1} parent=111 // pred_check
        %p4010 = pneg %p502
      $region114: #{tpu_custom_call.1} parent=111 // pred_check_branch
        %4012 = sbr.rel (%p4010) target = $region116
      $region115: #{tpu_custom_call.1} parent=111 // pred_region
        %p4013 = scmp.lt.s32.totalorder %s33, 1
        %s4014 = scalar_select %p4013, %s33, 1
        %s4015 = smul.addr %s4014, 2
        %s4016 = smul.addr %s4015, 8
        %s4017 = scalar_lea.vmem %s21, %s4016
      $region116: #{tpu_custom_call.1} parent=111 // pred_fallthru
        _
    $region112: #{tpu_custom_call.1} parent=5 // pred_fallthru
      _
  $region6: #{tpu_custom_call.1} parent=0 // loop_footer
    %s31 = sadd.s32 1, %s27
  $region7: #{tpu_custom_call.1} parent=0 // loop_footer_branch
    %26 = sbr.rel target = $region3
  $region8: #{tpu_custom_call.1} parent=0 // loop_exit
    _

</llo_original>
